<compile_context>
chip_gen: v5e
topology: v5e:2x2
jax: 0.10.0
libtpu: 0.0.40
codegen_flags: <defaults>
</compile_context>

<pallas_src>
import functools

import jax
import jax.numpy as jnp
import numpy as np
from jax.experimental import pallas as pl
from jax.experimental.pallas import tpu as pltpu


_COMPILER_PARAMS = pltpu.CompilerParams(
    dimension_semantics=("parallel",),           # batch axis -> both v7x cores
    vmem_limit_bytes=32 * 1024 * 1024)           # explicit, safe on v5e/v6e/v7x


# --------------------------- in-kernel building block ------------------------

def _im2col_conv3x3(xp_ref, w_ref, b_ref, mxu_dtype):
    """xp_ref: (H+2, W+2, Cin) zero-padded VMEM scratch (already filled).
    w_ref: (9*Cin, Cout) im2col weights.  b_ref: (1, Cout) bias.
    Returns f32 (H*W, Cout) = conv3x3(x) + b, pixel-major."""
    Hp, Wp, Cin = xp_ref.shape
    H, W = Hp - 2, Wp - 2
    pieces = []
    for dy in range(3):
        for dx in range(3):
            pieces.append(xp_ref[dy:dy + H, dx:dx + W, :].reshape(H * W, Cin))
    patches = jnp.concatenate(pieces, axis=1)                  # (H*W, 9*Cin)
    acc = jax.lax.dot_general(
        patches.astype(mxu_dtype), w_ref[...].astype(mxu_dtype),
        dimension_numbers=(((1,), (0,)), ((), ())),
        preferred_element_type=jnp.float32)                    # (H*W, Cout)
    return acc + b_ref[...]


# --------------------------------- kernels -----------------------------------

def _make_stage1_kernel(mxu_dtype):
    # upsample(x1) ++ x2 -> conv3x3 + bias, plus per-image BN partial sums.
    def kernel(x2_ref, x1_ref, u_ref, w_ref, b_ref,
               h_ref, sum_ref, sq_ref, xp_ref):
        _, H, W, C1 = x1_ref.shape
        _, Ho, Wo, C2 = x2_ref.shape
        # Zero the halo every step (megacore-safe: no cross-step carry).
        xp_ref[...] = jnp.zeros_like(xp_ref)
        # Bilinear x2 upsample (align_corners=True) as ONE matmul with the
        # static interpolation operator U = kron(Uy, Ux); upsample + concat +
        # 'same' padding are fused by writing both tensors straight into the
        # padded scratch.
        up = jax.lax.dot_general(
            u_ref[...], x1_ref[0].reshape(H * W, C1),
            dimension_numbers=(((1,), (0,)), ((), ())),
            preferred_element_type=jnp.float32)                # (Ho*Wo, C1)
        xp_ref[1:Ho + 1, 1:Wo + 1, :C2] = x2_ref[0]
        xp_ref[1:Ho + 1, 1:Wo + 1, C2:] = up.reshape(Ho, Wo, C1)
        acc = _im2col_conv3x3(xp_ref, w_ref, b_ref, mxu_dtype)  # (Ho*Wo, Cmid)
        h_ref[0] = acc
        # Per-image partial BN statistics (reduced across the batch in JAX).
        sum_ref[...] = jnp.sum(acc, axis=0)[None, None, :]
        sq_ref[...] = jnp.sum(acc * acc, axis=0)[None, None, :]
    return kernel


def _make_stage2_kernel(mxu_dtype):
    # BN1 affine + ReLU (fused on the input path) -> conv3x3 + bias + partials.
    def kernel(h1_ref, s_ref, t_ref, w_ref, b_ref,
               h2_ref, sum_ref, sq_ref, xp_ref):
        Hp, Wp, Cmid = xp_ref.shape
        Ho, Wo = Hp - 2, Wp - 2
        xp_ref[...] = jnp.zeros_like(xp_ref)
        # BN affine + ReLU in f32 (v5e VPU has no bf16; only MXU operands cast).
        a = jnp.maximum(h1_ref[0] * s_ref[0] + t_ref[0], 0.0)   # (Ho*Wo, Cmid)
        xp_ref[1:Ho + 1, 1:Wo + 1, :] = a.reshape(Ho, Wo, Cmid)
        acc = _im2col_conv3x3(xp_ref, w_ref, b_ref, mxu_dtype)  # (Ho*Wo, Cout)
        h2_ref[0] = acc
        sum_ref[...] = jnp.sum(acc, axis=0)[None, None, :]
        sq_ref[...] = jnp.sum(acc * acc, axis=0)[None, None, :]
    return kernel


def _bn_relu_kernel(h_ref, s_ref, t_ref, o_ref):
    # Final folded BatchNorm affine + ReLU.
    o_ref[...] = jnp.maximum(h_ref[...] * s_ref[0] + t_ref[0], 0.0)


# ----------------------------- pallas_call wrappers --------------------------

def fused_up_concat_conv_pallas(x2, x1, u, w, b, mxu_dtype=jnp.float32):
    """x2: (N, Ho, Wo, C2) skip, x1: (N, H, W, C1) coarse, u: (Ho*Wo, H*W),
    w: (3, 3, C2+C1, Cmid) HWIO, b: (Cmid,).
    Returns pre-BN conv output (N, Ho*Wo, Cmid) and per-image sum / sumsq."""
    N, Ho, Wo, C2 = x2.shape
    _, H, W, C1 = x1.shape
    Cin = C2 + C1
    Cmid = w.shape[-1]
    w_mat = w.reshape(9 * Cin, Cmid)
    return pl.pallas_call(
        _make_stage1_kernel(mxu_dtype),
        out_shape=(jax.ShapeDtypeStruct((N, Ho * Wo, Cmid), jnp.float32),
                   jax.ShapeDtypeStruct((N, 1, Cmid), jnp.float32),
                   jax.ShapeDtypeStruct((N, 1, Cmid), jnp.float32)),
        grid=(N,),
        in_specs=[
            pl.BlockSpec((1, Ho, Wo, C2), lambda n: (n, 0, 0, 0)),
            pl.BlockSpec((1, H, W, C1), lambda n: (n, 0, 0, 0)),
            pl.BlockSpec((Ho * Wo, H * W), lambda n: (0, 0)),
            pl.BlockSpec((9 * Cin, Cmid), lambda n: (0, 0)),
            pl.BlockSpec((1, Cmid), lambda n: (0, 0)),
        ],
        out_specs=(pl.BlockSpec((1, Ho * Wo, Cmid), lambda n: (n, 0, 0)),
                   pl.BlockSpec((1, 1, Cmid), lambda n: (n, 0, 0)),
                   pl.BlockSpec((1, 1, Cmid), lambda n: (n, 0, 0))),
        scratch_shapes=[pltpu.VMEM((Ho + 2, Wo + 2, Cin), jnp.float32)],
        compiler_params=_COMPILER_PARAMS,
    )(x2, x1, u, w_mat, b.reshape(1, Cmid))


def fused_bnrelu_conv_pallas(h1, scale, shift, w, b, Ho, Wo,
                             mxu_dtype=jnp.float32):
    """h1: (N, Ho*Wo, Cmid) pre-BN conv1 output, scale/shift: folded BN1."""
    N, P, Cmid = h1.shape
    Cout = w.shape[-1]
    w_mat = w.reshape(9 * Cmid, Cout)
    return pl.pallas_call(
        _make_stage2_kernel(mxu_dtype),
        out_shape=(jax.ShapeDtypeStruct((N, P, Cout), jnp.float32),
                   jax.ShapeDtypeStruct((N, 1, Cout), jnp.float32),
                   jax.ShapeDtypeStruct((N, 1, Cout), jnp.float32)),
        grid=(N,),
        in_specs=[
            pl.BlockSpec((1, P, Cmid), lambda n: (n, 0, 0)),
            pl.BlockSpec((1, Cmid), lambda n: (0, 0)),
            pl.BlockSpec((1, Cmid), lambda n: (0, 0)),
            pl.BlockSpec((9 * Cmid, Cout), lambda n: (0, 0)),
            pl.BlockSpec((1, Cout), lambda n: (0, 0)),
        ],
        out_specs=(pl.BlockSpec((1, P, Cout), lambda n: (n, 0, 0)),
                   pl.BlockSpec((1, 1, Cout), lambda n: (n, 0, 0)),
                   pl.BlockSpec((1, 1, Cout), lambda n: (n, 0, 0))),
        scratch_shapes=[pltpu.VMEM((Ho + 2, Wo + 2, Cmid), jnp.float32)],
        compiler_params=_COMPILER_PARAMS,
    )(h1, scale.reshape(1, Cmid), shift.reshape(1, Cmid), w_mat,
      b.reshape(1, Cout))


def bn_relu_pallas(h, scale, shift):
    """Final BN affine + ReLU.  h: (N, P, C)."""
    N, P, C = h.shape
    return pl.pallas_call(
        _bn_relu_kernel,
        out_shape=jax.ShapeDtypeStruct((N, P, C), jnp.float32),
        grid=(N,),
        in_specs=[
            pl.BlockSpec((1, P, C), lambda n: (n, 0, 0)),
            pl.BlockSpec((1, C), lambda n: (0, 0)),
            pl.BlockSpec((1, C), lambda n: (0, 0)),
        ],
        out_specs=pl.BlockSpec((1, P, C), lambda n: (n, 0, 0)),
        compiler_params=_COMPILER_PARAMS,
    )(h, scale.reshape(1, C), shift.reshape(1, C))


# ----------------------------- module forward --------------------------------

def _interp_matrix(n_in, n_out):
    """Dense (n_out, n_in) matrix: 1-D bilinear resize, align_corners=True."""
    m = np.zeros((n_out, n_in), np.float32)
    if n_in == 1:
        m[:, 0] = 1.0
        return m
    scale = (n_in - 1) / (n_out - 1)
    for o in range(n_out):
        s = o * scale
        i0 = min(int(np.floor(s)), n_in - 1)
        i1 = min(i0 + 1, n_in - 1)
        f = s - i0
        m[o, i0] += 1.0 - f
        m[o, i1] += f
    return m


def _fold_bn(psum, psumsq, count, gamma, beta, eps):
    # Training-mode BatchNorm: batch mean / biased variance of the conv output.
    # TODO(synk): E[x^2]-mean^2 can cancel for large-mean activations; switch to
    # a shifted/Welford accumulation at production channel counts.
    mean = jnp.sum(psum, axis=(0, 1)) / count
    var = jnp.sum(psumsq, axis=(0, 1)) / count - mean * mean
    scale = gamma * jax.lax.rsqrt(var + eps)
    shift = beta - mean * scale
    return scale, shift


def nested_up_forward(x1_nchw, x2_nchw, params, eps=1e-5,
                      mxu_dtype=jnp.float32):
    """x1: (N, in_ch, H, W), x2: (N, skip_ch, 2H, 2W) -> (N, out_ch, 2H, 2W)."""
    x1 = jnp.transpose(x1_nchw, (0, 2, 3, 1)).astype(jnp.float32)   # NHWC
    x2 = jnp.transpose(x2_nchw, (0, 2, 3, 1)).astype(jnp.float32)   # NHWC
    N, H, W, _ = x1.shape
    Ho, Wo = 2 * H, 2 * W
    assert x2.shape[1] == Ho and x2.shape[2] == Wo

    # Static align_corners=True x2-bilinear operator, fed to the MXU in-kernel.
    # TODO(synk): at production spatial sizes use the separable (Uy, Ux) form
    # instead of the dense kron to keep the operator small.
    u = jnp.asarray(np.kron(_interp_matrix(H, Ho), _interp_matrix(W, Wo)))

    count = float(N * Ho * Wo)

    h1, s1, q1 = fused_up_concat_conv_pallas(
        x2, x1, u, params["w1"], params["b1"], mxu_dtype)
    sc1, sh1 = _fold_bn(s1, q1, count, params["gamma1"], params["beta1"], eps)

    h2, s2, q2 = fused_bnrelu_conv_pallas(
        h1, sc1, sh1, params["w2"], params["b2"], Ho, Wo, mxu_dtype)
    sc2, sh2 = _fold_bn(s2, q2, count, params["gamma2"], params["beta2"], eps)

    y = bn_relu_pallas(h2, sc2, sh2)                   # (N, Ho*Wo, out_ch)
    y = y.reshape(N, Ho, Wo, y.shape[-1])
    return jnp.transpose(y, (0, 3, 1, 2))              # back to NCHW


# ----------------------------- pure-JAX reference ----------------------------

def bilinear_upsample_x2_align_corners(x):
    # x: (N, H, W, C).  nn.Upsample(scale_factor=2, bilinear, align_corners=True).
    N, H, W, C = x.shape
    Ho, Wo = 2 * H, 2 * W

    def coords(n_in, n_out):
        if n_out == 1 or n_in == 1:
            z = jnp.zeros((n_out,), jnp.float32)
            return z, jnp.zeros((n_out,), jnp.int32), jnp.zeros((n_out,), jnp.int32)
        s = jnp.arange(n_out, dtype=jnp.float32) * (n_in - 1) / (n_out - 1)
        i0 = jnp.clip(jnp.floor(s).astype(jnp.int32), 0, n_in - 1)
        i1 = jnp.clip(i0 + 1, 0, n_in - 1)
        return s - i0.astype(jnp.float32), i0, i1

    wy, y0, y1 = coords(H, Ho)
    wx, x0, x1 = coords(W, Wo)
    rows = (x[:, y0, :, :] * (1.0 - wy)[None, :, None, None]
            + x[:, y1, :, :] * wy[None, :, None, None])
    return (rows[:, :, x0, :] * (1.0 - wx)[None, None, :, None]
            + rows[:, :, x1, :] * wx[None, None, :, None])


def _ref_double_conv(x, p, eps=1e-5):
    def conv(a, w, b):
        return jax.lax.conv_general_dilated(
            a, w, window_strides=(1, 1), padding=((1, 1), (1, 1)),
            dimension_numbers=("NHWC", "HWIO", "NHWC")) + b

    def bn_relu(a, g, be):
        m = jnp.mean(a, axis=(0, 1, 2))
        v = jnp.var(a, axis=(0, 1, 2))
        return jnp.maximum((a - m) / jnp.sqrt(v + eps) * g + be, 0.0)

    a1 = bn_relu(conv(x, p["w1"], p["b1"]), p["gamma1"], p["beta1"])
    return bn_relu(conv(a1, p["w2"], p["b2"]), p["gamma2"], p["beta2"])


def nested_up_reference(x1_nchw, x2_nchw, params):
    x1 = jnp.transpose(x1_nchw, (0, 2, 3, 1)).astype(jnp.float32)
    x2 = jnp.transpose(x2_nchw, (0, 2, 3, 1)).astype(jnp.float32)
    x = jnp.concatenate([x2, bilinear_upsample_x2_align_corners(x1)], axis=-1)
    return jnp.transpose(_ref_double_conv(x, params), (0, 3, 1, 2))


# ----------------------------------- main -------------------------------------

if __name__ == "__main__":
    key = jax.random.PRNGKey(0)
    N, in_ch, H, W = 2, 8, 8, 8        # x1 is the coarse feature map
    skip_ch, out_ch = 4, 8             # NestedUp(in_channels=8, out_channels=8, skip_channels=4)
    k = jax.random.split(key, 8)

    x1 = jax.random.normal(k[0], (N, in_ch, H, W), jnp.float32)            # NCHW
    x2 = jax.random.normal(k[1], (N, skip_ch, 2 * H, 2 * W), jnp.float32)  # NCHW

    conv_in = in_ch + skip_ch
    params = dict(
        w1=0.1 * jax.random.normal(k[2], (3, 3, conv_in, out_ch), jnp.float32),
        b1=0.1 * jax.random.normal(k[3], (out_ch,), jnp.float32),
        gamma1=1.0 + 0.1 * jax.random.normal(k[4], (out_ch,), jnp.float32),
        beta1=0.1 * jax.random.normal(k[5], (out_ch,), jnp.float32),
        w2=0.1 * jax.random.normal(k[6], (3, 3, out_ch, out_ch), jnp.float32),
        b2=0.1 * jax.random.normal(k[7], (out_ch,), jnp.float32),
        gamma2=jnp.ones((out_ch,), jnp.float32),
        beta2=jnp.zeros((out_ch,), jnp.float32),
    )

    fwd = jax.jit(nested_up_forward)
    out = jax.block_until_ready(fwd(x1, x2, params))
    assert out.shape == (N, out_ch, 2 * H, 2 * W)

    ref = jax.block_until_ready(nested_up_reference(x1, x2, params))
    np.testing.assert_allclose(np.asarray(out), np.asarray(ref),
                               rtol=1e-4, atol=1e-4)

    # bf16 MXU fast path (v6e/v7x native; BN/ReLU and stats stay f32 for v5e).
    fwd_bf16 = jax.jit(functools.partial(nested_up_forward,
                                         mxu_dtype=jnp.bfloat16))
    out_bf16 = jax.block_until_ready(fwd_bf16(x1, x2, params))
    np.testing.assert_allclose(np.asarray(out_bf16), np.asarray(ref),
                               rtol=5e-2, atol=5e-2)

    print("KERNEL_OK")
</pallas_src>

<mosaic_0001>
module attributes {stable_mosaic.version = 11 : i64} {
  func.func @kernel(%arg0: i32, %arg1: memref<1x16x16x4xf32, #tpu.memory_space<vmem>>, %arg2: memref<1x8x8x8xf32, #tpu.memory_space<vmem>>, %arg3: memref<256x64xf32, #tpu.memory_space<vmem>>, %arg4: memref<108x8xf32, #tpu.memory_space<vmem>>, %arg5: memref<1x8xf32, #tpu.memory_space<vmem>>, %arg6: memref<1x256x8xf32, #tpu.memory_space<vmem>>, %arg7: memref<1x1x8xf32, #tpu.memory_space<vmem>>, %arg8: memref<1x1x8xf32, #tpu.memory_space<vmem>>, %arg9: memref<18x18x12xf32, #tpu.memory_space<vmem>>) attributes {dimension_semantics = [#tpu.dimension_semantics<parallel>], iteration_bounds = array<i64: 2>, scalar_prefetch = 0 : i64, scratch_operands = 1 : i64, tpu.core_type = #tpu.core_type<tc>, window_params = [{transform_indices = @transform_0, window_bounds = array<i64: 1, 16, 16, 4>}, {transform_indices = @transform_1, window_bounds = array<i64: 1, 8, 8, 8>}, {pipeline_mode = #tpu.pipeline_mode<synchronous>, transform_indices = @transform_2, window_bounds = array<i64: 256, 64>}, {pipeline_mode = #tpu.pipeline_mode<synchronous>, transform_indices = @transform_3, window_bounds = array<i64: 108, 8>}, {pipeline_mode = #tpu.pipeline_mode<synchronous>, transform_indices = @transform_4, window_bounds = array<i64: 1, 8>}, {transform_indices = @transform_5, window_bounds = array<i64: 1, 256, 8>}, {transform_indices = @transform_6, window_bounds = array<i64: 1, 1, 8>}, {transform_indices = @transform_7, window_bounds = array<i64: 1, 1, 8>}]} {
    %cst = arith.constant 0.000000e+00 : f32
    %0 = vector.broadcast %cst : f32 to vector<18x18x12xf32>
    %c0 = arith.constant 0 : index
    %c0_0 = arith.constant 0 : index
    %c0_1 = arith.constant 0 : index
    %1 = vector.load %arg9[%c0, %c0_0, %c0_1] : memref<18x18x12xf32, #tpu.memory_space<vmem>>, vector<18x18x12xf32>
    tpu.vector_store %arg9[%c0, %c0_0, %c0_1], %0 {strides = array<i32>} : memref<18x18x12xf32, #tpu.memory_space<vmem>>, vector<18x18x12xf32>,
    %c0_2 = arith.constant 0 : index
    %c0_3 = arith.constant 0 : index
    %2 = vector.load %arg3[%c0_2, %c0_3] : memref<256x64xf32, #tpu.memory_space<vmem>>, vector<256x64xf32>
    %c0_4 = arith.constant 0 : index
    %c0_5 = arith.constant 0 : index
    %c0_6 = arith.constant 0 : index
    %c0_7 = arith.constant 0 : index
    %3 = vector.load %arg2[%c0_4, %c0_5, %c0_6, %c0_7] : memref<1x8x8x8xf32, #tpu.memory_space<vmem>>, vector<1x8x8x8xf32>
    %4 = vector.shape_cast %3 : vector<1x8x8x8xf32> to vector<8x8x8xf32>
    %5 = vector.shape_cast %4 : vector<8x8x8xf32> to vector<64x8xf32>
    %cst_8 = arith.constant dense<0.000000e+00> : vector<256x8xf32>
    %6 = tpu.matmul %2, %5, %cst_8 {dimension_numbers = #tpu.dot_dimension_numbers<[1], [0], [0], [1], [0, 0, 1, 1], [], []>} : vector<256x64xf32>, vector<64x8xf32>, vector<256x8xf32> -> vector<256x8xf32>
    %c0_9 = arith.constant 0 : index
    %c0_10 = arith.constant 0 : index
    %c0_11 = arith.constant 0 : index
    %c0_12 = arith.constant 0 : index
    %7 = vector.load %arg1[%c0_9, %c0_10, %c0_11, %c0_12] : memref<1x16x16x4xf32, #tpu.memory_space<vmem>>, vector<1x16x16x4xf32>
    %8 = vector.shape_cast %7 : vector<1x16x16x4xf32> to vector<16x16x4xf32>
    %c1 = arith.constant 1 : index
    %c1_13 = arith.constant 1 : index
    %c0_14 = arith.constant 0 : index
    %9 = vector.load %arg9[%c1, %c1_13, %c0_14] : memref<18x18x12xf32, #tpu.memory_space<vmem>>, vector<16x16x4xf32>
    tpu.vector_store %arg9[%c1, %c1_13, %c0_14], %8 {strides = array<i32>} : memref<18x18x12xf32, #tpu.memory_space<vmem>>, vector<16x16x4xf32>,
    %10 = vector.shape_cast %6 : vector<256x8xf32> to vector<16x16x8xf32>
    %c1_15 = arith.constant 1 : index
    %c1_16 = arith.constant 1 : index
    %c4 = arith.constant 4 : index
    %11 = vector.load %arg9[%c1_15, %c1_16, %c4] : memref<18x18x12xf32, #tpu.memory_space<vmem>>, vector<16x16x8xf32>
    tpu.vector_store %arg9[%c1_15, %c1_16, %c4], %10 {strides = array<i32>} : memref<18x18x12xf32, #tpu.memory_space<vmem>>, vector<16x16x8xf32>,
    %c0_17 = arith.constant 0 : index
    %c0_18 = arith.constant 0 : index
    %c0_19 = arith.constant 0 : index
    %12 = vector.load %arg9[%c0_17, %c0_18, %c0_19] : memref<18x18x12xf32, #tpu.memory_space<vmem>>, vector<16x16x12xf32>
    %13 = vector.shape_cast %12 : vector<16x16x12xf32> to vector<256x12xf32>
    %c0_20 = arith.constant 0 : index
    %c1_21 = arith.constant 1 : index
    %c0_22 = arith.constant 0 : index
    %14 = vector.load %arg9[%c0_20, %c1_21, %c0_22] : memref<18x18x12xf32, #tpu.memory_space<vmem>>, vector<16x16x12xf32>
    %15 = vector.shape_cast %14 : vector<16x16x12xf32> to vector<256x12xf32>
    %c0_23 = arith.constant 0 : index
    %c2 = arith.constant 2 : index
    %c0_24 = arith.constant 0 : index
    %16 = vector.load %arg9[%c0_23, %c2, %c0_24] : memref<18x18x12xf32, #tpu.memory_space<vmem>>, vector<16x16x12xf32>
    %17 = vector.shape_cast %16 : vector<16x16x12xf32> to vector<256x12xf32>
    %c1_25 = arith.constant 1 : index
    %c0_26 = arith.constant 0 : index
    %c0_27 = arith.constant 0 : index
    %18 = vector.load %arg9[%c1_25, %c0_26, %c0_27] : memref<18x18x12xf32, #tpu.memory_space<vmem>>, vector<16x16x12xf32>
    %19 = vector.shape_cast %18 : vector<16x16x12xf32> to vector<256x12xf32>
    %c1_28 = arith.constant 1 : index
    %c1_29 = arith.constant 1 : index
    %c0_30 = arith.constant 0 : index
    %20 = vector.load %arg9[%c1_28, %c1_29, %c0_30] : memref<18x18x12xf32, #tpu.memory_space<vmem>>, vector<16x16x12xf32>
    %21 = vector.shape_cast %20 : vector<16x16x12xf32> to vector<256x12xf32>
    %c1_31 = arith.constant 1 : index
    %c2_32 = arith.constant 2 : index
    %c0_33 = arith.constant 0 : index
    %22 = vector.load %arg9[%c1_31, %c2_32, %c0_33] : memref<18x18x12xf32, #tpu.memory_space<vmem>>, vector<16x16x12xf32>
    %23 = vector.shape_cast %22 : vector<16x16x12xf32> to vector<256x12xf32>
    %c2_34 = arith.constant 2 : index
    %c0_35 = arith.constant 0 : index
    %c0_36 = arith.constant 0 : index
    %24 = vector.load %arg9[%c2_34, %c0_35, %c0_36] : memref<18x18x12xf32, #tpu.memory_space<vmem>>, vector<16x16x12xf32>
    %25 = vector.shape_cast %24 : vector<16x16x12xf32> to vector<256x12xf32>
    %c2_37 = arith.constant 2 : index
    %c1_38 = arith.constant 1 : index
    %c0_39 = arith.constant 0 : index
    %26 = vector.load %arg9[%c2_37, %c1_38, %c0_39] : memref<18x18x12xf32, #tpu.memory_space<vmem>>, vector<16x16x12xf32>
    %27 = vector.shape_cast %26 : vector<16x16x12xf32> to vector<256x12xf32>
    %c2_40 = arith.constant 2 : index
    %c2_41 = arith.constant 2 : index
    %c0_42 = arith.constant 0 : index
    %28 = vector.load %arg9[%c2_40, %c2_41, %c0_42] : memref<18x18x12xf32, #tpu.memory_space<vmem>>, vector<16x16x12xf32>
    %29 = vector.shape_cast %28 : vector<16x16x12xf32> to vector<256x12xf32>
    %30 = tpu.concatenate %13, %15, %17, %19, %21, %23, %25, %27, %29 in 1 : vector<256x12xf32>, vector<256x12xf32>, vector<256x12xf32>, vector<256x12xf32>, vector<256x12xf32>, vector<256x12xf32>, vector<256x12xf32>, vector<256x12xf32>, vector<256x12xf32> -> vector<256x108xf32>
    %c0_43 = arith.constant 0 : index
    %c0_44 = arith.constant 0 : index
    %31 = vector.load %arg4[%c0_43, %c0_44] : memref<108x8xf32, #tpu.memory_space<vmem>>, vector<108x8xf32>
    %cst_45 = arith.constant dense<0.000000e+00> : vector<256x8xf32>
    %32 = tpu.matmul %30, %31, %cst_45 {dimension_numbers = #tpu.dot_dimension_numbers<[1], [0], [0], [1], [0, 0, 1, 1], [], []>} : vector<256x108xf32>, vector<108x8xf32>, vector<256x8xf32> -> vector<256x8xf32>
    %c0_46 = arith.constant 0 : index
    %c0_47 = arith.constant 0 : index
    %33 = vector.load %arg5[%c0_46, %c0_47] : memref<1x8xf32, #tpu.memory_space<vmem>>, vector<1x8xf32>
    %34 = vector.broadcast %33 : vector<1x8xf32> to vector<256x8xf32>
    %35 = arith.addf %32, %34 : vector<256x8xf32>
    %c0_48 = arith.constant 0 : index
    %c0_49 = arith.constant 0 : index
    %c0_50 = arith.constant 0 : index
    %36 = vector.load %arg6[%c0_48, %c0_49, %c0_50] : memref<1x256x8xf32, #tpu.memory_space<vmem>>, vector<1x256x8xf32>
    %37 = vector.shape_cast %36 : vector<1x256x8xf32> to vector<256x8xf32>
    %38 = vector.shape_cast %35 : vector<256x8xf32> to vector<1x256x8xf32>
    tpu.vector_store %arg6[%c0_48, %c0_49, %c0_50], %38 {strides = array<i32>} : memref<1x256x8xf32, #tpu.memory_space<vmem>>, vector<1x256x8xf32>,
    %cst_51 = arith.constant dense<0.000000e+00> : vector<8xf32>
    %39 = vector.multi_reduction <add>, %35, %cst_51 [0] : vector<256x8xf32> to vector<8xf32>
    %40 = vector.shape_cast %39 : vector<8xf32> to vector<1x1x8xf32>
    %c0_52 = arith.constant 0 : index
    %c0_53 = arith.constant 0 : index
    %c0_54 = arith.constant 0 : index
    %41 = vector.load %arg7[%c0_52, %c0_53, %c0_54] : memref<1x1x8xf32, #tpu.memory_space<vmem>>, vector<1x1x8xf32>
    tpu.vector_store %arg7[%c0_52, %c0_53, %c0_54], %40 {strides = array<i32>} : memref<1x1x8xf32, #tpu.memory_space<vmem>>, vector<1x1x8xf32>,
    %42 = arith.mulf %35, %35 : vector<256x8xf32>
    %cst_55 = arith.constant dense<0.000000e+00> : vector<8xf32>
    %43 = vector.multi_reduction <add>, %42, %cst_55 [0] : vector<256x8xf32> to vector<8xf32>
    %44 = vector.shape_cast %43 : vector<8xf32> to vector<1x1x8xf32>
    %c0_56 = arith.constant 0 : index
    %c0_57 = arith.constant 0 : index
    %c0_58 = arith.constant 0 : index
    %45 = vector.load %arg8[%c0_56, %c0_57, %c0_58] : memref<1x1x8xf32, #tpu.memory_space<vmem>>, vector<1x1x8xf32>
    tpu.vector_store %arg8[%c0_56, %c0_57, %c0_58], %44 {strides = array<i32>} : memref<1x1x8xf32, #tpu.memory_space<vmem>>, vector<1x1x8xf32>,
    return
  }
  func.func @transform_0(%arg0: i32) -> (i32, i32, i32, i32) {
    %c0_i32 = arith.constant 0 : i32
    %c0_i32_0 = arith.constant 0 : i32
    %c0_i32_1 = arith.constant 0 : i32
    %c0_i32_2 = arith.constant 0 : i32
    return %arg0, %c0_i32, %c0_i32_0, %c0_i32_1 : i32, i32, i32, i32
  }
  func.func @transform_1(%arg0: i32) -> (i32, i32, i32, i32) {
    %c0_i32 = arith.constant 0 : i32
    %c0_i32_0 = arith.constant 0 : i32
    %c0_i32_1 = arith.constant 0 : i32
    %c0_i32_2 = arith.constant 0 : i32
    return %arg0, %c0_i32, %c0_i32_0, %c0_i32_1 : i32, i32, i32, i32
  }
  func.func @transform_2(%arg0: i32) -> (i32, i32) {
    %c0_i32 = arith.constant 0 : i32
    %c0_i32_0 = arith.constant 0 : i32
    %c0_i32_1 = arith.constant 0 : i32
    return %c0_i32, %c0_i32_0 : i32, i32
  }
  func.func @transform_3(%arg0: i32) -> (i32, i32) {
    %c0_i32 = arith.constant 0 : i32
    %c0_i32_0 = arith.constant 0 : i32
    %c0_i32_1 = arith.constant 0 : i32
    return %c0_i32, %c0_i32_0 : i32, i32
  }
  func.func @transform_4(%arg0: i32) -> (i32, i32) {
    %c0_i32 = arith.constant 0 : i32
    %c0_i32_0 = arith.constant 0 : i32
    %c0_i32_1 = arith.constant 0 : i32
    return %c0_i32, %c0_i32_0 : i32, i32
  }
  func.func @transform_5(%arg0: i32) -> (i32, i32, i32) {
    %c0_i32 = arith.constant 0 : i32
    %c0_i32_0 = arith.constant 0 : i32
    %c0_i32_1 = arith.constant 0 : i32
    return %arg0, %c0_i32, %c0_i32_0 : i32, i32, i32
  }
  func.func @transform_6(%arg0: i32) -> (i32, i32, i32) {
    %c0_i32 = arith.constant 0 : i32
    %c0_i32_0 = arith.constant 0 : i32
    %c0_i32_1 = arith.constant 0 : i32
    return %arg0, %c0_i32, %c0_i32_0 : i32, i32, i32
  }
  func.func @transform_7(%arg0: i32) -> (i32, i32, i32) {
    %c0_i32 = arith.constant 0 : i32
    %c0_i32_0 = arith.constant 0 : i32
    %c0_i32_1 = arith.constant 0 : i32
    return %arg0, %c0_i32, %c0_i32_0 : i32, i32, i32
  }
}

module attributes {stable_mosaic.version = 11 : i64} {
  func.func @kernel(%arg0: i32, %arg1: memref<1x256x8xf32, #tpu.memory_space<vmem>>, %arg2: memref<1x8xf32, #tpu.memory_space<vmem>>, %arg3: memref<1x8xf32, #tpu.memory_space<vmem>>, %arg4: memref<72x8xf32, #tpu.memory_space<vmem>>, %arg5: memref<1x8xf32, #tpu.memory_space<vmem>>, %arg6: memref<1x256x8xf32, #tpu.memory_space<vmem>>, %arg7: memref<1x1x8xf32, #tpu.memory_space<vmem>>, %arg8: memref<1x1x8xf32, #tpu.memory_space<vmem>>, %arg9: memref<18x18x8xf32, #tpu.memory_space<vmem>>) attributes {dimension_semantics = [#tpu.dimension_semantics<parallel>], iteration_bounds = array<i64: 2>, scalar_prefetch = 0 : i64, scratch_operands = 1 : i64, tpu.core_type = #tpu.core_type<tc>, window_params = [{transform_indices = @transform_0, window_bounds = array<i64: 1, 256, 8>}, {pipeline_mode = #tpu.pipeline_mode<synchronous>, transform_indices = @transform_1, window_bounds = array<i64: 1, 8>}, {pipeline_mode = #tpu.pipeline_mode<synchronous>, transform_indices = @transform_2, window_bounds = array<i64: 1, 8>}, {pipeline_mode = #tpu.pipeline_mode<synchronous>, transform_indices = @transform_3, window_bounds = array<i64: 72, 8>}, {pipeline_mode = #tpu.pipeline_mode<synchronous>, transform_indices = @transform_4, window_bounds = array<i64: 1, 8>}, {transform_indices = @transform_5, window_bounds = array<i64: 1, 256, 8>}, {transform_indices = @transform_6, window_bounds = array<i64: 1, 1, 8>}, {transform_indices = @transform_7, window_bounds = array<i64: 1, 1, 8>}]} {
    %cst = arith.constant 0.000000e+00 : f32
    %0 = vector.broadcast %cst : f32 to vector<18x18x8xf32>
    %c0 = arith.constant 0 : index
    %c0_0 = arith.constant 0 : index
    %c0_1 = arith.constant 0 : index
    %1 = vector.load %arg9[%c0, %c0_0, %c0_1] : memref<18x18x8xf32, #tpu.memory_space<vmem>>, vector<18x18x8xf32>
    tpu.vector_store %arg9[%c0, %c0_0, %c0_1], %0 {strides = array<i32>} : memref<18x18x8xf32, #tpu.memory_space<vmem>>, vector<18x18x8xf32>,
    %c0_2 = arith.constant 0 : index
    %c0_3 = arith.constant 0 : index
    %c0_4 = arith.constant 0 : index
    %2 = vector.load %arg1[%c0_2, %c0_3, %c0_4] : memref<1x256x8xf32, #tpu.memory_space<vmem>>, vector<1x256x8xf32>
    %3 = vector.shape_cast %2 : vector<1x256x8xf32> to vector<256x8xf32>
    %c0_5 = arith.constant 0 : index
    %c0_6 = arith.constant 0 : index
    %4 = vector.load %arg2[%c0_5, %c0_6] : memref<1x8xf32, #tpu.memory_space<vmem>>, vector<1x8xf32>
    %5 = vector.shape_cast %4 : vector<1x8xf32> to vector<8xf32>
    %6 = vector.shape_cast %5 : vector<8xf32> to vector<1x8xf32>
    %7 = vector.broadcast %6 : vector<1x8xf32> to vector<256x8xf32>
    %8 = arith.mulf %3, %7 : vector<256x8xf32>
    %c0_7 = arith.constant 0 : index
    %c0_8 = arith.constant 0 : index
    %9 = vector.load %arg3[%c0_7, %c0_8] : memref<1x8xf32, #tpu.memory_space<vmem>>, vector<1x8xf32>
    %10 = vector.shape_cast %9 : vector<1x8xf32> to vector<8xf32>
    %11 = vector.shape_cast %10 : vector<8xf32> to vector<1x8xf32>
    %12 = vector.broadcast %11 : vector<1x8xf32> to vector<256x8xf32>
    %13 = arith.addf %8, %12 : vector<256x8xf32>
    %cst_9 = arith.constant 0.000000e+00 : f32
    %14 = vector.broadcast %cst_9 : f32 to vector<256x8xf32>
    %15 = arith.maximumf %13, %14 : vector<256x8xf32>
    %16 = vector.shape_cast %15 : vector<256x8xf32> to vector<16x16x8xf32>
    %c1 = arith.constant 1 : index
    %c1_10 = arith.constant 1 : index
    %c0_11 = arith.constant 0 : index
    %17 = vector.load %arg9[%c1, %c1_10, %c0_11] : memref<18x18x8xf32, #tpu.memory_space<vmem>>, vector<16x16x8xf32>
    tpu.vector_store %arg9[%c1, %c1_10, %c0_11], %16 {strides = array<i32>} : memref<18x18x8xf32, #tpu.memory_space<vmem>>, vector<16x16x8xf32>,
    %c0_12 = arith.constant 0 : index
    %c0_13 = arith.constant 0 : index
    %c0_14 = arith.constant 0 : index
    %18 = vector.load %arg9[%c0_12, %c0_13, %c0_14] : memref<18x18x8xf32, #tpu.memory_space<vmem>>, vector<16x16x8xf32>
    %19 = vector.shape_cast %18 : vector<16x16x8xf32> to vector<256x8xf32>
    %c0_15 = arith.constant 0 : index
    %c1_16 = arith.constant 1 : index
    %c0_17 = arith.constant 0 : index
    %20 = vector.load %arg9[%c0_15, %c1_16, %c0_17] : memref<18x18x8xf32, #tpu.memory_space<vmem>>, vector<16x16x8xf32>
    %21 = vector.shape_cast %20 : vector<16x16x8xf32> to vector<256x8xf32>
    %c0_18 = arith.constant 0 : index
    %c2 = arith.constant 2 : index
    %c0_19 = arith.constant 0 : index
    %22 = vector.load %arg9[%c0_18, %c2, %c0_19] : memref<18x18x8xf32, #tpu.memory_space<vmem>>, vector<16x16x8xf32>
    %23 = vector.shape_cast %22 : vector<16x16x8xf32> to vector<256x8xf32>
    %c1_20 = arith.constant 1 : index
    %c0_21 = arith.constant 0 : index
    %c0_22 = arith.constant 0 : index
    %24 = vector.load %arg9[%c1_20, %c0_21, %c0_22] : memref<18x18x8xf32, #tpu.memory_space<vmem>>, vector<16x16x8xf32>
    %25 = vector.shape_cast %24 : vector<16x16x8xf32> to vector<256x8xf32>
    %c1_23 = arith.constant 1 : index
    %c1_24 = arith.constant 1 : index
    %c0_25 = arith.constant 0 : index
    %26 = vector.load %arg9[%c1_23, %c1_24, %c0_25] : memref<18x18x8xf32, #tpu.memory_space<vmem>>, vector<16x16x8xf32>
    %27 = vector.shape_cast %26 : vector<16x16x8xf32> to vector<256x8xf32>
    %c1_26 = arith.constant 1 : index
    %c2_27 = arith.constant 2 : index
    %c0_28 = arith.constant 0 : index
    %28 = vector.load %arg9[%c1_26, %c2_27, %c0_28] : memref<18x18x8xf32, #tpu.memory_space<vmem>>, vector<16x16x8xf32>
    %29 = vector.shape_cast %28 : vector<16x16x8xf32> to vector<256x8xf32>
    %c2_29 = arith.constant 2 : index
    %c0_30 = arith.constant 0 : index
    %c0_31 = arith.constant 0 : index
    %30 = vector.load %arg9[%c2_29, %c0_30, %c0_31] : memref<18x18x8xf32, #tpu.memory_space<vmem>>, vector<16x16x8xf32>
    %31 = vector.shape_cast %30 : vector<16x16x8xf32> to vector<256x8xf32>
    %c2_32 = arith.constant 2 : index
    %c1_33 = arith.constant 1 : index
    %c0_34 = arith.constant 0 : index
    %32 = vector.load %arg9[%c2_32, %c1_33, %c0_34] : memref<18x18x8xf32, #tpu.memory_space<vmem>>, vector<16x16x8xf32>
    %33 = vector.shape_cast %32 : vector<16x16x8xf32> to vector<256x8xf32>
    %c2_35 = arith.constant 2 : index
    %c2_36 = arith.constant 2 : index
    %c0_37 = arith.constant 0 : index
    %34 = vector.load %arg9[%c2_35, %c2_36, %c0_37] : memref<18x18x8xf32, #tpu.memory_space<vmem>>, vector<16x16x8xf32>
    %35 = vector.shape_cast %34 : vector<16x16x8xf32> to vector<256x8xf32>
    %36 = tpu.concatenate %19, %21, %23, %25, %27, %29, %31, %33, %35 in 1 : vector<256x8xf32>, vector<256x8xf32>, vector<256x8xf32>, vector<256x8xf32>, vector<256x8xf32>, vector<256x8xf32>, vector<256x8xf32>, vector<256x8xf32>, vector<256x8xf32> -> vector<256x72xf32>
    %c0_38 = arith.constant 0 : index
    %c0_39 = arith.constant 0 : index
    %37 = vector.load %arg4[%c0_38, %c0_39] : memref<72x8xf32, #tpu.memory_space<vmem>>, vector<72x8xf32>
    %cst_40 = arith.constant dense<0.000000e+00> : vector<256x8xf32>
    %38 = tpu.matmul %36, %37, %cst_40 {dimension_numbers = #tpu.dot_dimension_numbers<[1], [0], [0], [1], [0, 0, 1, 1], [], []>} : vector<256x72xf32>, vector<72x8xf32>, vector<256x8xf32> -> vector<256x8xf32>
    %c0_41 = arith.constant 0 : index
    %c0_42 = arith.constant 0 : index
    %39 = vector.load %arg5[%c0_41, %c0_42] : memref<1x8xf32, #tpu.memory_space<vmem>>, vector<1x8xf32>
    %40 = vector.broadcast %39 : vector<1x8xf32> to vector<256x8xf32>
    %41 = arith.addf %38, %40 : vector<256x8xf32>
    %c0_43 = arith.constant 0 : index
    %c0_44 = arith.constant 0 : index
    %c0_45 = arith.constant 0 : index
    %42 = vector.load %arg6[%c0_43, %c0_44, %c0_45] : memref<1x256x8xf32, #tpu.memory_space<vmem>>, vector<1x256x8xf32>
    %43 = vector.shape_cast %42 : vector<1x256x8xf32> to vector<256x8xf32>
    %44 = vector.shape_cast %41 : vector<256x8xf32> to vector<1x256x8xf32>
    tpu.vector_store %arg6[%c0_43, %c0_44, %c0_45], %44 {strides = array<i32>} : memref<1x256x8xf32, #tpu.memory_space<vmem>>, vector<1x256x8xf32>,
    %cst_46 = arith.constant dense<0.000000e+00> : vector<8xf32>
    %45 = vector.multi_reduction <add>, %41, %cst_46 [0] : vector<256x8xf32> to vector<8xf32>
    %46 = vector.shape_cast %45 : vector<8xf32> to vector<1x1x8xf32>
    %c0_47 = arith.constant 0 : index
    %c0_48 = arith.constant 0 : index
    %c0_49 = arith.constant 0 : index
    %47 = vector.load %arg7[%c0_47, %c0_48, %c0_49] : memref<1x1x8xf32, #tpu.memory_space<vmem>>, vector<1x1x8xf32>
    tpu.vector_store %arg7[%c0_47, %c0_48, %c0_49], %46 {strides = array<i32>} : memref<1x1x8xf32, #tpu.memory_space<vmem>>, vector<1x1x8xf32>,
    %48 = arith.mulf %41, %41 : vector<256x8xf32>
    %cst_50 = arith.constant dense<0.000000e+00> : vector<8xf32>
    %49 = vector.multi_reduction <add>, %48, %cst_50 [0] : vector<256x8xf32> to vector<8xf32>
    %50 = vector.shape_cast %49 : vector<8xf32> to vector<1x1x8xf32>
    %c0_51 = arith.constant 0 : index
    %c0_52 = arith.constant 0 : index
    %c0_53 = arith.constant 0 : index
    %51 = vector.load %arg8[%c0_51, %c0_52, %c0_53] : memref<1x1x8xf32, #tpu.memory_space<vmem>>, vector<1x1x8xf32>
    tpu.vector_store %arg8[%c0_51, %c0_52, %c0_53], %50 {strides = array<i32>} : memref<1x1x8xf32, #tpu.memory_space<vmem>>, vector<1x1x8xf32>,
    return
  }
  func.func @transform_0(%arg0: i32) -> (i32, i32, i32) {
    %c0_i32 = arith.constant 0 : i32
    %c0_i32_0 = arith.constant 0 : i32
    %c0_i32_1 = arith.constant 0 : i32
    return %arg0, %c0_i32, %c0_i32_0 : i32, i32, i32
  }
  func.func @transform_1(%arg0: i32) -> (i32, i32) {
    %c0_i32 = arith.constant 0 : i32
    %c0_i32_0 = arith.constant 0 : i32
    %c0_i32_1 = arith.constant 0 : i32
    return %c0_i32, %c0_i32_0 : i32, i32
  }
  func.func @transform_2(%arg0: i32) -> (i32, i32) {
    %c0_i32 = arith.constant 0 : i32
    %c0_i32_0 = arith.constant 0 : i32
    %c0_i32_1 = arith.constant 0 : i32
    return %c0_i32, %c0_i32_0 : i32, i32
  }
  func.func @transform_3(%arg0: i32) -> (i32, i32) {
    %c0_i32 = arith.constant 0 : i32
    %c0_i32_0 = arith.constant 0 : i32
    %c0_i32_1 = arith.constant 0 : i32
    return %c0_i32, %c0_i32_0 : i32, i32
  }
  func.func @transform_4(%arg0: i32) -> (i32, i32) {
    %c0_i32 = arith.constant 0 : i32
    %c0_i32_0 = arith.constant 0 : i32
    %c0_i32_1 = arith.constant 0 : i32
    return %c0_i32, %c0_i32_0 : i32, i32
  }
  func.func @transform_5(%arg0: i32) -> (i32, i32, i32) {
    %c0_i32 = arith.constant 0 : i32
    %c0_i32_0 = arith.constant 0 : i32
    %c0_i32_1 = arith.constant 0 : i32
    return %arg0, %c0_i32, %c0_i32_0 : i32, i32, i32
  }
  func.func @transform_6(%arg0: i32) -> (i32, i32, i32) {
    %c0_i32 = arith.constant 0 : i32
    %c0_i32_0 = arith.constant 0 : i32
    %c0_i32_1 = arith.constant 0 : i32
    return %arg0, %c0_i32, %c0_i32_0 : i32, i32, i32
  }
  func.func @transform_7(%arg0: i32) -> (i32, i32, i32) {
    %c0_i32 = arith.constant 0 : i32
    %c0_i32_0 = arith.constant 0 : i32
    %c0_i32_1 = arith.constant 0 : i32
    return %arg0, %c0_i32, %c0_i32_0 : i32, i32, i32
  }
}

module attributes {stable_mosaic.version = 11 : i64} {
  func.func @_bn_relu_kernel(%arg0: i32, %arg1: memref<1x256x8xf32, #tpu.memory_space<vmem>>, %arg2: memref<1x8xf32, #tpu.memory_space<vmem>>, %arg3: memref<1x8xf32, #tpu.memory_space<vmem>>, %arg4: memref<1x256x8xf32, #tpu.memory_space<vmem>>) attributes {dimension_semantics = [#tpu.dimension_semantics<parallel>], iteration_bounds = array<i64: 2>, scalar_prefetch = 0 : i64, scratch_operands = 0 : i64, tpu.core_type = #tpu.core_type<tc>, window_params = [{transform_indices = @transform_0, window_bounds = array<i64: 1, 256, 8>}, {pipeline_mode = #tpu.pipeline_mode<synchronous>, transform_indices = @transform_1, window_bounds = array<i64: 1, 8>}, {pipeline_mode = #tpu.pipeline_mode<synchronous>, transform_indices = @transform_2, window_bounds = array<i64: 1, 8>}, {transform_indices = @transform_3, window_bounds = array<i64: 1, 256, 8>}]} {
    %c0 = arith.constant 0 : index
    %c0_0 = arith.constant 0 : index
    %c0_1 = arith.constant 0 : index
    %0 = vector.load %arg1[%c0, %c0_0, %c0_1] : memref<1x256x8xf32, #tpu.memory_space<vmem>>, vector<1x256x8xf32>
    %c0_2 = arith.constant 0 : index
    %c0_3 = arith.constant 0 : index
    %1 = vector.load %arg2[%c0_2, %c0_3] : memref<1x8xf32, #tpu.memory_space<vmem>>, vector<1x8xf32>
    %2 = vector.shape_cast %1 : vector<1x8xf32> to vector<8xf32>
    %3 = vector.shape_cast %2 : vector<8xf32> to vector<1x1x8xf32>
    %4 = vector.broadcast %3 : vector<1x1x8xf32> to vector<1x256x8xf32>
    %5 = arith.mulf %0, %4 : vector<1x256x8xf32>
    %c0_4 = arith.constant 0 : index
    %c0_5 = arith.constant 0 : index
    %6 = vector.load %arg3[%c0_4, %c0_5] : memref<1x8xf32, #tpu.memory_space<vmem>>, vector<1x8xf32>
    %7 = vector.shape_cast %6 : vector<1x8xf32> to vector<8xf32>
    %8 = vector.shape_cast %7 : vector<8xf32> to vector<1x1x8xf32>
    %9 = vector.broadcast %8 : vector<1x1x8xf32> to vector<1x256x8xf32>
    %10 = arith.addf %5, %9 : vector<1x256x8xf32>
    %cst = arith.constant 0.000000e+00 : f32
    %11 = vector.broadcast %cst : f32 to vector<1x256x8xf32>
    %12 = arith.maximumf %10, %11 : vector<1x256x8xf32>
    %c0_6 = arith.constant 0 : index
    %c0_7 = arith.constant 0 : index
    %c0_8 = arith.constant 0 : index
    %13 = vector.load %arg4[%c0_6, %c0_7, %c0_8] : memref<1x256x8xf32, #tpu.memory_space<vmem>>, vector<1x256x8xf32>
    tpu.vector_store %arg4[%c0_6, %c0_7, %c0_8], %12 {strides = array<i32>} : memref<1x256x8xf32, #tpu.memory_space<vmem>>, vector<1x256x8xf32>,
    return
  }
  func.func @transform_0(%arg0: i32) -> (i32, i32, i32) {
    %c0_i32 = arith.constant 0 : i32
    %c0_i32_0 = arith.constant 0 : i32
    %c0_i32_1 = arith.constant 0 : i32
    return %arg0, %c0_i32, %c0_i32_0 : i32, i32, i32
  }
  func.func @transform_1(%arg0: i32) -> (i32, i32) {
    %c0_i32 = arith.constant 0 : i32
    %c0_i32_0 = arith.constant 0 : i32
    %c0_i32_1 = arith.constant 0 : i32
    return %c0_i32, %c0_i32_0 : i32, i32
  }
  func.func @transform_2(%arg0: i32) -> (i32, i32) {
    %c0_i32 = arith.constant 0 : i32
    %c0_i32_0 = arith.constant 0 : i32
    %c0_i32_1 = arith.constant 0 : i32
    return %c0_i32, %c0_i32_0 : i32, i32
  }
  func.func @transform_3(%arg0: i32) -> (i32, i32, i32) {
    %c0_i32 = arith.constant 0 : i32
    %c0_i32_0 = arith.constant 0 : i32
    %c0_i32_1 = arith.constant 0 : i32
    return %arg0, %c0_i32, %c0_i32_0 : i32, i32, i32
  }
}

</mosaic_0001>

<llo_original>
// kernel: nested_up_forward.5
$region0: #{nested_up_forward.5}
  #allocation0 [shape = 'u32[]', space=smem, size = 0x4, offset = 0x4, fixed_abs, tag = 'smem constant byte address 0x4 - core index']
  #allocation1 [shape = 'u32[72,128]{1,0:T(1,128)}', space=vmem, size = 0x9000, scoped, tag = 'internal scratch']
  %s0 = inlined_call_operand.vmem [shape: f32[2,256,8], index: 0, kind: input, shape index: {}]
  %s1 = inlined_call_operand.vmem [shape: f32[1,8], index: 1, kind: input, shape index: {}]
  %s2 = inlined_call_operand.vmem [shape: f32[1,8], index: 2, kind: input, shape index: {}]
  %s3 = inlined_call_operand.vmem [shape: f32[2,256,8], index: 3, kind: output, shape index: {}]
  %s4 = sld [smem:[#allocation0]]
  $region45: #{nested_up_forward.5} parent=0
    _
  %s6 = ssub.s32 1, %s4
  %s7 = scalar_select 0, %s6, %s4
  loop: start=0, step=1, limit=4
  $region2: #{nested_up_forward.5} parent=0 // loop_pre_header
    _
  $region3: #{nested_up_forward.5} parent=0 // loop_header
    %s9 = sphi 0, %s13
    %p10 = scmp.ge.s32.totalorder %s9, 4
    %s19 = sphi 0, %s21
    %s22 = sphi 0, %s19
    %s23 = sphi 0, %s22
    %s39 = sphi 0, %s23
    %s43 = sphi 0, %s43
    %s45 = sphi 0, %s43
    %s46 = sphi 0, %s45
    %s60 = sphi 0, %s46
    %s64 = sphi 0, %s64
    %s66 = sphi 0, %s64
    %s67 = sphi 0, %s66
    %s81 = sphi 0, %s67
    %s87 = sphi 0, %s89
    %s90 = sphi 0, %s87
    %s91 = sphi 0, %s90
    %s107 = sphi 0, %s91
  $region4: #{nested_up_forward.5} parent=0 // loop_header_branch
    %12 = sbr.rel (%p10) target = $region8
  $region5: #{nested_up_forward.5} parent=0 // loop_body
    %s14 = ssub.s32 %s9, 1
    %s15 = ssub.s32 %s9, 2
    %s16 = sadd.s32 %s9, 1
    %s17 = ssub.s32 %s9, %s16
    %p18 = scmp.eq.s32.totalorder %s17, 0
    %s20 = sadd.s32 %s19, 1
    %s21 = scalar_select %p18, %s19, %s20
    %p24 = pneg %p18
    %p25 = scmp.eq.s32.totalorder %s9, 1
    %p26 = por %p24, %p25
    %p27 = scmp.ne.s32.totalorder %s19, %s22
    %p28 = scmp.eq.s32.totalorder %s9, 0
    %p29 = por %p27, %p28
    %p30 = scmp.ne.s32.totalorder %s19, %s22
    %p31 = scmp.eq.s32.totalorder %s14, 1
    %p32 = por %p30, %p31
    %p33 = scmp.ne.s32.totalorder %s22, %s23
    %p34 = scmp.eq.s32.totalorder %s14, 0
    %p35 = por %p33, %p34
    %p36 = scmp.ne.s32.totalorder %s22, %s23
    %p37 = scmp.eq.s32.totalorder %s15, 1
    %p38 = por %p36, %p37
    %p40 = scmp.ne.s32.totalorder %s23, %s39
    %p41 = scmp.eq.s32.totalorder %s15, 0
    %p42 = por %p40, %p41
    %s44 = sadd.s32 %s43, 1
    %p47 = scmp.eq.s32.totalorder %s9, 1
    %p48 = scmp.ne.s32.totalorder %s43, %s45
    %p49 = scmp.eq.s32.totalorder %s9, 0
    %p50 = por %p48, %p49
    %p51 = scmp.ne.s32.totalorder %s43, %s45
    %p52 = scmp.eq.s32.totalorder %s14, 1
    %p53 = por %p51, %p52
    %p54 = scmp.ne.s32.totalorder %s45, %s46
    %p55 = scmp.eq.s32.totalorder %s14, 0
    %p56 = por %p54, %p55
    %p57 = scmp.ne.s32.totalorder %s45, %s46
    %p58 = scmp.eq.s32.totalorder %s15, 1
    %p59 = por %p57, %p58
    %p61 = scmp.ne.s32.totalorder %s46, %s60
    %p62 = scmp.eq.s32.totalorder %s15, 0
    %p63 = por %p61, %p62
    %s65 = sadd.s32 %s64, 1
    %p68 = scmp.eq.s32.totalorder %s9, 1
    %p69 = scmp.ne.s32.totalorder %s64, %s66
    %p70 = scmp.eq.s32.totalorder %s9, 0
    %p71 = por %p69, %p70
    %p72 = scmp.ne.s32.totalorder %s64, %s66
    %p73 = scmp.eq.s32.totalorder %s14, 1
    %p74 = por %p72, %p73
    %p75 = scmp.ne.s32.totalorder %s66, %s67
    %p76 = scmp.eq.s32.totalorder %s14, 0
    %p77 = por %p75, %p76
    %p78 = scmp.ne.s32.totalorder %s66, %s67
    %p79 = scmp.eq.s32.totalorder %s15, 1
    %p80 = por %p78, %p79
    %p82 = scmp.ne.s32.totalorder %s67, %s81
    %p83 = scmp.eq.s32.totalorder %s15, 0
    %p84 = por %p82, %p83
    %s85 = ssub.s32 %s9, %s16
    %p86 = scmp.eq.s32.totalorder %s85, 0
    %s88 = sadd.s32 %s87, 1
    %s89 = scalar_select %p86, %s87, %s88
    %p92 = pneg %p86
    %p93 = scmp.eq.s32.totalorder %s9, 1
    %p94 = por %p92, %p93
    %p95 = scmp.ne.s32.totalorder %s87, %s90
    %p96 = scmp.eq.s32.totalorder %s9, 0
    %p97 = por %p95, %p96
    %p98 = scmp.ne.s32.totalorder %s87, %s90
    %p99 = scmp.eq.s32.totalorder %s14, 1
    %p100 = por %p98, %p99
    %p101 = scmp.ne.s32.totalorder %s90, %s91
    %p102 = scmp.eq.s32.totalorder %s14, 0
    %p103 = por %p101, %p102
    %p104 = scmp.ne.s32.totalorder %s90, %s91
    %p105 = scmp.eq.s32.totalorder %s15, 1
    %p106 = por %p104, %p105
    %p108 = scmp.ne.s32.totalorder %s91, %s107
    %p109 = scmp.eq.s32.totalorder %s15, 0
    %p110 = por %p108, %p109
    %p111 = scmp.le.s32.totalorder 1, %s9
    %p112 = scmp.lt.s32.totalorder %s9, 3
    %p113 = pnand %p111, %p112
    %p114 = pneg %p113
    // Predicated region
    $region9: #{nested_up_forward.5} parent=5 // pred_check
      _
    $region10: #{nested_up_forward.5} parent=5 // pred_check_branch
      %116 = sbr.rel (%p113) target = $region12
    $region11: #{nested_up_forward.5} parent=5 // pred_region
      %s117 = ssub.s32 %s9, 1
      // Predicated region
      $region13: #{nested_up_forward.5} parent=11 // pred_check
        %p118 = pneg %p56
      $region14: #{nested_up_forward.5} parent=11 // pred_check_branch
        %120 = sbr.rel (%p118) target = $region16
      $region15: #{nested_up_forward.5} parent=11 // pred_region
        _
      $region16: #{nested_up_forward.5} parent=11 // pred_fallthru
        _
      // Predicated region
      $region17: #{nested_up_forward.5} parent=11 // pred_check
        %p121 = pneg %p77
      $region18: #{nested_up_forward.5} parent=11 // pred_check_branch
        %123 = sbr.rel (%p121) target = $region20
      $region19: #{nested_up_forward.5} parent=11 // pred_region
        _
      $region20: #{nested_up_forward.5} parent=11 // pred_fallthru
        _
    $region12: #{nested_up_forward.5} parent=5 // pred_fallthru
      _
    %p124 = scmp.lt.s32.totalorder %s9, 2
    // Predicated region
    $region21: #{nested_up_forward.5} parent=5 // pred_check
      %p125 = pneg %p124
    $region22: #{nested_up_forward.5} parent=5 // pred_check_branch
      %127 = sbr.rel (%p125) target = $region24
    $region23: #{nested_up_forward.5} parent=5 // pred_region
      // Predicated region
      $region25: #{nested_up_forward.5} parent=23 // pred_check
        %p128 = pneg %p29
      $region26: #{nested_up_forward.5} parent=23 // pred_check_branch
        %130 = sbr.rel (%p128) target = $region28
      $region27: #{nested_up_forward.5} parent=23 // pred_region
        %p131 = scmp.lt.s32.totalorder %s9, 1
        %s132 = scalar_select %p131, %s9, 1
        %s133 = smul.addr %s132, 32
        %s134 = smul.addr %s133, 8
        %s135 = scalar_lea.vmem %s0, %s134
      $region28: #{nested_up_forward.5} parent=23 // pred_fallthru
        _
    $region24: #{nested_up_forward.5} parent=5 // pred_fallthru
      _
    %p136 = scmp.le.s32.totalorder 1, %s9
    %p137 = scmp.lt.s32.totalorder %s9, 3
    %p138 = pnand %p136, %p137
    %p139 = pneg %p138
    // Predicated region
    $region29: #{nested_up_forward.5} parent=5 // pred_check
      _
    $region30: #{nested_up_forward.5} parent=5 // pred_check_branch
      %141 = sbr.rel (%p138) target = $region32
    $region31: #{nested_up_forward.5} parent=5 // pred_region
      %s142 = ssub.s32 %s9, 1
      %p143 = scmp.lt.s32.totalorder %s14, 1
      %s144 = scalar_select %p143, %s14, 1
      %s145 = smul.addr %s144, 32
      %s146 = smul.addr %s145, 8
      %s147 = scalar_lea.vmem %s0, %s146
      %p148 = pneg %p35
      %p149 = pneg %p32
      %p150 = pneg %p56
      %p151 = pneg %p53
      %p152 = pneg %p77
      %p153 = pneg %p74
      %p154 = pneg %p103
      %p155 = pneg %p100
      %p156 = scmp.lt.s32.totalorder %s14, 1
      %s157 = scalar_select %p156, %s14, 1
      %s158 = smul.addr %s157, 32
      %s159 = smul.addr %s158, 8
      %s160 = scalar_lea.vmem %s3, %s159
      %p161 = scmp.lt.s32.totalorder %s14, 1
      %s162 = scalar_select %p161, %s14, 1
      %s163 = smul.addr %s162, 32
      %s164 = smul.addr %s163, 8
      %s165 = scalar_lea.vmem %s0, %s164
      %p166 = scmp.lt.s32.totalorder %s14, 1
      %s167 = scalar_select %p166, %s14, 1
      %s168 = smul.addr %s167, 32
      %s169 = smul.addr %s168, 8
      %s170 = scalar_lea.vmem %s3, %s169
      %v171 = vld [vmem:[%s165] sm:$0xff]
      %v172 = vld [vmem:[%s165 + $0x8] sm:$0xff]
      %v173 = vld [vmem:[%s165 + $0x10] sm:$0xff]
      %v174 = vld [vmem:[%s165 + $0x18] sm:$0xff]
      %v175 = vld [vmem:[%s165 + $0x20] sm:$0xff]
      %v176 = vld [vmem:[%s165 + $0x28] sm:$0xff]
      %v177 = vld [vmem:[%s165 + $0x30] sm:$0xff]
      %v178 = vld [vmem:[%s165 + $0x38] sm:$0xff]
      %v179 = vld [vmem:[%s165 + $0x40] sm:$0xff]
      %v180 = vld [vmem:[%s165 + $0x48] sm:$0xff]
      %v181 = vld [vmem:[%s165 + $0x50] sm:$0xff]
      %v182 = vld [vmem:[%s165 + $0x58] sm:$0xff]
      %v183 = vld [vmem:[%s165 + $0x60] sm:$0xff]
      %v184 = vld [vmem:[%s165 + $0x68] sm:$0xff]
      %v185 = vld [vmem:[%s165 + $0x70] sm:$0xff]
      %v186 = vld [vmem:[%s165 + $0x78] sm:$0xff]
      %v187 = vld [vmem:[%s165 + $0x80] sm:$0xff]
      %v188 = vld [vmem:[%s165 + $0x88] sm:$0xff]
      %v189 = vld [vmem:[%s165 + $0x90] sm:$0xff]
      %v190 = vld [vmem:[%s165 + $0x98] sm:$0xff]
      %v191 = vld [vmem:[%s165 + $0xa0] sm:$0xff]
      %v192 = vld [vmem:[%s165 + $0xa8] sm:$0xff]
      %v193 = vld [vmem:[%s165 + $0xb0] sm:$0xff]
      %v194 = vld [vmem:[%s165 + $0xb8] sm:$0xff]
      %v195 = vld [vmem:[%s165 + $0xc0] sm:$0xff]
      %v196 = vld [vmem:[%s165 + $0xc8] sm:$0xff]
      %v197 = vld [vmem:[%s165 + $0xd0] sm:$0xff]
      %v198 = vld [vmem:[%s165 + $0xd8] sm:$0xff]
      %v199 = vld [vmem:[%s165 + $0xe0] sm:$0xff]
      %v200 = vld [vmem:[%s165 + $0xe8] sm:$0xff]
      %v201 = vld [vmem:[%s165 + $0xf0] sm:$0xff]
      %v202 = vld [vmem:[%s165 + $0xf8] sm:$0xff]
      %v203 = vld [vmem:[%s1] sm:$0x1]
      %v205 = vperm.slane %v203, 0
      %v207 = vmul.f32 %v171, %v205
      %v208 = vmul.f32 %v172, %v205
      %v209 = vmul.f32 %v173, %v205
      %v210 = vmul.f32 %v174, %v205
      %v211 = vmul.f32 %v175, %v205
      %v212 = vmul.f32 %v176, %v205
      %v213 = vmul.f32 %v177, %v205
      %v214 = vmul.f32 %v178, %v205
      %v215 = vmul.f32 %v179, %v205
      %v216 = vmul.f32 %v180, %v205
      %v217 = vmul.f32 %v181, %v205
      %v218 = vmul.f32 %v182, %v205
      %v219 = vmul.f32 %v183, %v205
      %v220 = vmul.f32 %v184, %v205
      %v221 = vmul.f32 %v185, %v205
      %v222 = vmul.f32 %v186, %v205
      %v223 = vmul.f32 %v187, %v205
      %v224 = vmul.f32 %v188, %v205
      %v225 = vmul.f32 %v189, %v205
      %v226 = vmul.f32 %v190, %v205
      %v227 = vmul.f32 %v191, %v205
      %v228 = vmul.f32 %v192, %v205
      %v229 = vmul.f32 %v193, %v205
      %v230 = vmul.f32 %v194, %v205
      %v231 = vmul.f32 %v195, %v205
      %v232 = vmul.f32 %v196, %v205
      %v233 = vmul.f32 %v197, %v205
      %v234 = vmul.f32 %v198, %v205
      %v235 = vmul.f32 %v199, %v205
      %v236 = vmul.f32 %v200, %v205
      %v237 = vmul.f32 %v201, %v205
      %v238 = vmul.f32 %v202, %v205
      %v239 = vld [vmem:[%s2] sm:$0x1]
      %v241 = vperm.slane %v239, 0
      %v243 = vadd.f32 %v207, %v241
      %v244 = vadd.f32 %v208, %v241
      %v245 = vadd.f32 %v209, %v241
      %v246 = vadd.f32 %v210, %v241
      %v247 = vadd.f32 %v211, %v241
      %v248 = vadd.f32 %v212, %v241
      %v249 = vadd.f32 %v213, %v241
      %v250 = vadd.f32 %v214, %v241
      %v251 = vadd.f32 %v215, %v241
      %v252 = vadd.f32 %v216, %v241
      %v253 = vadd.f32 %v217, %v241
      %v254 = vadd.f32 %v218, %v241
      %v255 = vadd.f32 %v219, %v241
      %v256 = vadd.f32 %v220, %v241
      %v257 = vadd.f32 %v221, %v241
      %v258 = vadd.f32 %v222, %v241
      %v259 = vadd.f32 %v223, %v241
      %v260 = vadd.f32 %v224, %v241
      %v261 = vadd.f32 %v225, %v241
      %v262 = vadd.f32 %v226, %v241
      %v263 = vadd.f32 %v227, %v241
      %v264 = vadd.f32 %v228, %v241
      %v265 = vadd.f32 %v229, %v241
      %v266 = vadd.f32 %v230, %v241
      %v267 = vadd.f32 %v231, %v241
      %v268 = vadd.f32 %v232, %v241
      %v269 = vadd.f32 %v233, %v241
      %v270 = vadd.f32 %v234, %v241
      %v271 = vadd.f32 %v235, %v241
      %v272 = vadd.f32 %v236, %v241
      %v273 = vadd.f32 %v237, %v241
      %v274 = vadd.f32 %v238, %v241
      %v275 = vmax.f32 %v243, 0.0
      %v276 = vmax.f32 %v244, 0.0
      %v277 = vmax.f32 %v245, 0.0
      %v278 = vmax.f32 %v246, 0.0
      %v279 = vmax.f32 %v247, 0.0
      %v280 = vmax.f32 %v248, 0.0
      %v281 = vmax.f32 %v249, 0.0
      %v282 = vmax.f32 %v250, 0.0
      %v283 = vmax.f32 %v251, 0.0
      %v284 = vmax.f32 %v252, 0.0
      %v285 = vmax.f32 %v253, 0.0
      %v286 = vmax.f32 %v254, 0.0
      %v287 = vmax.f32 %v255, 0.0
      %v288 = vmax.f32 %v256, 0.0
      %v289 = vmax.f32 %v257, 0.0
      %v290 = vmax.f32 %v258, 0.0
      %v291 = vmax.f32 %v259, 0.0
      %v292 = vmax.f32 %v260, 0.0
      %v293 = vmax.f32 %v261, 0.0
      %v294 = vmax.f32 %v262, 0.0
      %v295 = vmax.f32 %v263, 0.0
      %v296 = vmax.f32 %v264, 0.0
      %v297 = vmax.f32 %v265, 0.0
      %v298 = vmax.f32 %v266, 0.0
      %v299 = vmax.f32 %v267, 0.0
      %v300 = vmax.f32 %v268, 0.0
      %v301 = vmax.f32 %v269, 0.0
      %v302 = vmax.f32 %v270, 0.0
      %v303 = vmax.f32 %v271, 0.0
      %v304 = vmax.f32 %v272, 0.0
      %v305 = vmax.f32 %v273, 0.0
      %v306 = vmax.f32 %v274, 0.0
      %vm307 = vcmask 64512
      %308 = vst.msk [vmem:[%s170] sm:$0xff] %vm307, %v275
      %309 = vst.msk [vmem:[%s170 + $0x8] sm:$0xff] %vm307, %v276
      %310 = vst.msk [vmem:[%s170 + $0x10] sm:$0xff] %vm307, %v277
      %311 = vst.msk [vmem:[%s170 + $0x18] sm:$0xff] %vm307, %v278
      %312 = vst.msk [vmem:[%s170 + $0x20] sm:$0xff] %vm307, %v279
      %313 = vst.msk [vmem:[%s170 + $0x28] sm:$0xff] %vm307, %v280
      %314 = vst.msk [vmem:[%s170 + $0x30] sm:$0xff] %vm307, %v281
      %315 = vst.msk [vmem:[%s170 + $0x38] sm:$0xff] %vm307, %v282
      %316 = vst.msk [vmem:[%s170 + $0x40] sm:$0xff] %vm307, %v283
      %317 = vst.msk [vmem:[%s170 + $0x48] sm:$0xff] %vm307, %v284
      %318 = vst.msk [vmem:[%s170 + $0x50] sm:$0xff] %vm307, %v285
      %319 = vst.msk [vmem:[%s170 + $0x58] sm:$0xff] %vm307, %v286
      %320 = vst.msk [vmem:[%s170 + $0x60] sm:$0xff] %vm307, %v287
      %321 = vst.msk [vmem:[%s170 + $0x68] sm:$0xff] %vm307, %v288
      %322 = vst.msk [vmem:[%s170 + $0x70] sm:$0xff] %vm307, %v289
      %323 = vst.msk [vmem:[%s170 + $0x78] sm:$0xff] %vm307, %v290
      %324 = vst.msk [vmem:[%s170 + $0x80] sm:$0xff] %vm307, %v291
      %325 = vst.msk [vmem:[%s170 + $0x88] sm:$0xff] %vm307, %v292
      %326 = vst.msk [vmem:[%s170 + $0x90] sm:$0xff] %vm307, %v293
      %327 = vst.msk [vmem:[%s170 + $0x98] sm:$0xff] %vm307, %v294
      %328 = vst.msk [vmem:[%s170 + $0xa0] sm:$0xff] %vm307, %v295
      %329 = vst.msk [vmem:[%s170 + $0xa8] sm:$0xff] %vm307, %v296
      %330 = vst.msk [vmem:[%s170 + $0xb0] sm:$0xff] %vm307, %v297
      %331 = vst.msk [vmem:[%s170 + $0xb8] sm:$0xff] %vm307, %v298
      %332 = vst.msk [vmem:[%s170 + $0xc0] sm:$0xff] %vm307, %v299
      %333 = vst.msk [vmem:[%s170 + $0xc8] sm:$0xff] %vm307, %v300
      %334 = vst.msk [vmem:[%s170 + $0xd0] sm:$0xff] %vm307, %v301
      %335 = vst.msk [vmem:[%s170 + $0xd8] sm:$0xff] %vm307, %v302
      %336 = vst.msk [vmem:[%s170 + $0xe0] sm:$0xff] %vm307, %v303
      %337 = vst.msk [vmem:[%s170 + $0xe8] sm:$0xff] %vm307, %v304
      %338 = vst.msk [vmem:[%s170 + $0xf0] sm:$0xff] %vm307, %v305
      %339 = vst.msk [vmem:[%s170 + $0xf8] sm:$0xff] %vm307, %v306
      %p340 = scmp.lt.s32.totalorder %s14, 1
      %s341 = scalar_select %p340, %s14, 1
      %s342 = smul.addr %s341, 32
      %s343 = smul.addr %s342, 8
      %s344 = scalar_lea.vmem %s3, %s343
      // Predicated region
      $region33: #{nested_up_forward.5} parent=31 // pred_check
        %p345 = pneg %p100
      $region34: #{nested_up_forward.5} parent=31 // pred_check_branch
        %347 = sbr.rel (%p345) target = $region36
      $region35: #{nested_up_forward.5} parent=31 // pred_region
        _
      $region36: #{nested_up_forward.5} parent=31 // pred_fallthru
        _
    $region32: #{nested_up_forward.5} parent=5 // pred_fallthru
      _
    %p348 = scmp.le.s32.totalorder 2, %s9
    // Predicated region
    $region37: #{nested_up_forward.5} parent=5 // pred_check
      %p349 = pneg %p348
    $region38: #{nested_up_forward.5} parent=5 // pred_check_branch
      %351 = sbr.rel (%p349) target = $region40
    $region39: #{nested_up_forward.5} parent=5 // pred_region
      %s352 = ssub.s32 %s9, 2
      // Predicated region
      $region41: #{nested_up_forward.5} parent=39 // pred_check
        %p353 = pneg %p106
      $region42: #{nested_up_forward.5} parent=39 // pred_check_branch
        %355 = sbr.rel (%p353) target = $region44
      $region43: #{nested_up_forward.5} parent=39 // pred_region
        %p356 = scmp.lt.s32.totalorder %s15, 1
        %s357 = scalar_select %p356, %s15, 1
        %s358 = smul.addr %s357, 32
        %s359 = smul.addr %s358, 8
        %s360 = scalar_lea.vmem %s3, %s359
      $region44: #{nested_up_forward.5} parent=39 // pred_fallthru
        _
    $region40: #{nested_up_forward.5} parent=5 // pred_fallthru
      _
  $region6: #{nested_up_forward.5} parent=0 // loop_footer
    %s13 = sadd.s32 1, %s9
  $region7: #{nested_up_forward.5} parent=0 // loop_footer_branch
    %8 = sbr.rel target = $region3
  $region8: #{nested_up_forward.5} parent=0 // loop_exit
    _

// kernel: nested_up_forward.4
$region0: #{nested_up_forward.4}
  #allocation0 [shape = 'u32[]', space=smem, size = 0x4, offset = 0x4, fixed_abs, tag = 'smem constant byte address 0x4 - core index']
  #allocation1 [shape = 'u32[72,128]{1,0:T(1,128)}', space=vmem, size = 0x9000, scoped, tag = 'internal scratch']
  #allocation2 [shape = 'f32[18,18,8]{2,1,0:T(8,128)}', space=vmem, size = 0x36000, scoped, tag = 'scratch operand']
  %s0 = inlined_call_operand.vmem [shape: f32[2,256,8], index: 0, kind: input, shape index: {}]
  %s1 = inlined_call_operand.vmem [shape: f32[1,8], index: 1, kind: input, shape index: {}]
  %s2 = inlined_call_operand.vmem [shape: f32[1,8], index: 2, kind: input, shape index: {}]
  %s3 = inlined_call_operand.vmem [shape: f32[72,8], index: 3, kind: input, shape index: {}]
  %s4 = inlined_call_operand.vmem [shape: f32[1,8], index: 4, kind: input, shape index: {}]
  %s5 = inlined_call_operand.vmem [shape: f32[2,256,8], index: 5, kind: output, shape index: {0}]
  %s6 = inlined_call_operand.vmem [shape: f32[2,1,8], index: 6, kind: output, shape index: {1}]
  %s7 = inlined_call_operand.vmem [shape: f32[2,1,8], index: 7, kind: output, shape index: {2}]
  %8 = xla_tuple %s5, %s6, %s7
  %s9 = sld [smem:[#allocation0]]
  $region69: #{nested_up_forward.4} parent=0
    _
  %s11 = ssub.s32 1, %s9
  %s12 = scalar_select 0, %s11, %s9
  loop: start=0, step=1, limit=4
  $region2: #{nested_up_forward.4} parent=0 // loop_pre_header
    _
  $region3: #{nested_up_forward.4} parent=0 // loop_header
    %s14 = sphi 0, %s18
    %p15 = scmp.ge.s32.totalorder %s14, 4
    %s24 = sphi 0, %s26
    %s27 = sphi 0, %s24
    %s28 = sphi 0, %s27
    %s44 = sphi 0, %s28
    %s48 = sphi 0, %s48
    %s50 = sphi 0, %s48
    %s51 = sphi 0, %s50
    %s65 = sphi 0, %s51
    %s69 = sphi 0, %s69
    %s71 = sphi 0, %s69
    %s72 = sphi 0, %s71
    %s86 = sphi 0, %s72
    %s90 = sphi 0, %s90
    %s92 = sphi 0, %s90
    %s93 = sphi 0, %s92
    %s107 = sphi 0, %s93
    %s111 = sphi 0, %s111
    %s113 = sphi 0, %s111
    %s114 = sphi 0, %s113
    %s128 = sphi 0, %s114
    %s134 = sphi 0, %s136
    %s137 = sphi 0, %s134
    %s138 = sphi 0, %s137
    %s154 = sphi 0, %s138
    %s160 = sphi 0, %s162
    %s163 = sphi 0, %s160
    %s164 = sphi 0, %s163
    %s180 = sphi 0, %s164
    %s186 = sphi 0, %s188
    %s189 = sphi 0, %s186
    %s190 = sphi 0, %s189
    %s206 = sphi 0, %s190
  $region4: #{nested_up_forward.4} parent=0 // loop_header_branch
    %17 = sbr.rel (%p15) target = $region8
  $region5: #{nested_up_forward.4} parent=0 // loop_body
    %s19 = ssub.s32 %s14, 1
    %s20 = ssub.s32 %s14, 2
    %s21 = sadd.s32 %s14, 1
    %s22 = ssub.s32 %s14, %s21
    %p23 = scmp.eq.s32.totalorder %s22, 0
    %s25 = sadd.s32 %s24, 1
    %s26 = scalar_select %p23, %s24, %s25
    %p29 = pneg %p23
    %p30 = scmp.eq.s32.totalorder %s14, 1
    %p31 = por %p29, %p30
    %p32 = scmp.ne.s32.totalorder %s24, %s27
    %p33 = scmp.eq.s32.totalorder %s14, 0
    %p34 = por %p32, %p33
    %p35 = scmp.ne.s32.totalorder %s24, %s27
    %p36 = scmp.eq.s32.totalorder %s19, 1
    %p37 = por %p35, %p36
    %p38 = scmp.ne.s32.totalorder %s27, %s28
    %p39 = scmp.eq.s32.totalorder %s19, 0
    %p40 = por %p38, %p39
    %p41 = scmp.ne.s32.totalorder %s27, %s28
    %p42 = scmp.eq.s32.totalorder %s20, 1
    %p43 = por %p41, %p42
    %p45 = scmp.ne.s32.totalorder %s28, %s44
    %p46 = scmp.eq.s32.totalorder %s20, 0
    %p47 = por %p45, %p46
    %s49 = sadd.s32 %s48, 1
    %p52 = scmp.eq.s32.totalorder %s14, 1
    %p53 = scmp.ne.s32.totalorder %s48, %s50
    %p54 = scmp.eq.s32.totalorder %s14, 0
    %p55 = por %p53, %p54
    %p56 = scmp.ne.s32.totalorder %s48, %s50
    %p57 = scmp.eq.s32.totalorder %s19, 1
    %p58 = por %p56, %p57
    %p59 = scmp.ne.s32.totalorder %s50, %s51
    %p60 = scmp.eq.s32.totalorder %s19, 0
    %p61 = por %p59, %p60
    %p62 = scmp.ne.s32.totalorder %s50, %s51
    %p63 = scmp.eq.s32.totalorder %s20, 1
    %p64 = por %p62, %p63
    %p66 = scmp.ne.s32.totalorder %s51, %s65
    %p67 = scmp.eq.s32.totalorder %s20, 0
    %p68 = por %p66, %p67
    %s70 = sadd.s32 %s69, 1
    %p73 = scmp.eq.s32.totalorder %s14, 1
    %p74 = scmp.ne.s32.totalorder %s69, %s71
    %p75 = scmp.eq.s32.totalorder %s14, 0
    %p76 = por %p74, %p75
    %p77 = scmp.ne.s32.totalorder %s69, %s71
    %p78 = scmp.eq.s32.totalorder %s19, 1
    %p79 = por %p77, %p78
    %p80 = scmp.ne.s32.totalorder %s71, %s72
    %p81 = scmp.eq.s32.totalorder %s19, 0
    %p82 = por %p80, %p81
    %p83 = scmp.ne.s32.totalorder %s71, %s72
    %p84 = scmp.eq.s32.totalorder %s20, 1
    %p85 = por %p83, %p84
    %p87 = scmp.ne.s32.totalorder %s72, %s86
    %p88 = scmp.eq.s32.totalorder %s20, 0
    %p89 = por %p87, %p88
    %s91 = sadd.s32 %s90, 1
    %p94 = scmp.eq.s32.totalorder %s14, 1
    %p95 = scmp.ne.s32.totalorder %s90, %s92
    %p96 = scmp.eq.s32.totalorder %s14, 0
    %p97 = por %p95, %p96
    %p98 = scmp.ne.s32.totalorder %s90, %s92
    %p99 = scmp.eq.s32.totalorder %s19, 1
    %p100 = por %p98, %p99
    %p101 = scmp.ne.s32.totalorder %s92, %s93
    %p102 = scmp.eq.s32.totalorder %s19, 0
    %p103 = por %p101, %p102
    %p104 = scmp.ne.s32.totalorder %s92, %s93
    %p105 = scmp.eq.s32.totalorder %s20, 1
    %p106 = por %p104, %p105
    %p108 = scmp.ne.s32.totalorder %s93, %s107
    %p109 = scmp.eq.s32.totalorder %s20, 0
    %p110 = por %p108, %p109
    %s112 = sadd.s32 %s111, 1
    %p115 = scmp.eq.s32.totalorder %s14, 1
    %p116 = scmp.ne.s32.totalorder %s111, %s113
    %p117 = scmp.eq.s32.totalorder %s14, 0
    %p118 = por %p116, %p117
    %p119 = scmp.ne.s32.totalorder %s111, %s113
    %p120 = scmp.eq.s32.totalorder %s19, 1
    %p121 = por %p119, %p120
    %p122 = scmp.ne.s32.totalorder %s113, %s114
    %p123 = scmp.eq.s32.totalorder %s19, 0
    %p124 = por %p122, %p123
    %p125 = scmp.ne.s32.totalorder %s113, %s114
    %p126 = scmp.eq.s32.totalorder %s20, 1
    %p127 = por %p125, %p126
    %p129 = scmp.ne.s32.totalorder %s114, %s128
    %p130 = scmp.eq.s32.totalorder %s20, 0
    %p131 = por %p129, %p130
    %s132 = ssub.s32 %s14, %s21
    %p133 = scmp.eq.s32.totalorder %s132, 0
    %s135 = sadd.s32 %s134, 1
    %s136 = scalar_select %p133, %s134, %s135
    %p139 = pneg %p133
    %p140 = scmp.eq.s32.totalorder %s14, 1
    %p141 = por %p139, %p140
    %p142 = scmp.ne.s32.totalorder %s134, %s137
    %p143 = scmp.eq.s32.totalorder %s14, 0
    %p144 = por %p142, %p143
    %p145 = scmp.ne.s32.totalorder %s134, %s137
    %p146 = scmp.eq.s32.totalorder %s19, 1
    %p147 = por %p145, %p146
    %p148 = scmp.ne.s32.totalorder %s137, %s138
    %p149 = scmp.eq.s32.totalorder %s19, 0
    %p150 = por %p148, %p149
    %p151 = scmp.ne.s32.totalorder %s137, %s138
    %p152 = scmp.eq.s32.totalorder %s20, 1
    %p153 = por %p151, %p152
    %p155 = scmp.ne.s32.totalorder %s138, %s154
    %p156 = scmp.eq.s32.totalorder %s20, 0
    %p157 = por %p155, %p156
    %s158 = ssub.s32 %s14, %s21
    %p159 = scmp.eq.s32.totalorder %s158, 0
    %s161 = sadd.s32 %s160, 1
    %s162 = scalar_select %p159, %s160, %s161
    %p165 = pneg %p159
    %p166 = scmp.eq.s32.totalorder %s14, 1
    %p167 = por %p165, %p166
    %p168 = scmp.ne.s32.totalorder %s160, %s163
    %p169 = scmp.eq.s32.totalorder %s14, 0
    %p170 = por %p168, %p169
    %p171 = scmp.ne.s32.totalorder %s160, %s163
    %p172 = scmp.eq.s32.totalorder %s19, 1
    %p173 = por %p171, %p172
    %p174 = scmp.ne.s32.totalorder %s163, %s164
    %p175 = scmp.eq.s32.totalorder %s19, 0
    %p176 = por %p174, %p175
    %p177 = scmp.ne.s32.totalorder %s163, %s164
    %p178 = scmp.eq.s32.totalorder %s20, 1
    %p179 = por %p177, %p178
    %p181 = scmp.ne.s32.totalorder %s164, %s180
    %p182 = scmp.eq.s32.totalorder %s20, 0
    %p183 = por %p181, %p182
    %s184 = ssub.s32 %s14, %s21
    %p185 = scmp.eq.s32.totalorder %s184, 0
    %s187 = sadd.s32 %s186, 1
    %s188 = scalar_select %p185, %s186, %s187
    %p191 = pneg %p185
    %p192 = scmp.eq.s32.totalorder %s14, 1
    %p193 = por %p191, %p192
    %p194 = scmp.ne.s32.totalorder %s186, %s189
    %p195 = scmp.eq.s32.totalorder %s14, 0
    %p196 = por %p194, %p195
    %p197 = scmp.ne.s32.totalorder %s186, %s189
    %p198 = scmp.eq.s32.totalorder %s19, 1
    %p199 = por %p197, %p198
    %p200 = scmp.ne.s32.totalorder %s189, %s190
    %p201 = scmp.eq.s32.totalorder %s19, 0
    %p202 = por %p200, %p201
    %p203 = scmp.ne.s32.totalorder %s189, %s190
    %p204 = scmp.eq.s32.totalorder %s20, 1
    %p205 = por %p203, %p204
    %p207 = scmp.ne.s32.totalorder %s190, %s206
    %p208 = scmp.eq.s32.totalorder %s20, 0
    %p209 = por %p207, %p208
    %p210 = scmp.le.s32.totalorder 1, %s14
    %p211 = scmp.lt.s32.totalorder %s14, 3
    %p212 = pnand %p210, %p211
    %p213 = pneg %p212
    // Predicated region
    $region9: #{nested_up_forward.4} parent=5 // pred_check
      _
    $region10: #{nested_up_forward.4} parent=5 // pred_check_branch
      %215 = sbr.rel (%p212) target = $region12
    $region11: #{nested_up_forward.4} parent=5 // pred_region
      %s216 = ssub.s32 %s14, 1
      // Predicated region
      $region13: #{nested_up_forward.4} parent=11 // pred_check
        %p217 = pneg %p61
      $region14: #{nested_up_forward.4} parent=11 // pred_check_branch
        %219 = sbr.rel (%p217) target = $region16
      $region15: #{nested_up_forward.4} parent=11 // pred_region
        _
      $region16: #{nested_up_forward.4} parent=11 // pred_fallthru
        _
      // Predicated region
      $region17: #{nested_up_forward.4} parent=11 // pred_check
        %p220 = pneg %p82
      $region18: #{nested_up_forward.4} parent=11 // pred_check_branch
        %222 = sbr.rel (%p220) target = $region20
      $region19: #{nested_up_forward.4} parent=11 // pred_region
        _
      $region20: #{nested_up_forward.4} parent=11 // pred_fallthru
        _
      // Predicated region
      $region21: #{nested_up_forward.4} parent=11 // pred_check
        %p223 = pneg %p103
      $region22: #{nested_up_forward.4} parent=11 // pred_check_branch
        %225 = sbr.rel (%p223) target = $region24
      $region23: #{nested_up_forward.4} parent=11 // pred_region
        _
      $region24: #{nested_up_forward.4} parent=11 // pred_fallthru
        _
      // Predicated region
      $region25: #{nested_up_forward.4} parent=11 // pred_check
        %p226 = pneg %p124
      $region26: #{nested_up_forward.4} parent=11 // pred_check_branch
        %228 = sbr.rel (%p226) target = $region28
      $region27: #{nested_up_forward.4} parent=11 // pred_region
        _
      $region28: #{nested_up_forward.4} parent=11 // pred_fallthru
        _
    $region12: #{nested_up_forward.4} parent=5 // pred_fallthru
      _
    %p229 = scmp.lt.s32.totalorder %s14, 2
    // Predicated region
    $region29: #{nested_up_forward.4} parent=5 // pred_check
      %p230 = pneg %p229
    $region30: #{nested_up_forward.4} parent=5 // pred_check_branch
      %232 = sbr.rel (%p230) target = $region32
    $region31: #{nested_up_forward.4} parent=5 // pred_region
      // Predicated region
      $region33: #{nested_up_forward.4} parent=31 // pred_check
        %p233 = pneg %p34
      $region34: #{nested_up_forward.4} parent=31 // pred_check_branch
        %235 = sbr.rel (%p233) target = $region36
      $region35: #{nested_up_forward.4} parent=31 // pred_region
        %p236 = scmp.lt.s32.totalorder %s14, 1
        %s237 = scalar_select %p236, %s14, 1
        %s238 = smul.addr %s237, 32
        %s239 = smul.addr %s238, 8
        %s240 = scalar_lea.vmem %s0, %s239
      $region36: #{nested_up_forward.4} parent=31 // pred_fallthru
        _
    $region32: #{nested_up_forward.4} parent=5 // pred_fallthru
      _
    %p241 = scmp.le.s32.totalorder 1, %s14
    %p242 = scmp.lt.s32.totalorder %s14, 3
    %p243 = pnand %p241, %p242
    %p244 = pneg %p243
    // Predicated region
    $region37: #{nested_up_forward.4} parent=5 // pred_check
      _
    $region38: #{nested_up_forward.4} parent=5 // pred_check_branch
      %246 = sbr.rel (%p243) target = $region40
    $region39: #{nested_up_forward.4} parent=5 // pred_region
      %s247 = ssub.s32 %s14, 1
      %p248 = scmp.lt.s32.totalorder %s19, 1
      %s249 = scalar_select %p248, %s19, 1
      %s250 = smul.addr %s249, 32
      %s251 = smul.addr %s250, 8
      %s252 = scalar_lea.vmem %s0, %s251
      %p253 = pneg %p40
      %p254 = pneg %p37
      %p255 = pneg %p61
      %p256 = pneg %p58
      %p257 = pneg %p82
      %p258 = pneg %p79
      %p259 = pneg %p103
      %p260 = pneg %p100
      %p261 = pneg %p124
      %p262 = pneg %p121
      %p263 = pneg %p150
      %p264 = pneg %p147
      %p265 = scmp.lt.s32.totalorder %s19, 1
      %s266 = scalar_select %p265, %s19, 1
      %s267 = smul.addr %s266, 32
      %s268 = smul.addr %s267, 8
      %s269 = scalar_lea.vmem %s5, %s268
      %p270 = pneg %p176
      %p271 = pneg %p173
      %p272 = scmp.lt.s32.totalorder %s19, 1
      %s273 = scalar_select %p272, %s19, 1
      %s274 = scalar_lea.vmem %s6, %s273
      %p275 = pneg %p202
      %p276 = pneg %p199
      %p277 = scmp.lt.s32.totalorder %s19, 1
      %s278 = scalar_select %p277, %s19, 1
      %s279 = scalar_lea.vmem %s7, %s278
      %p280 = scmp.lt.s32.totalorder %s19, 1
      %s281 = scalar_select %p280, %s19, 1
      %s282 = smul.addr %s281, 32
      %s283 = smul.addr %s282, 8
      %s284 = scalar_lea.vmem %s0, %s283
      %p285 = scmp.lt.s32.totalorder %s19, 1
      %s286 = scalar_select %p285, %s19, 1
      %s287 = smul.addr %s286, 32
      %s288 = smul.addr %s287, 8
      %s289 = scalar_lea.vmem %s5, %s288
      %p290 = scmp.lt.s32.totalorder %s19, 1
      %s291 = scalar_select %p290, %s19, 1
      %s292 = scalar_lea.vmem %s6, %s291
      %p293 = scmp.lt.s32.totalorder %s19, 1
      %s294 = scalar_select %p293, %s19, 1
      %s295 = scalar_lea.vmem %s7, %s294
      %vm296 = vcmask 64512
      %297 = vst.msk [vmem:[#allocation2] sm:$0xff] %vm296, 0.0
      %298 = vst.msk [vmem:[#allocation2 + $0x8] sm:$0xff] %vm296, 0.0
      %vm299 = vcmask 58368
      %300 = vst.msk [vmem:[#allocation2 + $0x10] sm:$0x3] %vm299, 0.0
      %301 = vst.msk [vmem:[#allocation2 + $0x18] sm:$0xff] %vm296, 0.0
      %302 = vst.msk [vmem:[#allocation2 + $0x20] sm:$0xff] %vm296, 0.0
      %303 = vst.msk [vmem:[#allocation2 + $0x28] sm:$0x3] %vm299, 0.0
      %304 = vst.msk [vmem:[#allocation2 + $0x30] sm:$0xff] %vm296, 0.0
      %305 = vst.msk [vmem:[#allocation2 + $0x38] sm:$0xff] %vm296, 0.0
      %306 = vst.msk [vmem:[#allocation2 + $0x40] sm:$0x3] %vm299, 0.0
      %307 = vst.msk [vmem:[#allocation2 + $0x48] sm:$0xff] %vm296, 0.0
      %308 = vst.msk [vmem:[#allocation2 + $0x50] sm:$0xff] %vm296, 0.0
      %309 = vst.msk [vmem:[#allocation2 + $0x58] sm:$0x3] %vm299, 0.0
      %310 = vst.msk [vmem:[#allocation2 + $0x60] sm:$0xff] %vm296, 0.0
      %311 = vst.msk [vmem:[#allocation2 + $0x68] sm:$0xff] %vm296, 0.0
      %312 = vst.msk [vmem:[#allocation2 + $0x70] sm:$0x3] %vm299, 0.0
      %313 = vst.msk [vmem:[#allocation2 + $0x78] sm:$0xff] %vm296, 0.0
      %314 = vst.msk [vmem:[#allocation2 + $0x80] sm:$0xff] %vm296, 0.0
      %315 = vst.msk [vmem:[#allocation2 + $0x88] sm:$0x3] %vm299, 0.0
      %316 = vst.msk [vmem:[#allocation2 + $0x90] sm:$0xff] %vm296, 0.0
      %317 = vst.msk [vmem:[#allocation2 + $0x98] sm:$0xff] %vm296, 0.0
      %318 = vst.msk [vmem:[#allocation2 + $0xa0] sm:$0x3] %vm299, 0.0
      %319 = vst.msk [vmem:[#allocation2 + $0xa8] sm:$0xff] %vm296, 0.0
      %320 = vst.msk [vmem:[#allocation2 + $0xb0] sm:$0xff] %vm296, 0.0
      %321 = vst.msk [vmem:[#allocation2 + $0xb8] sm:$0x3] %vm299, 0.0
      %322 = vst.msk [vmem:[#allocation2 + $0xc0] sm:$0xff] %vm296, 0.0
      %323 = vst.msk [vmem:[#allocation2 + $0xc8] sm:$0xff] %vm296, 0.0
      %324 = vst.msk [vmem:[#allocation2 + $0xd0] sm:$0x3] %vm299, 0.0
      %325 = vst.msk [vmem:[#allocation2 + $0xd8] sm:$0xff] %vm296, 0.0
      %326 = vst.msk [vmem:[#allocation2 + $0xe0] sm:$0xff] %vm296, 0.0
      %327 = vst.msk [vmem:[#allocation2 + $0xe8] sm:$0x3] %vm299, 0.0
      %328 = vst.msk [vmem:[#allocation2 + $0xf0] sm:$0xff] %vm296, 0.0
      %329 = vst.msk [vmem:[#allocation2 + $0xf8] sm:$0xff] %vm296, 0.0
      %330 = vst.msk [vmem:[#allocation2 + $0x100] sm:$0x3] %vm299, 0.0
      %331 = vst.msk [vmem:[#allocation2 + $0x108] sm:$0xff] %vm296, 0.0
      %332 = vst.msk [vmem:[#allocation2 + $0x110] sm:$0xff] %vm296, 0.0
      %333 = vst.msk [vmem:[#allocation2 + $0x118] sm:$0x3] %vm299, 0.0
      %334 = vst.msk [vmem:[#allocation2 + $0x120] sm:$0xff] %vm296, 0.0
      %335 = vst.msk [vmem:[#allocation2 + $0x128] sm:$0xff] %vm296, 0.0
      %336 = vst.msk [vmem:[#allocation2 + $0x130] sm:$0x3] %vm299, 0.0
      %337 = vst.msk [vmem:[#allocation2 + $0x138] sm:$0xff] %vm296, 0.0
      %338 = vst.msk [vmem:[#allocation2 + $0x140] sm:$0xff] %vm296, 0.0
      %339 = vst.msk [vmem:[#allocation2 + $0x148] sm:$0x3] %vm299, 0.0
      %340 = vst.msk [vmem:[#allocation2 + $0x150] sm:$0xff] %vm296, 0.0
      %341 = vst.msk [vmem:[#allocation2 + $0x158] sm:$0xff] %vm296, 0.0
      %342 = vst.msk [vmem:[#allocation2 + $0x160] sm:$0x3] %vm299, 0.0
      %343 = vst.msk [vmem:[#allocation2 + $0x168] sm:$0xff] %vm296, 0.0
      %344 = vst.msk [vmem:[#allocation2 + $0x170] sm:$0xff] %vm296, 0.0
      %345 = vst.msk [vmem:[#allocation2 + $0x178] sm:$0x3] %vm299, 0.0
      %346 = vst.msk [vmem:[#allocation2 + $0x180] sm:$0xff] %vm296, 0.0
      %347 = vst.msk [vmem:[#allocation2 + $0x188] sm:$0xff] %vm296, 0.0
      %348 = vst.msk [vmem:[#allocation2 + $0x190] sm:$0x3] %vm299, 0.0
      %349 = vst.msk [vmem:[#allocation2 + $0x198] sm:$0xff] %vm296, 0.0
      %350 = vst.msk [vmem:[#allocation2 + $0x1a0] sm:$0xff] %vm296, 0.0
      %351 = vst.msk [vmem:[#allocation2 + $0x1a8] sm:$0x3] %vm299, 0.0
      %v352 = vld [vmem:[%s284] sm:$0xff]
      %v353 = vld [vmem:[%s284 + $0x8] sm:$0xff]
      %v354 = vld [vmem:[%s284 + $0x10] sm:$0xff]
      %v355 = vld [vmem:[%s284 + $0x18] sm:$0xff]
      %v356 = vld [vmem:[%s284 + $0x20] sm:$0xff]
      %v357 = vld [vmem:[%s284 + $0x28] sm:$0xff]
      %v358 = vld [vmem:[%s284 + $0x30] sm:$0xff]
      %v359 = vld [vmem:[%s284 + $0x38] sm:$0xff]
      %v360 = vld [vmem:[%s284 + $0x40] sm:$0xff]
      %v361 = vld [vmem:[%s284 + $0x48] sm:$0xff]
      %v362 = vld [vmem:[%s284 + $0x50] sm:$0xff]
      %v363 = vld [vmem:[%s284 + $0x58] sm:$0xff]
      %v364 = vld [vmem:[%s284 + $0x60] sm:$0xff]
      %v365 = vld [vmem:[%s284 + $0x68] sm:$0xff]
      %v366 = vld [vmem:[%s284 + $0x70] sm:$0xff]
      %v367 = vld [vmem:[%s284 + $0x78] sm:$0xff]
      %v368 = vld [vmem:[%s284 + $0x80] sm:$0xff]
      %v369 = vld [vmem:[%s284 + $0x88] sm:$0xff]
      %v370 = vld [vmem:[%s284 + $0x90] sm:$0xff]
      %v371 = vld [vmem:[%s284 + $0x98] sm:$0xff]
      %v372 = vld [vmem:[%s284 + $0xa0] sm:$0xff]
      %v373 = vld [vmem:[%s284 + $0xa8] sm:$0xff]
      %v374 = vld [vmem:[%s284 + $0xb0] sm:$0xff]
      %v375 = vld [vmem:[%s284 + $0xb8] sm:$0xff]
      %v376 = vld [vmem:[%s284 + $0xc0] sm:$0xff]
      %v377 = vld [vmem:[%s284 + $0xc8] sm:$0xff]
      %v378 = vld [vmem:[%s284 + $0xd0] sm:$0xff]
      %v379 = vld [vmem:[%s284 + $0xd8] sm:$0xff]
      %v380 = vld [vmem:[%s284 + $0xe0] sm:$0xff]
      %v381 = vld [vmem:[%s284 + $0xe8] sm:$0xff]
      %v382 = vld [vmem:[%s284 + $0xf0] sm:$0xff]
      %v383 = vld [vmem:[%s284 + $0xf8] sm:$0xff]
      %v384 = vld [vmem:[%s1] sm:$0x1]
      %v386 = vperm.slane %v384, 0
      %v388 = vmul.f32 %v352, %v386
      %v389 = vmul.f32 %v353, %v386
      %v390 = vmul.f32 %v354, %v386
      %v391 = vmul.f32 %v355, %v386
      %v392 = vmul.f32 %v356, %v386
      %v393 = vmul.f32 %v357, %v386
      %v394 = vmul.f32 %v358, %v386
      %v395 = vmul.f32 %v359, %v386
      %v396 = vmul.f32 %v360, %v386
      %v397 = vmul.f32 %v361, %v386
      %v398 = vmul.f32 %v362, %v386
      %v399 = vmul.f32 %v363, %v386
      %v400 = vmul.f32 %v364, %v386
      %v401 = vmul.f32 %v365, %v386
      %v402 = vmul.f32 %v366, %v386
      %v403 = vmul.f32 %v367, %v386
      %v404 = vmul.f32 %v368, %v386
      %v405 = vmul.f32 %v369, %v386
      %v406 = vmul.f32 %v370, %v386
      %v407 = vmul.f32 %v371, %v386
      %v408 = vmul.f32 %v372, %v386
      %v409 = vmul.f32 %v373, %v386
      %v410 = vmul.f32 %v374, %v386
      %v411 = vmul.f32 %v375, %v386
      %v412 = vmul.f32 %v376, %v386
      %v413 = vmul.f32 %v377, %v386
      %v414 = vmul.f32 %v378, %v386
      %v415 = vmul.f32 %v379, %v386
      %v416 = vmul.f32 %v380, %v386
      %v417 = vmul.f32 %v381, %v386
      %v418 = vmul.f32 %v382, %v386
      %v419 = vmul.f32 %v383, %v386
      %v420 = vld [vmem:[%s2] sm:$0x1]
      %v422 = vperm.slane %v420, 0
      %v424 = vadd.f32 %v388, %v422
      %v425 = vadd.f32 %v389, %v422
      %v426 = vadd.f32 %v390, %v422
      %v427 = vadd.f32 %v391, %v422
      %v428 = vadd.f32 %v392, %v422
      %v429 = vadd.f32 %v393, %v422
      %v430 = vadd.f32 %v394, %v422
      %v431 = vadd.f32 %v395, %v422
      %v432 = vadd.f32 %v396, %v422
      %v433 = vadd.f32 %v397, %v422
      %v434 = vadd.f32 %v398, %v422
      %v435 = vadd.f32 %v399, %v422
      %v436 = vadd.f32 %v400, %v422
      %v437 = vadd.f32 %v401, %v422
      %v438 = vadd.f32 %v402, %v422
      %v439 = vadd.f32 %v403, %v422
      %v440 = vadd.f32 %v404, %v422
      %v441 = vadd.f32 %v405, %v422
      %v442 = vadd.f32 %v406, %v422
      %v443 = vadd.f32 %v407, %v422
      %v444 = vadd.f32 %v408, %v422
      %v445 = vadd.f32 %v409, %v422
      %v446 = vadd.f32 %v410, %v422
      %v447 = vadd.f32 %v411, %v422
      %v448 = vadd.f32 %v412, %v422
      %v449 = vadd.f32 %v413, %v422
      %v450 = vadd.f32 %v414, %v422
      %v451 = vadd.f32 %v415, %v422
      %v452 = vadd.f32 %v416, %v422
      %v453 = vadd.f32 %v417, %v422
      %v454 = vadd.f32 %v418, %v422
      %v455 = vadd.f32 %v419, %v422
      %v456 = vmax.f32 %v424, 0.0
      %v457 = vmax.f32 %v425, 0.0
      %v458 = vmax.f32 %v426, 0.0
      %v459 = vmax.f32 %v427, 0.0
      %v460 = vmax.f32 %v428, 0.0
      %v461 = vmax.f32 %v429, 0.0
      %v462 = vmax.f32 %v430, 0.0
      %v463 = vmax.f32 %v431, 0.0
      %v464 = vmax.f32 %v432, 0.0
      %v465 = vmax.f32 %v433, 0.0
      %v466 = vmax.f32 %v434, 0.0
      %v467 = vmax.f32 %v435, 0.0
      %v468 = vmax.f32 %v436, 0.0
      %v469 = vmax.f32 %v437, 0.0
      %v470 = vmax.f32 %v438, 0.0
      %v471 = vmax.f32 %v439, 0.0
      %v472 = vmax.f32 %v440, 0.0
      %v473 = vmax.f32 %v441, 0.0
      %v474 = vmax.f32 %v442, 0.0
      %v475 = vmax.f32 %v443, 0.0
      %v476 = vmax.f32 %v444, 0.0
      %v477 = vmax.f32 %v445, 0.0
      %v478 = vmax.f32 %v446, 0.0
      %v479 = vmax.f32 %v447, 0.0
      %v480 = vmax.f32 %v448, 0.0
      %v481 = vmax.f32 %v449, 0.0
      %v482 = vmax.f32 %v450, 0.0
      %v483 = vmax.f32 %v451, 0.0
      %v484 = vmax.f32 %v452, 0.0
      %v485 = vmax.f32 %v453, 0.0
      %v486 = vmax.f32 %v454, 0.0
      %v487 = vmax.f32 %v455, 0.0
      %s488 = scalar_lea.vmem [#allocation2], 24
      %489 = vst.msk [vmem:[%s488 + $0x1] sm:$0xff] %vm296, %v456
      %490 = vst.msk [vmem:[%s488 + $0x9] sm:$0xff] %vm296, %v457
      %491 = vst.msk [vmem:[%s488 + $0x19] sm:$0xff] %vm296, %v458
      %492 = vst.msk [vmem:[%s488 + $0x21] sm:$0xff] %vm296, %v459
      %493 = vst.msk [vmem:[%s488 + $0x31] sm:$0xff] %vm296, %v460
      %494 = vst.msk [vmem:[%s488 + $0x39] sm:$0xff] %vm296, %v461
      %495 = vst.msk [vmem:[%s488 + $0x49] sm:$0xff] %vm296, %v462
      %496 = vst.msk [vmem:[%s488 + $0x51] sm:$0xff] %vm296, %v463
      %497 = vst.msk [vmem:[%s488 + $0x61] sm:$0xff] %vm296, %v464
      %498 = vst.msk [vmem:[%s488 + $0x69] sm:$0xff] %vm296, %v465
      %499 = vst.msk [vmem:[%s488 + $0x79] sm:$0xff] %vm296, %v466
      %500 = vst.msk [vmem:[%s488 + $0x81] sm:$0xff] %vm296, %v467
      %501 = vst.msk [vmem:[%s488 + $0x91] sm:$0xff] %vm296, %v468
      %502 = vst.msk [vmem:[%s488 + $0x99] sm:$0xff] %vm296, %v469
      %503 = vst.msk [vmem:[%s488 + $0xa9] sm:$0xff] %vm296, %v470
      %504 = vst.msk [vmem:[%s488 + $0xb1] sm:$0xff] %vm296, %v471
      %505 = vst.msk [vmem:[%s488 + $0xc1] sm:$0xff] %vm296, %v472
      %506 = vst.msk [vmem:[%s488 + $0xc9] sm:$0xff] %vm296, %v473
      %507 = vst.msk [vmem:[%s488 + $0xd9] sm:$0xff] %vm296, %v474
      %508 = vst.msk [vmem:[%s488 + $0xe1] sm:$0xff] %vm296, %v475
      %509 = vst.msk [vmem:[%s488 + $0xf1] sm:$0xff] %vm296, %v476
      %510 = vst.msk [vmem:[%s488 + $0xf9] sm:$0xff] %vm296, %v477
      %511 = vst.msk [vmem:[%s488 + $0x109] sm:$0xff] %vm296, %v478
      %512 = vst.msk [vmem:[%s488 + $0x111] sm:$0xff] %vm296, %v479
      %513 = vst.msk [vmem:[%s488 + $0x121] sm:$0xff] %vm296, %v480
      %514 = vst.msk [vmem:[%s488 + $0x129] sm:$0xff] %vm296, %v481
      %515 = vst.msk [vmem:[%s488 + $0x139] sm:$0xff] %vm296, %v482
      %516 = vst.msk [vmem:[%s488 + $0x141] sm:$0xff] %vm296, %v483
      %517 = vst.msk [vmem:[%s488 + $0x151] sm:$0xff] %vm296, %v484
      %518 = vst.msk [vmem:[%s488 + $0x159] sm:$0xff] %vm296, %v485
      %519 = vst.msk [vmem:[%s488 + $0x169] sm:$0xff] %vm296, %v486
      %520 = vst.msk [vmem:[%s488 + $0x171] sm:$0xff] %vm296, %v487
      %v521 = vld [vmem:[#allocation2] sm:$0xff]
      %v522 = vld [vmem:[#allocation2 + $0x8] sm:$0xff]
      %v523 = vld [vmem:[#allocation2 + $0x18] sm:$0xff]
      %v524 = vld [vmem:[#allocation2 + $0x20] sm:$0xff]
      %v525 = vld [vmem:[#allocation2 + $0x30] sm:$0xff]
      %v526 = vld [vmem:[#allocation2 + $0x38] sm:$0xff]
      %v527 = vld [vmem:[#allocation2 + $0x48] sm:$0xff]
      %v528 = vld [vmem:[#allocation2 + $0x50] sm:$0xff]
      %v529 = vld [vmem:[#allocation2 + $0x60] sm:$0xff]
      %v530 = vld [vmem:[#allocation2 + $0x68] sm:$0xff]
      %v531 = vld [vmem:[#allocation2 + $0x78] sm:$0xff]
      %v532 = vld [vmem:[#allocation2 + $0x80] sm:$0xff]
      %v533 = vld [vmem:[#allocation2 + $0x90] sm:$0xff]
      %v534 = vld [vmem:[#allocation2 + $0x98] sm:$0xff]
      %v535 = vld [vmem:[#allocation2 + $0xa8] sm:$0xff]
      %v536 = vld [vmem:[#allocation2 + $0xb0] sm:$0xff]
      %v537 = vld [vmem:[#allocation2 + $0xc0] sm:$0xff]
      %v538 = vld [vmem:[#allocation2 + $0xc8] sm:$0xff]
      %v539 = vld [vmem:[#allocation2 + $0xd8] sm:$0xff]
      %v540 = vld [vmem:[#allocation2 + $0xe0] sm:$0xff]
      %v541 = vld [vmem:[#allocation2 + $0xf0] sm:$0xff]
      %v542 = vld [vmem:[#allocation2 + $0xf8] sm:$0xff]
      %v543 = vld [vmem:[#allocation2 + $0x108] sm:$0xff]
      %v544 = vld [vmem:[#allocation2 + $0x110] sm:$0xff]
      %v545 = vld [vmem:[#allocation2 + $0x120] sm:$0xff]
      %v546 = vld [vmem:[#allocation2 + $0x128] sm:$0xff]
      %v547 = vld [vmem:[#allocation2 + $0x138] sm:$0xff]
      %v548 = vld [vmem:[#allocation2 + $0x140] sm:$0xff]
      %v549 = vld [vmem:[#allocation2 + $0x150] sm:$0xff]
      %v550 = vld [vmem:[#allocation2 + $0x158] sm:$0xff]
      %v551 = vld [vmem:[#allocation2 + $0x168] sm:$0xff]
      %v552 = vld [vmem:[#allocation2 + $0x170] sm:$0xff]
      %v553 = vld [vmem:[#allocation2 + $0x1] sm:$0xff]
      %v554 = vld [vmem:[#allocation2 + $0x9] sm:$0xff]
      %v555 = vld [vmem:[#allocation2 + $0x19] sm:$0xff]
      %v556 = vld [vmem:[#allocation2 + $0x21] sm:$0xff]
      %v557 = vld [vmem:[#allocation2 + $0x31] sm:$0xff]
      %v558 = vld [vmem:[#allocation2 + $0x39] sm:$0xff]
      %v559 = vld [vmem:[#allocation2 + $0x49] sm:$0xff]
      %v560 = vld [vmem:[#allocation2 + $0x51] sm:$0xff]
      %v561 = vld [vmem:[#allocation2 + $0x61] sm:$0xff]
      %v562 = vld [vmem:[#allocation2 + $0x69] sm:$0xff]
      %v563 = vld [vmem:[#allocation2 + $0x79] sm:$0xff]
      %v564 = vld [vmem:[#allocation2 + $0x81] sm:$0xff]
      %v565 = vld [vmem:[#allocation2 + $0x91] sm:$0xff]
      %v566 = vld [vmem:[#allocation2 + $0x99] sm:$0xff]
      %v567 = vld [vmem:[#allocation2 + $0xa9] sm:$0xff]
      %v568 = vld [vmem:[#allocation2 + $0xb1] sm:$0xff]
      %v569 = vld [vmem:[#allocation2 + $0xc1] sm:$0xff]
      %v570 = vld [vmem:[#allocation2 + $0xc9] sm:$0xff]
      %v571 = vld [vmem:[#allocation2 + $0xd9] sm:$0xff]
      %v572 = vld [vmem:[#allocation2 + $0xe1] sm:$0xff]
      %v573 = vld [vmem:[#allocation2 + $0xf1] sm:$0xff]
      %v574 = vld [vmem:[#allocation2 + $0xf9] sm:$0xff]
      %v575 = vld [vmem:[#allocation2 + $0x109] sm:$0xff]
      %v576 = vld [vmem:[#allocation2 + $0x111] sm:$0xff]
      %v577 = vld [vmem:[#allocation2 + $0x121] sm:$0xff]
      %v578 = vld [vmem:[#allocation2 + $0x129] sm:$0xff]
      %v579 = vld [vmem:[#allocation2 + $0x139] sm:$0xff]
      %v580 = vld [vmem:[#allocation2 + $0x141] sm:$0xff]
      %v581 = vld [vmem:[#allocation2 + $0x151] sm:$0xff]
      %v582 = vld [vmem:[#allocation2 + $0x159] sm:$0xff]
      %v583 = vld [vmem:[#allocation2 + $0x169] sm:$0xff]
      %v584 = vld [vmem:[#allocation2 + $0x171] sm:$0xff]
      %v585 = vld [vmem:[#allocation2 + $0x2] sm:$0xff]
      %v586 = vld [vmem:[#allocation2 + $0xa] sm:$0xff]
      %v587 = vld [vmem:[#allocation2 + $0x1a] sm:$0xff]
      %v588 = vld [vmem:[#allocation2 + $0x22] sm:$0xff]
      %v589 = vld [vmem:[#allocation2 + $0x32] sm:$0xff]
      %v590 = vld [vmem:[#allocation2 + $0x3a] sm:$0xff]
      %v591 = vld [vmem:[#allocation2 + $0x4a] sm:$0xff]
      %v592 = vld [vmem:[#allocation2 + $0x52] sm:$0xff]
      %v593 = vld [vmem:[#allocation2 + $0x62] sm:$0xff]
      %v594 = vld [vmem:[#allocation2 + $0x6a] sm:$0xff]
      %v595 = vld [vmem:[#allocation2 + $0x7a] sm:$0xff]
      %v596 = vld [vmem:[#allocation2 + $0x82] sm:$0xff]
      %v597 = vld [vmem:[#allocation2 + $0x92] sm:$0xff]
      %v598 = vld [vmem:[#allocation2 + $0x9a] sm:$0xff]
      %v599 = vld [vmem:[#allocation2 + $0xaa] sm:$0xff]
      %v600 = vld [vmem:[#allocation2 + $0xb2] sm:$0xff]
      %v601 = vld [vmem:[#allocation2 + $0xc2] sm:$0xff]
      %v602 = vld [vmem:[#allocation2 + $0xca] sm:$0xff]
      %v603 = vld [vmem:[#allocation2 + $0xda] sm:$0xff]
      %v604 = vld [vmem:[#allocation2 + $0xe2] sm:$0xff]
      %v605 = vld [vmem:[#allocation2 + $0xf2] sm:$0xff]
      %v606 = vld [vmem:[#allocation2 + $0xfa] sm:$0xff]
      %v607 = vld [vmem:[#allocation2 + $0x10a] sm:$0xff]
      %v608 = vld [vmem:[#allocation2 + $0x112] sm:$0xff]
      %v609 = vld [vmem:[#allocation2 + $0x122] sm:$0xff]
      %v610 = vld [vmem:[#allocation2 + $0x12a] sm:$0xff]
      %v611 = vld [vmem:[#allocation2 + $0x13a] sm:$0xff]
      %v612 = vld [vmem:[#allocation2 + $0x142] sm:$0xff]
      %v613 = vld [vmem:[#allocation2 + $0x152] sm:$0xff]
      %v614 = vld [vmem:[#allocation2 + $0x15a] sm:$0xff]
      %v615 = vld [vmem:[#allocation2 + $0x16a] sm:$0xff]
      %v616 = vld [vmem:[#allocation2 + $0x172] sm:$0xff]
      %v617 = vld [vmem:[%s488] sm:$0xff]
      %v618 = vld [vmem:[%s488 + $0x8] sm:$0xff]
      %v619 = vld [vmem:[%s488 + $0x18] sm:$0xff]
      %v620 = vld [vmem:[%s488 + $0x20] sm:$0xff]
      %v621 = vld [vmem:[%s488 + $0x30] sm:$0xff]
      %v622 = vld [vmem:[%s488 + $0x38] sm:$0xff]
      %v623 = vld [vmem:[%s488 + $0x48] sm:$0xff]
      %v624 = vld [vmem:[%s488 + $0x50] sm:$0xff]
      %v625 = vld [vmem:[%s488 + $0x60] sm:$0xff]
      %v626 = vld [vmem:[%s488 + $0x68] sm:$0xff]
      %v627 = vld [vmem:[%s488 + $0x78] sm:$0xff]
      %v628 = vld [vmem:[%s488 + $0x80] sm:$0xff]
      %v629 = vld [vmem:[%s488 + $0x90] sm:$0xff]
      %v630 = vld [vmem:[%s488 + $0x98] sm:$0xff]
      %v631 = vld [vmem:[%s488 + $0xa8] sm:$0xff]
      %v632 = vld [vmem:[%s488 + $0xb0] sm:$0xff]
      %v633 = vld [vmem:[%s488 + $0xc0] sm:$0xff]
      %v634 = vld [vmem:[%s488 + $0xc8] sm:$0xff]
      %v635 = vld [vmem:[%s488 + $0xd8] sm:$0xff]
      %v636 = vld [vmem:[%s488 + $0xe0] sm:$0xff]
      %v637 = vld [vmem:[%s488 + $0xf0] sm:$0xff]
      %v638 = vld [vmem:[%s488 + $0xf8] sm:$0xff]
      %v639 = vld [vmem:[%s488 + $0x108] sm:$0xff]
      %v640 = vld [vmem:[%s488 + $0x110] sm:$0xff]
      %v641 = vld [vmem:[%s488 + $0x120] sm:$0xff]
      %v642 = vld [vmem:[%s488 + $0x128] sm:$0xff]
      %v643 = vld [vmem:[%s488 + $0x138] sm:$0xff]
      %v644 = vld [vmem:[%s488 + $0x140] sm:$0xff]
      %v645 = vld [vmem:[%s488 + $0x150] sm:$0xff]
      %v646 = vld [vmem:[%s488 + $0x158] sm:$0xff]
      %v647 = vld [vmem:[%s488 + $0x168] sm:$0xff]
      %v648 = vld [vmem:[%s488 + $0x170] sm:$0xff]
      %v649 = vld [vmem:[%s488 + $0x1] sm:$0xff]
      %v650 = vld [vmem:[%s488 + $0x9] sm:$0xff]
      %v651 = vld [vmem:[%s488 + $0x19] sm:$0xff]
      %v652 = vld [vmem:[%s488 + $0x21] sm:$0xff]
      %v653 = vld [vmem:[%s488 + $0x31] sm:$0xff]
      %v654 = vld [vmem:[%s488 + $0x39] sm:$0xff]
      %v655 = vld [vmem:[%s488 + $0x49] sm:$0xff]
      %v656 = vld [vmem:[%s488 + $0x51] sm:$0xff]
      %v657 = vld [vmem:[%s488 + $0x61] sm:$0xff]
      %v658 = vld [vmem:[%s488 + $0x69] sm:$0xff]
      %v659 = vld [vmem:[%s488 + $0x79] sm:$0xff]
      %v660 = vld [vmem:[%s488 + $0x81] sm:$0xff]
      %v661 = vld [vmem:[%s488 + $0x91] sm:$0xff]
      %v662 = vld [vmem:[%s488 + $0x99] sm:$0xff]
      %v663 = vld [vmem:[%s488 + $0xa9] sm:$0xff]
      %v664 = vld [vmem:[%s488 + $0xb1] sm:$0xff]
      %v665 = vld [vmem:[%s488 + $0xc1] sm:$0xff]
      %v666 = vld [vmem:[%s488 + $0xc9] sm:$0xff]
      %v667 = vld [vmem:[%s488 + $0xd9] sm:$0xff]
      %v668 = vld [vmem:[%s488 + $0xe1] sm:$0xff]
      %v669 = vld [vmem:[%s488 + $0xf1] sm:$0xff]
      %v670 = vld [vmem:[%s488 + $0xf9] sm:$0xff]
      %v671 = vld [vmem:[%s488 + $0x109] sm:$0xff]
      %v672 = vld [vmem:[%s488 + $0x111] sm:$0xff]
      %v673 = vld [vmem:[%s488 + $0x121] sm:$0xff]
      %v674 = vld [vmem:[%s488 + $0x129] sm:$0xff]
      %v675 = vld [vmem:[%s488 + $0x139] sm:$0xff]
      %v676 = vld [vmem:[%s488 + $0x141] sm:$0xff]
      %v677 = vld [vmem:[%s488 + $0x151] sm:$0xff]
      %v678 = vld [vmem:[%s488 + $0x159] sm:$0xff]
      %v679 = vld [vmem:[%s488 + $0x169] sm:$0xff]
      %v680 = vld [vmem:[%s488 + $0x171] sm:$0xff]
      %v681 = vld [vmem:[%s488 + $0x2] sm:$0xff]
      %v682 = vld [vmem:[%s488 + $0xa] sm:$0xff]
      %v683 = vld [vmem:[%s488 + $0x1a] sm:$0xff]
      %v684 = vld [vmem:[%s488 + $0x22] sm:$0xff]
      %v685 = vld [vmem:[%s488 + $0x32] sm:$0xff]
      %v686 = vld [vmem:[%s488 + $0x3a] sm:$0xff]
      %v687 = vld [vmem:[%s488 + $0x4a] sm:$0xff]
      %v688 = vld [vmem:[%s488 + $0x52] sm:$0xff]
      %v689 = vld [vmem:[%s488 + $0x62] sm:$0xff]
      %v690 = vld [vmem:[%s488 + $0x6a] sm:$0xff]
      %v691 = vld [vmem:[%s488 + $0x7a] sm:$0xff]
      %v692 = vld [vmem:[%s488 + $0x82] sm:$0xff]
      %v693 = vld [vmem:[%s488 + $0x92] sm:$0xff]
      %v694 = vld [vmem:[%s488 + $0x9a] sm:$0xff]
      %v695 = vld [vmem:[%s488 + $0xaa] sm:$0xff]
      %v696 = vld [vmem:[%s488 + $0xb2] sm:$0xff]
      %v697 = vld [vmem:[%s488 + $0xc2] sm:$0xff]
      %v698 = vld [vmem:[%s488 + $0xca] sm:$0xff]
      %v699 = vld [vmem:[%s488 + $0xda] sm:$0xff]
      %v700 = vld [vmem:[%s488 + $0xe2] sm:$0xff]
      %v701 = vld [vmem:[%s488 + $0xf2] sm:$0xff]
      %v702 = vld [vmem:[%s488 + $0xfa] sm:$0xff]
      %v703 = vld [vmem:[%s488 + $0x10a] sm:$0xff]
      %v704 = vld [vmem:[%s488 + $0x112] sm:$0xff]
      %v705 = vld [vmem:[%s488 + $0x122] sm:$0xff]
      %v706 = vld [vmem:[%s488 + $0x12a] sm:$0xff]
      %v707 = vld [vmem:[%s488 + $0x13a] sm:$0xff]
      %v708 = vld [vmem:[%s488 + $0x142] sm:$0xff]
      %v709 = vld [vmem:[%s488 + $0x152] sm:$0xff]
      %v710 = vld [vmem:[%s488 + $0x15a] sm:$0xff]
      %v711 = vld [vmem:[%s488 + $0x16a] sm:$0xff]
      %v712 = vld [vmem:[%s488 + $0x172] sm:$0xff]
      %s713 = scalar_lea.vmem [#allocation2], 48
      %v714 = vld [vmem:[%s713] sm:$0xff]
      %v715 = vld [vmem:[%s713 + $0x8] sm:$0xff]
      %v716 = vld [vmem:[%s713 + $0x18] sm:$0xff]
      %v717 = vld [vmem:[%s713 + $0x20] sm:$0xff]
      %v718 = vld [vmem:[%s713 + $0x30] sm:$0xff]
      %v719 = vld [vmem:[%s713 + $0x38] sm:$0xff]
      %v720 = vld [vmem:[%s713 + $0x48] sm:$0xff]
      %v721 = vld [vmem:[%s713 + $0x50] sm:$0xff]
      %v722 = vld [vmem:[%s713 + $0x60] sm:$0xff]
      %v723 = vld [vmem:[%s713 + $0x68] sm:$0xff]
      %v724 = vld [vmem:[%s713 + $0x78] sm:$0xff]
      %v725 = vld [vmem:[%s713 + $0x80] sm:$0xff]
      %v726 = vld [vmem:[%s713 + $0x90] sm:$0xff]
      %v727 = vld [vmem:[%s713 + $0x98] sm:$0xff]
      %v728 = vld [vmem:[%s713 + $0xa8] sm:$0xff]
      %v729 = vld [vmem:[%s713 + $0xb0] sm:$0xff]
      %v730 = vld [vmem:[%s713 + $0xc0] sm:$0xff]
      %v731 = vld [vmem:[%s713 + $0xc8] sm:$0xff]
      %v732 = vld [vmem:[%s713 + $0xd8] sm:$0xff]
      %v733 = vld [vmem:[%s713 + $0xe0] sm:$0xff]
      %v734 = vld [vmem:[%s713 + $0xf0] sm:$0xff]
      %v735 = vld [vmem:[%s713 + $0xf8] sm:$0xff]
      %v736 = vld [vmem:[%s713 + $0x108] sm:$0xff]
      %v737 = vld [vmem:[%s713 + $0x110] sm:$0xff]
      %v738 = vld [vmem:[%s713 + $0x120] sm:$0xff]
      %v739 = vld [vmem:[%s713 + $0x128] sm:$0xff]
      %v740 = vld [vmem:[%s713 + $0x138] sm:$0xff]
      %v741 = vld [vmem:[%s713 + $0x140] sm:$0xff]
      %v742 = vld [vmem:[%s713 + $0x150] sm:$0xff]
      %v743 = vld [vmem:[%s713 + $0x158] sm:$0xff]
      %v744 = vld [vmem:[%s713 + $0x168] sm:$0xff]
      %v745 = vld [vmem:[%s713 + $0x170] sm:$0xff]
      %v746 = vld [vmem:[%s713 + $0x1] sm:$0xff]
      %v747 = vld [vmem:[%s713 + $0x9] sm:$0xff]
      %v748 = vld [vmem:[%s713 + $0x19] sm:$0xff]
      %v749 = vld [vmem:[%s713 + $0x21] sm:$0xff]
      %v750 = vld [vmem:[%s713 + $0x31] sm:$0xff]
      %v751 = vld [vmem:[%s713 + $0x39] sm:$0xff]
      %v752 = vld [vmem:[%s713 + $0x49] sm:$0xff]
      %v753 = vld [vmem:[%s713 + $0x51] sm:$0xff]
      %v754 = vld [vmem:[%s713 + $0x61] sm:$0xff]
      %v755 = vld [vmem:[%s713 + $0x69] sm:$0xff]
      %v756 = vld [vmem:[%s713 + $0x79] sm:$0xff]
      %v757 = vld [vmem:[%s713 + $0x81] sm:$0xff]
      %v758 = vld [vmem:[%s713 + $0x91] sm:$0xff]
      %v759 = vld [vmem:[%s713 + $0x99] sm:$0xff]
      %v760 = vld [vmem:[%s713 + $0xa9] sm:$0xff]
      %v761 = vld [vmem:[%s713 + $0xb1] sm:$0xff]
      %v762 = vld [vmem:[%s713 + $0xc1] sm:$0xff]
      %v763 = vld [vmem:[%s713 + $0xc9] sm:$0xff]
      %v764 = vld [vmem:[%s713 + $0xd9] sm:$0xff]
      %v765 = vld [vmem:[%s713 + $0xe1] sm:$0xff]
      %v766 = vld [vmem:[%s713 + $0xf1] sm:$0xff]
      %v767 = vld [vmem:[%s713 + $0xf9] sm:$0xff]
      %v768 = vld [vmem:[%s713 + $0x109] sm:$0xff]
      %v769 = vld [vmem:[%s713 + $0x111] sm:$0xff]
      %v770 = vld [vmem:[%s713 + $0x121] sm:$0xff]
      %v771 = vld [vmem:[%s713 + $0x129] sm:$0xff]
      %v772 = vld [vmem:[%s713 + $0x139] sm:$0xff]
      %v773 = vld [vmem:[%s713 + $0x141] sm:$0xff]
      %v774 = vld [vmem:[%s713 + $0x151] sm:$0xff]
      %v775 = vld [vmem:[%s713 + $0x159] sm:$0xff]
      %v776 = vld [vmem:[%s713 + $0x169] sm:$0xff]
      %v777 = vld [vmem:[%s713 + $0x171] sm:$0xff]
      %v778 = vld [vmem:[%s713 + $0x2] sm:$0xff]
      %v779 = vld [vmem:[%s713 + $0xa] sm:$0xff]
      %v780 = vld [vmem:[%s713 + $0x1a] sm:$0xff]
      %v781 = vld [vmem:[%s713 + $0x22] sm:$0xff]
      %v782 = vld [vmem:[%s713 + $0x32] sm:$0xff]
      %v783 = vld [vmem:[%s713 + $0x3a] sm:$0xff]
      %v784 = vld [vmem:[%s713 + $0x4a] sm:$0xff]
      %v785 = vld [vmem:[%s713 + $0x52] sm:$0xff]
      %v786 = vld [vmem:[%s713 + $0x62] sm:$0xff]
      %v787 = vld [vmem:[%s713 + $0x6a] sm:$0xff]
      %v788 = vld [vmem:[%s713 + $0x7a] sm:$0xff]
      %v789 = vld [vmem:[%s713 + $0x82] sm:$0xff]
      %v790 = vld [vmem:[%s713 + $0x92] sm:$0xff]
      %v791 = vld [vmem:[%s713 + $0x9a] sm:$0xff]
      %v792 = vld [vmem:[%s713 + $0xaa] sm:$0xff]
      %v793 = vld [vmem:[%s713 + $0xb2] sm:$0xff]
      %v794 = vld [vmem:[%s713 + $0xc2] sm:$0xff]
      %v795 = vld [vmem:[%s713 + $0xca] sm:$0xff]
      %v796 = vld [vmem:[%s713 + $0xda] sm:$0xff]
      %v797 = vld [vmem:[%s713 + $0xe2] sm:$0xff]
      %v798 = vld [vmem:[%s713 + $0xf2] sm:$0xff]
      %v799 = vld [vmem:[%s713 + $0xfa] sm:$0xff]
      %v800 = vld [vmem:[%s713 + $0x10a] sm:$0xff]
      %v801 = vld [vmem:[%s713 + $0x112] sm:$0xff]
      %v802 = vld [vmem:[%s713 + $0x122] sm:$0xff]
      %v803 = vld [vmem:[%s713 + $0x12a] sm:$0xff]
      %v804 = vld [vmem:[%s713 + $0x13a] sm:$0xff]
      %v805 = vld [vmem:[%s713 + $0x142] sm:$0xff]
      %v806 = vld [vmem:[%s713 + $0x152] sm:$0xff]
      %v807 = vld [vmem:[%s713 + $0x15a] sm:$0xff]
      %v808 = vld [vmem:[%s713 + $0x16a] sm:$0xff]
      %v809 = vld [vmem:[%s713 + $0x172] sm:$0xff]
      %842 = vrot.lane.b32.xlu0 %v553, 8
      %v843 = vpop.permute.xlu0 %842
      %844 = vrot.lane.b32.xlu0 %v554, 8
      %v845 = vpop.permute.xlu0 %844
      %846 = vrot.lane.b32.xlu0 %v555, 8
      %v847 = vpop.permute.xlu0 %846
      %848 = vrot.lane.b32.xlu0 %v556, 8
      %v849 = vpop.permute.xlu0 %848
      %850 = vrot.lane.b32.xlu0 %v557, 8
      %v851 = vpop.permute.xlu0 %850
      %852 = vrot.lane.b32.xlu0 %v558, 8
      %v853 = vpop.permute.xlu0 %852
      %854 = vrot.lane.b32.xlu0 %v559, 8
      %v855 = vpop.permute.xlu0 %854
      %856 = vrot.lane.b32.xlu0 %v560, 8
      %v857 = vpop.permute.xlu0 %856
      %858 = vrot.lane.b32.xlu0 %v561, 8
      %v859 = vpop.permute.xlu0 %858
      %860 = vrot.lane.b32.xlu0 %v562, 8
      %v861 = vpop.permute.xlu0 %860
      %862 = vrot.lane.b32.xlu0 %v563, 8
      %v863 = vpop.permute.xlu0 %862
      %864 = vrot.lane.b32.xlu0 %v564, 8
      %v865 = vpop.permute.xlu0 %864
      %866 = vrot.lane.b32.xlu0 %v565, 8
      %v867 = vpop.permute.xlu0 %866
      %868 = vrot.lane.b32.xlu0 %v566, 8
      %v869 = vpop.permute.xlu0 %868
      %870 = vrot.lane.b32.xlu0 %v567, 8
      %v871 = vpop.permute.xlu0 %870
      %872 = vrot.lane.b32.xlu0 %v568, 8
      %v873 = vpop.permute.xlu0 %872
      %874 = vrot.lane.b32.xlu0 %v569, 8
      %v875 = vpop.permute.xlu0 %874
      %876 = vrot.lane.b32.xlu0 %v570, 8
      %v877 = vpop.permute.xlu0 %876
      %878 = vrot.lane.b32.xlu0 %v571, 8
      %v879 = vpop.permute.xlu0 %878
      %880 = vrot.lane.b32.xlu0 %v572, 8
      %v881 = vpop.permute.xlu0 %880
      %882 = vrot.lane.b32.xlu0 %v573, 8
      %v883 = vpop.permute.xlu0 %882
      %884 = vrot.lane.b32.xlu0 %v574, 8
      %v885 = vpop.permute.xlu0 %884
      %886 = vrot.lane.b32.xlu0 %v575, 8
      %v887 = vpop.permute.xlu0 %886
      %888 = vrot.lane.b32.xlu0 %v576, 8
      %v889 = vpop.permute.xlu0 %888
      %890 = vrot.lane.b32.xlu0 %v577, 8
      %v891 = vpop.permute.xlu0 %890
      %892 = vrot.lane.b32.xlu0 %v578, 8
      %v893 = vpop.permute.xlu0 %892
      %894 = vrot.lane.b32.xlu0 %v579, 8
      %v895 = vpop.permute.xlu0 %894
      %896 = vrot.lane.b32.xlu0 %v580, 8
      %v897 = vpop.permute.xlu0 %896
      %898 = vrot.lane.b32.xlu0 %v581, 8
      %v899 = vpop.permute.xlu0 %898
      %900 = vrot.lane.b32.xlu0 %v582, 8
      %v901 = vpop.permute.xlu0 %900
      %902 = vrot.lane.b32.xlu0 %v583, 8
      %v903 = vpop.permute.xlu0 %902
      %904 = vrot.lane.b32.xlu0 %v584, 8
      %v905 = vpop.permute.xlu0 %904
      %970 = vrot.lane.b32.xlu0 %v585, 16
      %v971 = vpop.permute.xlu0 %970
      %972 = vrot.lane.b32.xlu0 %v586, 16
      %v973 = vpop.permute.xlu0 %972
      %974 = vrot.lane.b32.xlu0 %v587, 16
      %v975 = vpop.permute.xlu0 %974
      %976 = vrot.lane.b32.xlu0 %v588, 16
      %v977 = vpop.permute.xlu0 %976
      %978 = vrot.lane.b32.xlu0 %v589, 16
      %v979 = vpop.permute.xlu0 %978
      %980 = vrot.lane.b32.xlu0 %v590, 16
      %v981 = vpop.permute.xlu0 %980
      %982 = vrot.lane.b32.xlu0 %v591, 16
      %v983 = vpop.permute.xlu0 %982
      %984 = vrot.lane.b32.xlu0 %v592, 16
      %v985 = vpop.permute.xlu0 %984
      %986 = vrot.lane.b32.xlu0 %v593, 16
      %v987 = vpop.permute.xlu0 %986
      %988 = vrot.lane.b32.xlu0 %v594, 16
      %v989 = vpop.permute.xlu0 %988
      %990 = vrot.lane.b32.xlu0 %v595, 16
      %v991 = vpop.permute.xlu0 %990
      %992 = vrot.lane.b32.xlu0 %v596, 16
      %v993 = vpop.permute.xlu0 %992
      %994 = vrot.lane.b32.xlu0 %v597, 16
      %v995 = vpop.permute.xlu0 %994
      %996 = vrot.lane.b32.xlu0 %v598, 16
      %v997 = vpop.permute.xlu0 %996
      %998 = vrot.lane.b32.xlu0 %v599, 16
      %v999 = vpop.permute.xlu0 %998
      %1000 = vrot.lane.b32.xlu0 %v600, 16
      %v1001 = vpop.permute.xlu0 %1000
      %1002 = vrot.lane.b32.xlu0 %v601, 16
      %v1003 = vpop.permute.xlu0 %1002
      %1004 = vrot.lane.b32.xlu0 %v602, 16
      %v1005 = vpop.permute.xlu0 %1004
      %1006 = vrot.lane.b32.xlu0 %v603, 16
      %v1007 = vpop.permute.xlu0 %1006
      %1008 = vrot.lane.b32.xlu0 %v604, 16
      %v1009 = vpop.permute.xlu0 %1008
      %1010 = vrot.lane.b32.xlu0 %v605, 16
      %v1011 = vpop.permute.xlu0 %1010
      %1012 = vrot.lane.b32.xlu0 %v606, 16
      %v1013 = vpop.permute.xlu0 %1012
      %1014 = vrot.lane.b32.xlu0 %v607, 16
      %v1015 = vpop.permute.xlu0 %1014
      %1016 = vrot.lane.b32.xlu0 %v608, 16
      %v1017 = vpop.permute.xlu0 %1016
      %1018 = vrot.lane.b32.xlu0 %v609, 16
      %v1019 = vpop.permute.xlu0 %1018
      %1020 = vrot.lane.b32.xlu0 %v610, 16
      %v1021 = vpop.permute.xlu0 %1020
      %1022 = vrot.lane.b32.xlu0 %v611, 16
      %v1023 = vpop.permute.xlu0 %1022
      %1024 = vrot.lane.b32.xlu0 %v612, 16
      %v1025 = vpop.permute.xlu0 %1024
      %1026 = vrot.lane.b32.xlu0 %v613, 16
      %v1027 = vpop.permute.xlu0 %1026
      %1028 = vrot.lane.b32.xlu0 %v614, 16
      %v1029 = vpop.permute.xlu0 %1028
      %1030 = vrot.lane.b32.xlu0 %v615, 16
      %v1031 = vpop.permute.xlu0 %1030
      %1032 = vrot.lane.b32.xlu0 %v616, 16
      %v1033 = vpop.permute.xlu0 %1032
      %1098 = vrot.lane.b32.xlu0 %v617, 24
      %v1099 = vpop.permute.xlu0 %1098
      %1100 = vrot.lane.b32.xlu0 %v618, 24
      %v1101 = vpop.permute.xlu0 %1100
      %1102 = vrot.lane.b32.xlu0 %v619, 24
      %v1103 = vpop.permute.xlu0 %1102
      %1104 = vrot.lane.b32.xlu0 %v620, 24
      %v1105 = vpop.permute.xlu0 %1104
      %1106 = vrot.lane.b32.xlu0 %v621, 24
      %v1107 = vpop.permute.xlu0 %1106
      %1108 = vrot.lane.b32.xlu0 %v622, 24
      %v1109 = vpop.permute.xlu0 %1108
      %1110 = vrot.lane.b32.xlu0 %v623, 24
      %v1111 = vpop.permute.xlu0 %1110
      %1112 = vrot.lane.b32.xlu0 %v624, 24
      %v1113 = vpop.permute.xlu0 %1112
      %1114 = vrot.lane.b32.xlu0 %v625, 24
      %v1115 = vpop.permute.xlu0 %1114
      %1116 = vrot.lane.b32.xlu0 %v626, 24
      %v1117 = vpop.permute.xlu0 %1116
      %1118 = vrot.lane.b32.xlu0 %v627, 24
      %v1119 = vpop.permute.xlu0 %1118
      %1120 = vrot.lane.b32.xlu0 %v628, 24
      %v1121 = vpop.permute.xlu0 %1120
      %1122 = vrot.lane.b32.xlu0 %v629, 24
      %v1123 = vpop.permute.xlu0 %1122
      %1124 = vrot.lane.b32.xlu0 %v630, 24
      %v1125 = vpop.permute.xlu0 %1124
      %1126 = vrot.lane.b32.xlu0 %v631, 24
      %v1127 = vpop.permute.xlu0 %1126
      %1128 = vrot.lane.b32.xlu0 %v632, 24
      %v1129 = vpop.permute.xlu0 %1128
      %1130 = vrot.lane.b32.xlu0 %v633, 24
      %v1131 = vpop.permute.xlu0 %1130
      %1132 = vrot.lane.b32.xlu0 %v634, 24
      %v1133 = vpop.permute.xlu0 %1132
      %1134 = vrot.lane.b32.xlu0 %v635, 24
      %v1135 = vpop.permute.xlu0 %1134
      %1136 = vrot.lane.b32.xlu0 %v636, 24
      %v1137 = vpop.permute.xlu0 %1136
      %1138 = vrot.lane.b32.xlu0 %v637, 24
      %v1139 = vpop.permute.xlu0 %1138
      %1140 = vrot.lane.b32.xlu0 %v638, 24
      %v1141 = vpop.permute.xlu0 %1140
      %1142 = vrot.lane.b32.xlu0 %v639, 24
      %v1143 = vpop.permute.xlu0 %1142
      %1144 = vrot.lane.b32.xlu0 %v640, 24
      %v1145 = vpop.permute.xlu0 %1144
      %1146 = vrot.lane.b32.xlu0 %v641, 24
      %v1147 = vpop.permute.xlu0 %1146
      %1148 = vrot.lane.b32.xlu0 %v642, 24
      %v1149 = vpop.permute.xlu0 %1148
      %1150 = vrot.lane.b32.xlu0 %v643, 24
      %v1151 = vpop.permute.xlu0 %1150
      %1152 = vrot.lane.b32.xlu0 %v644, 24
      %v1153 = vpop.permute.xlu0 %1152
      %1154 = vrot.lane.b32.xlu0 %v645, 24
      %v1155 = vpop.permute.xlu0 %1154
      %1156 = vrot.lane.b32.xlu0 %v646, 24
      %v1157 = vpop.permute.xlu0 %1156
      %1158 = vrot.lane.b32.xlu0 %v647, 24
      %v1159 = vpop.permute.xlu0 %1158
      %1160 = vrot.lane.b32.xlu0 %v648, 24
      %v1161 = vpop.permute.xlu0 %1160
      %1226 = vrot.lane.b32.xlu0 %v649, 32
      %v1227 = vpop.permute.xlu0 %1226
      %1228 = vrot.lane.b32.xlu0 %v650, 32
      %v1229 = vpop.permute.xlu0 %1228
      %1230 = vrot.lane.b32.xlu0 %v651, 32
      %v1231 = vpop.permute.xlu0 %1230
      %1232 = vrot.lane.b32.xlu0 %v652, 32
      %v1233 = vpop.permute.xlu0 %1232
      %1234 = vrot.lane.b32.xlu0 %v653, 32
      %v1235 = vpop.permute.xlu0 %1234
      %1236 = vrot.lane.b32.xlu0 %v654, 32
      %v1237 = vpop.permute.xlu0 %1236
      %1238 = vrot.lane.b32.xlu0 %v655, 32
      %v1239 = vpop.permute.xlu0 %1238
      %1240 = vrot.lane.b32.xlu0 %v656, 32
      %v1241 = vpop.permute.xlu0 %1240
      %1242 = vrot.lane.b32.xlu0 %v657, 32
      %v1243 = vpop.permute.xlu0 %1242
      %1244 = vrot.lane.b32.xlu0 %v658, 32
      %v1245 = vpop.permute.xlu0 %1244
      %1246 = vrot.lane.b32.xlu0 %v659, 32
      %v1247 = vpop.permute.xlu0 %1246
      %1248 = vrot.lane.b32.xlu0 %v660, 32
      %v1249 = vpop.permute.xlu0 %1248
      %1250 = vrot.lane.b32.xlu0 %v661, 32
      %v1251 = vpop.permute.xlu0 %1250
      %1252 = vrot.lane.b32.xlu0 %v662, 32
      %v1253 = vpop.permute.xlu0 %1252
      %1254 = vrot.lane.b32.xlu0 %v663, 32
      %v1255 = vpop.permute.xlu0 %1254
      %1256 = vrot.lane.b32.xlu0 %v664, 32
      %v1257 = vpop.permute.xlu0 %1256
      %1258 = vrot.lane.b32.xlu0 %v665, 32
      %v1259 = vpop.permute.xlu0 %1258
      %1260 = vrot.lane.b32.xlu0 %v666, 32
      %v1261 = vpop.permute.xlu0 %1260
      %1262 = vrot.lane.b32.xlu0 %v667, 32
      %v1263 = vpop.permute.xlu0 %1262
      %1264 = vrot.lane.b32.xlu0 %v668, 32
      %v1265 = vpop.permute.xlu0 %1264
      %1266 = vrot.lane.b32.xlu0 %v669, 32
      %v1267 = vpop.permute.xlu0 %1266
      %1268 = vrot.lane.b32.xlu0 %v670, 32
      %v1269 = vpop.permute.xlu0 %1268
      %1270 = vrot.lane.b32.xlu0 %v671, 32
      %v1271 = vpop.permute.xlu0 %1270
      %1272 = vrot.lane.b32.xlu0 %v672, 32
      %v1273 = vpop.permute.xlu0 %1272
      %1274 = vrot.lane.b32.xlu0 %v673, 32
      %v1275 = vpop.permute.xlu0 %1274
      %1276 = vrot.lane.b32.xlu0 %v674, 32
      %v1277 = vpop.permute.xlu0 %1276
      %1278 = vrot.lane.b32.xlu0 %v675, 32
      %v1279 = vpop.permute.xlu0 %1278
      %1280 = vrot.lane.b32.xlu0 %v676, 32
      %v1281 = vpop.permute.xlu0 %1280
      %1282 = vrot.lane.b32.xlu0 %v677, 32
      %v1283 = vpop.permute.xlu0 %1282
      %1284 = vrot.lane.b32.xlu0 %v678, 32
      %v1285 = vpop.permute.xlu0 %1284
      %1286 = vrot.lane.b32.xlu0 %v679, 32
      %v1287 = vpop.permute.xlu0 %1286
      %1288 = vrot.lane.b32.xlu0 %v680, 32
      %v1289 = vpop.permute.xlu0 %1288
      %1354 = vrot.lane.b32.xlu0 %v681, 40
      %v1355 = vpop.permute.xlu0 %1354
      %1356 = vrot.lane.b32.xlu0 %v682, 40
      %v1357 = vpop.permute.xlu0 %1356
      %1358 = vrot.lane.b32.xlu0 %v683, 40
      %v1359 = vpop.permute.xlu0 %1358
      %1360 = vrot.lane.b32.xlu0 %v684, 40
      %v1361 = vpop.permute.xlu0 %1360
      %1362 = vrot.lane.b32.xlu0 %v685, 40
      %v1363 = vpop.permute.xlu0 %1362
      %1364 = vrot.lane.b32.xlu0 %v686, 40
      %v1365 = vpop.permute.xlu0 %1364
      %1366 = vrot.lane.b32.xlu0 %v687, 40
      %v1367 = vpop.permute.xlu0 %1366
      %1368 = vrot.lane.b32.xlu0 %v688, 40
      %v1369 = vpop.permute.xlu0 %1368
      %1370 = vrot.lane.b32.xlu0 %v689, 40
      %v1371 = vpop.permute.xlu0 %1370
      %1372 = vrot.lane.b32.xlu0 %v690, 40
      %v1373 = vpop.permute.xlu0 %1372
      %1374 = vrot.lane.b32.xlu0 %v691, 40
      %v1375 = vpop.permute.xlu0 %1374
      %1376 = vrot.lane.b32.xlu0 %v692, 40
      %v1377 = vpop.permute.xlu0 %1376
      %1378 = vrot.lane.b32.xlu0 %v693, 40
      %v1379 = vpop.permute.xlu0 %1378
      %1380 = vrot.lane.b32.xlu0 %v694, 40
      %v1381 = vpop.permute.xlu0 %1380
      %1382 = vrot.lane.b32.xlu0 %v695, 40
      %v1383 = vpop.permute.xlu0 %1382
      %1384 = vrot.lane.b32.xlu0 %v696, 40
      %v1385 = vpop.permute.xlu0 %1384
      %1386 = vrot.lane.b32.xlu0 %v697, 40
      %v1387 = vpop.permute.xlu0 %1386
      %1388 = vrot.lane.b32.xlu0 %v698, 40
      %v1389 = vpop.permute.xlu0 %1388
      %1390 = vrot.lane.b32.xlu0 %v699, 40
      %v1391 = vpop.permute.xlu0 %1390
      %1392 = vrot.lane.b32.xlu0 %v700, 40
      %v1393 = vpop.permute.xlu0 %1392
      %1394 = vrot.lane.b32.xlu0 %v701, 40
      %v1395 = vpop.permute.xlu0 %1394
      %1396 = vrot.lane.b32.xlu0 %v702, 40
      %v1397 = vpop.permute.xlu0 %1396
      %1398 = vrot.lane.b32.xlu0 %v703, 40
      %v1399 = vpop.permute.xlu0 %1398
      %1400 = vrot.lane.b32.xlu0 %v704, 40
      %v1401 = vpop.permute.xlu0 %1400
      %1402 = vrot.lane.b32.xlu0 %v705, 40
      %v1403 = vpop.permute.xlu0 %1402
      %1404 = vrot.lane.b32.xlu0 %v706, 40
      %v1405 = vpop.permute.xlu0 %1404
      %1406 = vrot.lane.b32.xlu0 %v707, 40
      %v1407 = vpop.permute.xlu0 %1406
      %1408 = vrot.lane.b32.xlu0 %v708, 40
      %v1409 = vpop.permute.xlu0 %1408
      %1410 = vrot.lane.b32.xlu0 %v709, 40
      %v1411 = vpop.permute.xlu0 %1410
      %1412 = vrot.lane.b32.xlu0 %v710, 40
      %v1413 = vpop.permute.xlu0 %1412
      %1414 = vrot.lane.b32.xlu0 %v711, 40
      %v1415 = vpop.permute.xlu0 %1414
      %1416 = vrot.lane.b32.xlu0 %v712, 40
      %v1417 = vpop.permute.xlu0 %1416
      %1482 = vrot.lane.b32.xlu0 %v714, 48
      %v1483 = vpop.permute.xlu0 %1482
      %1484 = vrot.lane.b32.xlu0 %v715, 48
      %v1485 = vpop.permute.xlu0 %1484
      %1486 = vrot.lane.b32.xlu0 %v716, 48
      %v1487 = vpop.permute.xlu0 %1486
      %1488 = vrot.lane.b32.xlu0 %v717, 48
      %v1489 = vpop.permute.xlu0 %1488
      %1490 = vrot.lane.b32.xlu0 %v718, 48
      %v1491 = vpop.permute.xlu0 %1490
      %1492 = vrot.lane.b32.xlu0 %v719, 48
      %v1493 = vpop.permute.xlu0 %1492
      %1494 = vrot.lane.b32.xlu0 %v720, 48
      %v1495 = vpop.permute.xlu0 %1494
      %1496 = vrot.lane.b32.xlu0 %v721, 48
      %v1497 = vpop.permute.xlu0 %1496
      %1498 = vrot.lane.b32.xlu0 %v722, 48
      %v1499 = vpop.permute.xlu0 %1498
      %1500 = vrot.lane.b32.xlu0 %v723, 48
      %v1501 = vpop.permute.xlu0 %1500
      %1502 = vrot.lane.b32.xlu0 %v724, 48
      %v1503 = vpop.permute.xlu0 %1502
      %1504 = vrot.lane.b32.xlu0 %v725, 48
      %v1505 = vpop.permute.xlu0 %1504
      %1506 = vrot.lane.b32.xlu0 %v726, 48
      %v1507 = vpop.permute.xlu0 %1506
      %1508 = vrot.lane.b32.xlu0 %v727, 48
      %v1509 = vpop.permute.xlu0 %1508
      %1510 = vrot.lane.b32.xlu0 %v728, 48
      %v1511 = vpop.permute.xlu0 %1510
      %1512 = vrot.lane.b32.xlu0 %v729, 48
      %v1513 = vpop.permute.xlu0 %1512
      %1514 = vrot.lane.b32.xlu0 %v730, 48
      %v1515 = vpop.permute.xlu0 %1514
      %1516 = vrot.lane.b32.xlu0 %v731, 48
      %v1517 = vpop.permute.xlu0 %1516
      %1518 = vrot.lane.b32.xlu0 %v732, 48
      %v1519 = vpop.permute.xlu0 %1518
      %1520 = vrot.lane.b32.xlu0 %v733, 48
      %v1521 = vpop.permute.xlu0 %1520
      %1522 = vrot.lane.b32.xlu0 %v734, 48
      %v1523 = vpop.permute.xlu0 %1522
      %1524 = vrot.lane.b32.xlu0 %v735, 48
      %v1525 = vpop.permute.xlu0 %1524
      %1526 = vrot.lane.b32.xlu0 %v736, 48
      %v1527 = vpop.permute.xlu0 %1526
      %1528 = vrot.lane.b32.xlu0 %v737, 48
      %v1529 = vpop.permute.xlu0 %1528
      %1530 = vrot.lane.b32.xlu0 %v738, 48
      %v1531 = vpop.permute.xlu0 %1530
      %1532 = vrot.lane.b32.xlu0 %v739, 48
      %v1533 = vpop.permute.xlu0 %1532
      %1534 = vrot.lane.b32.xlu0 %v740, 48
      %v1535 = vpop.permute.xlu0 %1534
      %1536 = vrot.lane.b32.xlu0 %v741, 48
      %v1537 = vpop.permute.xlu0 %1536
      %1538 = vrot.lane.b32.xlu0 %v742, 48
      %v1539 = vpop.permute.xlu0 %1538
      %1540 = vrot.lane.b32.xlu0 %v743, 48
      %v1541 = vpop.permute.xlu0 %1540
      %1542 = vrot.lane.b32.xlu0 %v744, 48
      %v1543 = vpop.permute.xlu0 %1542
      %1544 = vrot.lane.b32.xlu0 %v745, 48
      %v1545 = vpop.permute.xlu0 %1544
      %1610 = vrot.lane.b32.xlu0 %v746, 56
      %v1611 = vpop.permute.xlu0 %1610
      %1612 = vrot.lane.b32.xlu0 %v747, 56
      %v1613 = vpop.permute.xlu0 %1612
      %1614 = vrot.lane.b32.xlu0 %v748, 56
      %v1615 = vpop.permute.xlu0 %1614
      %1616 = vrot.lane.b32.xlu0 %v749, 56
      %v1617 = vpop.permute.xlu0 %1616
      %1618 = vrot.lane.b32.xlu0 %v750, 56
      %v1619 = vpop.permute.xlu0 %1618
      %1620 = vrot.lane.b32.xlu0 %v751, 56
      %v1621 = vpop.permute.xlu0 %1620
      %1622 = vrot.lane.b32.xlu0 %v752, 56
      %v1623 = vpop.permute.xlu0 %1622
      %1624 = vrot.lane.b32.xlu0 %v753, 56
      %v1625 = vpop.permute.xlu0 %1624
      %1626 = vrot.lane.b32.xlu0 %v754, 56
      %v1627 = vpop.permute.xlu0 %1626
      %1628 = vrot.lane.b32.xlu0 %v755, 56
      %v1629 = vpop.permute.xlu0 %1628
      %1630 = vrot.lane.b32.xlu0 %v756, 56
      %v1631 = vpop.permute.xlu0 %1630
      %1632 = vrot.lane.b32.xlu0 %v757, 56
      %v1633 = vpop.permute.xlu0 %1632
      %1634 = vrot.lane.b32.xlu0 %v758, 56
      %v1635 = vpop.permute.xlu0 %1634
      %1636 = vrot.lane.b32.xlu0 %v759, 56
      %v1637 = vpop.permute.xlu0 %1636
      %1638 = vrot.lane.b32.xlu0 %v760, 56
      %v1639 = vpop.permute.xlu0 %1638
      %1640 = vrot.lane.b32.xlu0 %v761, 56
      %v1641 = vpop.permute.xlu0 %1640
      %1642 = vrot.lane.b32.xlu0 %v762, 56
      %v1643 = vpop.permute.xlu0 %1642
      %1644 = vrot.lane.b32.xlu0 %v763, 56
      %v1645 = vpop.permute.xlu0 %1644
      %1646 = vrot.lane.b32.xlu0 %v764, 56
      %v1647 = vpop.permute.xlu0 %1646
      %1648 = vrot.lane.b32.xlu0 %v765, 56
      %v1649 = vpop.permute.xlu0 %1648
      %1650 = vrot.lane.b32.xlu0 %v766, 56
      %v1651 = vpop.permute.xlu0 %1650
      %1652 = vrot.lane.b32.xlu0 %v767, 56
      %v1653 = vpop.permute.xlu0 %1652
      %1654 = vrot.lane.b32.xlu0 %v768, 56
      %v1655 = vpop.permute.xlu0 %1654
      %1656 = vrot.lane.b32.xlu0 %v769, 56
      %v1657 = vpop.permute.xlu0 %1656
      %1658 = vrot.lane.b32.xlu0 %v770, 56
      %v1659 = vpop.permute.xlu0 %1658
      %1660 = vrot.lane.b32.xlu0 %v771, 56
      %v1661 = vpop.permute.xlu0 %1660
      %1662 = vrot.lane.b32.xlu0 %v772, 56
      %v1663 = vpop.permute.xlu0 %1662
      %1664 = vrot.lane.b32.xlu0 %v773, 56
      %v1665 = vpop.permute.xlu0 %1664
      %1666 = vrot.lane.b32.xlu0 %v774, 56
      %v1667 = vpop.permute.xlu0 %1666
      %1668 = vrot.lane.b32.xlu0 %v775, 56
      %v1669 = vpop.permute.xlu0 %1668
      %1670 = vrot.lane.b32.xlu0 %v776, 56
      %v1671 = vpop.permute.xlu0 %1670
      %1672 = vrot.lane.b32.xlu0 %v777, 56
      %v1673 = vpop.permute.xlu0 %1672
      %1738 = vrot.lane.b32.xlu0 %v778, 64
      %v1739 = vpop.permute.xlu0 %1738
      %1740 = vrot.lane.b32.xlu0 %v779, 64
      %v1741 = vpop.permute.xlu0 %1740
      %1742 = vrot.lane.b32.xlu0 %v780, 64
      %v1743 = vpop.permute.xlu0 %1742
      %1744 = vrot.lane.b32.xlu0 %v781, 64
      %v1745 = vpop.permute.xlu0 %1744
      %1746 = vrot.lane.b32.xlu0 %v782, 64
      %v1747 = vpop.permute.xlu0 %1746
      %1748 = vrot.lane.b32.xlu0 %v783, 64
      %v1749 = vpop.permute.xlu0 %1748
      %1750 = vrot.lane.b32.xlu0 %v784, 64
      %v1751 = vpop.permute.xlu0 %1750
      %1752 = vrot.lane.b32.xlu0 %v785, 64
      %v1753 = vpop.permute.xlu0 %1752
      %1754 = vrot.lane.b32.xlu0 %v786, 64
      %v1755 = vpop.permute.xlu0 %1754
      %1756 = vrot.lane.b32.xlu0 %v787, 64
      %v1757 = vpop.permute.xlu0 %1756
      %1758 = vrot.lane.b32.xlu0 %v788, 64
      %v1759 = vpop.permute.xlu0 %1758
      %1760 = vrot.lane.b32.xlu0 %v789, 64
      %v1761 = vpop.permute.xlu0 %1760
      %1762 = vrot.lane.b32.xlu0 %v790, 64
      %v1763 = vpop.permute.xlu0 %1762
      %1764 = vrot.lane.b32.xlu0 %v791, 64
      %v1765 = vpop.permute.xlu0 %1764
      %1766 = vrot.lane.b32.xlu0 %v792, 64
      %v1767 = vpop.permute.xlu0 %1766
      %1768 = vrot.lane.b32.xlu0 %v793, 64
      %v1769 = vpop.permute.xlu0 %1768
      %1770 = vrot.lane.b32.xlu0 %v794, 64
      %v1771 = vpop.permute.xlu0 %1770
      %1772 = vrot.lane.b32.xlu0 %v795, 64
      %v1773 = vpop.permute.xlu0 %1772
      %1774 = vrot.lane.b32.xlu0 %v796, 64
      %v1775 = vpop.permute.xlu0 %1774
      %1776 = vrot.lane.b32.xlu0 %v797, 64
      %v1777 = vpop.permute.xlu0 %1776
      %1778 = vrot.lane.b32.xlu0 %v798, 64
      %v1779 = vpop.permute.xlu0 %1778
      %1780 = vrot.lane.b32.xlu0 %v799, 64
      %v1781 = vpop.permute.xlu0 %1780
      %1782 = vrot.lane.b32.xlu0 %v800, 64
      %v1783 = vpop.permute.xlu0 %1782
      %1784 = vrot.lane.b32.xlu0 %v801, 64
      %v1785 = vpop.permute.xlu0 %1784
      %1786 = vrot.lane.b32.xlu0 %v802, 64
      %v1787 = vpop.permute.xlu0 %1786
      %1788 = vrot.lane.b32.xlu0 %v803, 64
      %v1789 = vpop.permute.xlu0 %1788
      %1790 = vrot.lane.b32.xlu0 %v804, 64
      %v1791 = vpop.permute.xlu0 %1790
      %1792 = vrot.lane.b32.xlu0 %v805, 64
      %v1793 = vpop.permute.xlu0 %1792
      %1794 = vrot.lane.b32.xlu0 %v806, 64
      %v1795 = vpop.permute.xlu0 %1794
      %1796 = vrot.lane.b32.xlu0 %v807, 64
      %v1797 = vpop.permute.xlu0 %1796
      %1798 = vrot.lane.b32.xlu0 %v808, 64
      %v1799 = vpop.permute.xlu0 %1798
      %1800 = vrot.lane.b32.xlu0 %v809, 64
      %v1801 = vpop.permute.xlu0 %1800
      %v1834 = vsel %vm296, %v521, %v843
      %v1835 = vsel %vm296, %v522, %v845
      %v1836 = vsel %vm296, %v523, %v847
      %v1837 = vsel %vm296, %v524, %v849
      %v1838 = vsel %vm296, %v525, %v851
      %v1839 = vsel %vm296, %v526, %v853
      %v1840 = vsel %vm296, %v527, %v855
      %v1841 = vsel %vm296, %v528, %v857
      %v1842 = vsel %vm296, %v529, %v859
      %v1843 = vsel %vm296, %v530, %v861
      %v1844 = vsel %vm296, %v531, %v863
      %v1845 = vsel %vm296, %v532, %v865
      %v1846 = vsel %vm296, %v533, %v867
      %v1847 = vsel %vm296, %v534, %v869
      %v1848 = vsel %vm296, %v535, %v871
      %v1849 = vsel %vm296, %v536, %v873
      %v1850 = vsel %vm296, %v537, %v875
      %v1851 = vsel %vm296, %v538, %v877
      %v1852 = vsel %vm296, %v539, %v879
      %v1853 = vsel %vm296, %v540, %v881
      %v1854 = vsel %vm296, %v541, %v883
      %v1855 = vsel %vm296, %v542, %v885
      %v1856 = vsel %vm296, %v543, %v887
      %v1857 = vsel %vm296, %v544, %v889
      %v1858 = vsel %vm296, %v545, %v891
      %v1859 = vsel %vm296, %v546, %v893
      %v1860 = vsel %vm296, %v547, %v895
      %v1861 = vsel %vm296, %v548, %v897
      %v1862 = vsel %vm296, %v549, %v899
      %v1863 = vsel %vm296, %v550, %v901
      %v1864 = vsel %vm296, %v551, %v903
      %v1865 = vsel %vm296, %v552, %v905
      %vm1866 = vcmask 130048
      %v1867 = vsel %vm1866, %v1834, %v971
      %v1868 = vsel %vm1866, %v1835, %v973
      %v1869 = vsel %vm1866, %v1836, %v975
      %v1870 = vsel %vm1866, %v1837, %v977
      %v1871 = vsel %vm1866, %v1838, %v979
      %v1872 = vsel %vm1866, %v1839, %v981
      %v1873 = vsel %vm1866, %v1840, %v983
      %v1874 = vsel %vm1866, %v1841, %v985
      %v1875 = vsel %vm1866, %v1842, %v987
      %v1876 = vsel %vm1866, %v1843, %v989
      %v1877 = vsel %vm1866, %v1844, %v991
      %v1878 = vsel %vm1866, %v1845, %v993
      %v1879 = vsel %vm1866, %v1846, %v995
      %v1880 = vsel %vm1866, %v1847, %v997
      %v1881 = vsel %vm1866, %v1848, %v999
      %v1882 = vsel %vm1866, %v1849, %v1001
      %v1883 = vsel %vm1866, %v1850, %v1003
      %v1884 = vsel %vm1866, %v1851, %v1005
      %v1885 = vsel %vm1866, %v1852, %v1007
      %v1886 = vsel %vm1866, %v1853, %v1009
      %v1887 = vsel %vm1866, %v1854, %v1011
      %v1888 = vsel %vm1866, %v1855, %v1013
      %v1889 = vsel %vm1866, %v1856, %v1015
      %v1890 = vsel %vm1866, %v1857, %v1017
      %v1891 = vsel %vm1866, %v1858, %v1019
      %v1892 = vsel %vm1866, %v1859, %v1021
      %v1893 = vsel %vm1866, %v1860, %v1023
      %v1894 = vsel %vm1866, %v1861, %v1025
      %v1895 = vsel %vm1866, %v1862, %v1027
      %v1896 = vsel %vm1866, %v1863, %v1029
      %v1897 = vsel %vm1866, %v1864, %v1031
      %v1898 = vsel %vm1866, %v1865, %v1033
      %vm1899 = vcmask 195584
      %v1900 = vsel %vm1899, %v1867, %v1099
      %v1901 = vsel %vm1899, %v1868, %v1101
      %v1902 = vsel %vm1899, %v1869, %v1103
      %v1903 = vsel %vm1899, %v1870, %v1105
      %v1904 = vsel %vm1899, %v1871, %v1107
      %v1905 = vsel %vm1899, %v1872, %v1109
      %v1906 = vsel %vm1899, %v1873, %v1111
      %v1907 = vsel %vm1899, %v1874, %v1113
      %v1908 = vsel %vm1899, %v1875, %v1115
      %v1909 = vsel %vm1899, %v1876, %v1117
      %v1910 = vsel %vm1899, %v1877, %v1119
      %v1911 = vsel %vm1899, %v1878, %v1121
      %v1912 = vsel %vm1899, %v1879, %v1123
      %v1913 = vsel %vm1899, %v1880, %v1125
      %v1914 = vsel %vm1899, %v1881, %v1127
      %v1915 = vsel %vm1899, %v1882, %v1129
      %v1916 = vsel %vm1899, %v1883, %v1131
      %v1917 = vsel %vm1899, %v1884, %v1133
      %v1918 = vsel %vm1899, %v1885, %v1135
      %v1919 = vsel %vm1899, %v1886, %v1137
      %v1920 = vsel %vm1899, %v1887, %v1139
      %v1921 = vsel %vm1899, %v1888, %v1141
      %v1922 = vsel %vm1899, %v1889, %v1143
      %v1923 = vsel %vm1899, %v1890, %v1145
      %v1924 = vsel %vm1899, %v1891, %v1147
      %v1925 = vsel %vm1899, %v1892, %v1149
      %v1926 = vsel %vm1899, %v1893, %v1151
      %v1927 = vsel %vm1899, %v1894, %v1153
      %v1928 = vsel %vm1899, %v1895, %v1155
      %v1929 = vsel %vm1899, %v1896, %v1157
      %v1930 = vsel %vm1899, %v1897, %v1159
      %v1931 = vsel %vm1899, %v1898, %v1161
      %vm1932 = vcmask 261120
      %v1933 = vsel %vm1932, %v1900, %v1227
      %v1934 = vsel %vm1932, %v1901, %v1229
      %v1935 = vsel %vm1932, %v1902, %v1231
      %v1936 = vsel %vm1932, %v1903, %v1233
      %v1937 = vsel %vm1932, %v1904, %v1235
      %v1938 = vsel %vm1932, %v1905, %v1237
      %v1939 = vsel %vm1932, %v1906, %v1239
      %v1940 = vsel %vm1932, %v1907, %v1241
      %v1941 = vsel %vm1932, %v1908, %v1243
      %v1942 = vsel %vm1932, %v1909, %v1245
      %v1943 = vsel %vm1932, %v1910, %v1247
      %v1944 = vsel %vm1932, %v1911, %v1249
      %v1945 = vsel %vm1932, %v1912, %v1251
      %v1946 = vsel %vm1932, %v1913, %v1253
      %v1947 = vsel %vm1932, %v1914, %v1255
      %v1948 = vsel %vm1932, %v1915, %v1257
      %v1949 = vsel %vm1932, %v1916, %v1259
      %v1950 = vsel %vm1932, %v1917, %v1261
      %v1951 = vsel %vm1932, %v1918, %v1263
      %v1952 = vsel %vm1932, %v1919, %v1265
      %v1953 = vsel %vm1932, %v1920, %v1267
      %v1954 = vsel %vm1932, %v1921, %v1269
      %v1955 = vsel %vm1932, %v1922, %v1271
      %v1956 = vsel %vm1932, %v1923, %v1273
      %v1957 = vsel %vm1932, %v1924, %v1275
      %v1958 = vsel %vm1932, %v1925, %v1277
      %v1959 = vsel %vm1932, %v1926, %v1279
      %v1960 = vsel %vm1932, %v1927, %v1281
      %v1961 = vsel %vm1932, %v1928, %v1283
      %v1962 = vsel %vm1932, %v1929, %v1285
      %v1963 = vsel %vm1932, %v1930, %v1287
      %v1964 = vsel %vm1932, %v1931, %v1289
      %vm1965 = vcmask 326656
      %v1966 = vsel %vm1965, %v1933, %v1355
      %v1967 = vsel %vm1965, %v1934, %v1357
      %v1968 = vsel %vm1965, %v1935, %v1359
      %v1969 = vsel %vm1965, %v1936, %v1361
      %v1970 = vsel %vm1965, %v1937, %v1363
      %v1971 = vsel %vm1965, %v1938, %v1365
      %v1972 = vsel %vm1965, %v1939, %v1367
      %v1973 = vsel %vm1965, %v1940, %v1369
      %v1974 = vsel %vm1965, %v1941, %v1371
      %v1975 = vsel %vm1965, %v1942, %v1373
      %v1976 = vsel %vm1965, %v1943, %v1375
      %v1977 = vsel %vm1965, %v1944, %v1377
      %v1978 = vsel %vm1965, %v1945, %v1379
      %v1979 = vsel %vm1965, %v1946, %v1381
      %v1980 = vsel %vm1965, %v1947, %v1383
      %v1981 = vsel %vm1965, %v1948, %v1385
      %v1982 = vsel %vm1965, %v1949, %v1387
      %v1983 = vsel %vm1965, %v1950, %v1389
      %v1984 = vsel %vm1965, %v1951, %v1391
      %v1985 = vsel %vm1965, %v1952, %v1393
      %v1986 = vsel %vm1965, %v1953, %v1395
      %v1987 = vsel %vm1965, %v1954, %v1397
      %v1988 = vsel %vm1965, %v1955, %v1399
      %v1989 = vsel %vm1965, %v1956, %v1401
      %v1990 = vsel %vm1965, %v1957, %v1403
      %v1991 = vsel %vm1965, %v1958, %v1405
      %v1992 = vsel %vm1965, %v1959, %v1407
      %v1993 = vsel %vm1965, %v1960, %v1409
      %v1994 = vsel %vm1965, %v1961, %v1411
      %v1995 = vsel %vm1965, %v1962, %v1413
      %v1996 = vsel %vm1965, %v1963, %v1415
      %v1997 = vsel %vm1965, %v1964, %v1417
      %vm1998 = vcmask 392192
      %v1999 = vsel %vm1998, %v1966, %v1483
      %v2000 = vsel %vm1998, %v1967, %v1485
      %v2001 = vsel %vm1998, %v1968, %v1487
      %v2002 = vsel %vm1998, %v1969, %v1489
      %v2003 = vsel %vm1998, %v1970, %v1491
      %v2004 = vsel %vm1998, %v1971, %v1493
      %v2005 = vsel %vm1998, %v1972, %v1495
      %v2006 = vsel %vm1998, %v1973, %v1497
      %v2007 = vsel %vm1998, %v1974, %v1499
      %v2008 = vsel %vm1998, %v1975, %v1501
      %v2009 = vsel %vm1998, %v1976, %v1503
      %v2010 = vsel %vm1998, %v1977, %v1505
      %v2011 = vsel %vm1998, %v1978, %v1507
      %v2012 = vsel %vm1998, %v1979, %v1509
      %v2013 = vsel %vm1998, %v1980, %v1511
      %v2014 = vsel %vm1998, %v1981, %v1513
      %v2015 = vsel %vm1998, %v1982, %v1515
      %v2016 = vsel %vm1998, %v1983, %v1517
      %v2017 = vsel %vm1998, %v1984, %v1519
      %v2018 = vsel %vm1998, %v1985, %v1521
      %v2019 = vsel %vm1998, %v1986, %v1523
      %v2020 = vsel %vm1998, %v1987, %v1525
      %v2021 = vsel %vm1998, %v1988, %v1527
      %v2022 = vsel %vm1998, %v1989, %v1529
      %v2023 = vsel %vm1998, %v1990, %v1531
      %v2024 = vsel %vm1998, %v1991, %v1533
      %v2025 = vsel %vm1998, %v1992, %v1535
      %v2026 = vsel %vm1998, %v1993, %v1537
      %v2027 = vsel %vm1998, %v1994, %v1539
      %v2028 = vsel %vm1998, %v1995, %v1541
      %v2029 = vsel %vm1998, %v1996, %v1543
      %v2030 = vsel %vm1998, %v1997, %v1545
      %vm2031 = vcmask 457728
      %v2032 = vsel %vm2031, %v1999, %v1611
      %v2033 = vsel %vm2031, %v2000, %v1613
      %v2034 = vsel %vm2031, %v2001, %v1615
      %v2035 = vsel %vm2031, %v2002, %v1617
      %v2036 = vsel %vm2031, %v2003, %v1619
      %v2037 = vsel %vm2031, %v2004, %v1621
      %v2038 = vsel %vm2031, %v2005, %v1623
      %v2039 = vsel %vm2031, %v2006, %v1625
      %v2040 = vsel %vm2031, %v2007, %v1627
      %v2041 = vsel %vm2031, %v2008, %v1629
      %v2042 = vsel %vm2031, %v2009, %v1631
      %v2043 = vsel %vm2031, %v2010, %v1633
      %v2044 = vsel %vm2031, %v2011, %v1635
      %v2045 = vsel %vm2031, %v2012, %v1637
      %v2046 = vsel %vm2031, %v2013, %v1639
      %v2047 = vsel %vm2031, %v2014, %v1641
      %v2048 = vsel %vm2031, %v2015, %v1643
      %v2049 = vsel %vm2031, %v2016, %v1645
      %v2050 = vsel %vm2031, %v2017, %v1647
      %v2051 = vsel %vm2031, %v2018, %v1649
      %v2052 = vsel %vm2031, %v2019, %v1651
      %v2053 = vsel %vm2031, %v2020, %v1653
      %v2054 = vsel %vm2031, %v2021, %v1655
      %v2055 = vsel %vm2031, %v2022, %v1657
      %v2056 = vsel %vm2031, %v2023, %v1659
      %v2057 = vsel %vm2031, %v2024, %v1661
      %v2058 = vsel %vm2031, %v2025, %v1663
      %v2059 = vsel %vm2031, %v2026, %v1665
      %v2060 = vsel %vm2031, %v2027, %v1667
      %v2061 = vsel %vm2031, %v2028, %v1669
      %v2062 = vsel %vm2031, %v2029, %v1671
      %v2063 = vsel %vm2031, %v2030, %v1673
      %vm2064 = vcmask 523264
      %v2065 = vsel %vm2064, %v2032, %v1739
      %v2066 = vsel %vm2064, %v2033, %v1741
      %v2067 = vsel %vm2064, %v2034, %v1743
      %v2068 = vsel %vm2064, %v2035, %v1745
      %v2069 = vsel %vm2064, %v2036, %v1747
      %v2070 = vsel %vm2064, %v2037, %v1749
      %v2071 = vsel %vm2064, %v2038, %v1751
      %v2072 = vsel %vm2064, %v2039, %v1753
      %v2073 = vsel %vm2064, %v2040, %v1755
      %v2074 = vsel %vm2064, %v2041, %v1757
      %v2075 = vsel %vm2064, %v2042, %v1759
      %v2076 = vsel %vm2064, %v2043, %v1761
      %v2077 = vsel %vm2064, %v2044, %v1763
      %v2078 = vsel %vm2064, %v2045, %v1765
      %v2079 = vsel %vm2064, %v2046, %v1767
      %v2080 = vsel %vm2064, %v2047, %v1769
      %v2081 = vsel %vm2064, %v2048, %v1771
      %v2082 = vsel %vm2064, %v2049, %v1773
      %v2083 = vsel %vm2064, %v2050, %v1775
      %v2084 = vsel %vm2064, %v2051, %v1777
      %v2085 = vsel %vm2064, %v2052, %v1779
      %v2086 = vsel %vm2064, %v2053, %v1781
      %v2087 = vsel %vm2064, %v2054, %v1783
      %v2088 = vsel %vm2064, %v2055, %v1785
      %v2089 = vsel %vm2064, %v2056, %v1787
      %v2090 = vsel %vm2064, %v2057, %v1789
      %v2091 = vsel %vm2064, %v2058, %v1791
      %v2092 = vsel %vm2064, %v2059, %v1793
      %v2093 = vsel %vm2064, %v2060, %v1795
      %v2094 = vsel %vm2064, %v2061, %v1797
      %v2095 = vsel %vm2064, %v2062, %v1799
      %v2096 = vsel %vm2064, %v2063, %v1801
      %v2097 = vld [vmem:[%s3] sm:$0xff]
      %v2098 = vld [vmem:[%s3 + $0x8] sm:$0xff]
      %v2099 = vld [vmem:[%s3 + $0x10] sm:$0xff]
      %v2100 = vld [vmem:[%s3 + $0x18] sm:$0xff]
      %v2101 = vld [vmem:[%s3 + $0x20] sm:$0xff]
      %v2102 = vld [vmem:[%s3 + $0x28] sm:$0xff]
      %v2103 = vld [vmem:[%s3 + $0x30] sm:$0xff]
      %v2104 = vld [vmem:[%s3 + $0x38] sm:$0xff]
      %v2105 = vld [vmem:[%s3 + $0x40] sm:$0xff]
      %v2106 = vld [vmem:[%s4] sm:$0x1]
      %v2108 = vperm.slane %v2106, 0
      %vm2110 = vcmask 588800
      %v2112 = vsel %vm2110, %v2065, 0
      %v2115 = vsel %vm2110, %v2066, 0
      %v2118 = vsel %vm2110, %v2067, 0
      %v2121 = vsel %vm2110, %v2068, 0
      %v2124 = vsel %vm2110, %v2069, 0
      %v2127 = vsel %vm2110, %v2070, 0
      %v2130 = vsel %vm2110, %v2071, 0
      %v2133 = vsel %vm2110, %v2072, 0
      %v2136 = vsel %vm2110, %v2073, 0
      %v2139 = vsel %vm2110, %v2074, 0
      %v2142 = vsel %vm2110, %v2075, 0
      %v2145 = vsel %vm2110, %v2076, 0
      %v2148 = vsel %vm2110, %v2077, 0
      %v2151 = vsel %vm2110, %v2078, 0
      %v2154 = vsel %vm2110, %v2079, 0
      %v2157 = vsel %vm2110, %v2080, 0
      %v2160 = vsel %vm2110, %v2081, 0
      %v2163 = vsel %vm2110, %v2082, 0
      %v2166 = vsel %vm2110, %v2083, 0
      %v2169 = vsel %vm2110, %v2084, 0
      %v2172 = vsel %vm2110, %v2085, 0
      %v2175 = vsel %vm2110, %v2086, 0
      %v2178 = vsel %vm2110, %v2087, 0
      %v2181 = vsel %vm2110, %v2088, 0
      %v2184 = vsel %vm2110, %v2089, 0
      %v2187 = vsel %vm2110, %v2090, 0
      %v2190 = vsel %vm2110, %v2091, 0
      %v2193 = vsel %vm2110, %v2092, 0
      %v2196 = vsel %vm2110, %v2093, 0
      %v2199 = vsel %vm2110, %v2094, 0
      %v2202 = vsel %vm2110, %v2095, 0
      %v2205 = vsel %vm2110, %v2096, 0
      %2207 = vmatpush.msra.mxu0 0.0
      %2208 = vmatpush.msra.mxu0 0.0
      %2209 = vmatpush.msra.mxu0 0.0
      %2210 = vmatpush.msra.mxu0 0.0
      %2211 = vmatpush.msra.mxu0 0.0
      %2212 = vmatpush.msra.mxu0 0.0
      %2213 = vmatpush.msra.mxu0 0.0
      %2214 = vmatpush.msra.mxu0 %v2105
      %2215 = vmatpush.msra.mxu0 %v2104
      %2216 = vmatpush.msra.mxu0 %v2103
      %2217 = vmatpush.msra.mxu0 %v2102
      %2218 = vmatpush.msra.mxu0 %v2101
      %2219 = vmatpush.msra.mxu0 %v2100
      %2220 = vmatpush.msra.mxu0 %v2099
      %2221 = vmatpush.msra.mxu0 %v2098
      %2222 = vmatpush.msra.mxu0 %v2097
      %2223 = vmatmul.f32.gmra.mxu0 %v2112
      %v2224 = vpop.f32.mrf.mxu0
      %v2225 = vadd.f32 %v2108, %v2224
      %2226 = vmatmul.f32.gmra.mxu0 %v2115
      %v2227 = vpop.f32.mrf.mxu0
      %v2228 = vadd.f32 %v2108, %v2227
      %2229 = vmatmul.f32.gmra.mxu0 %v2118
      %v2230 = vpop.f32.mrf.mxu0
      %v2231 = vadd.f32 %v2108, %v2230
      %2232 = vmatmul.f32.gmra.mxu0 %v2121
      %v2233 = vpop.f32.mrf.mxu0
      %v2234 = vadd.f32 %v2108, %v2233
      %2235 = vmatmul.f32.gmra.mxu0 %v2124
      %v2236 = vpop.f32.mrf.mxu0
      %v2237 = vadd.f32 %v2108, %v2236
      %2238 = vmatmul.f32.gmra.mxu0 %v2127
      %v2239 = vpop.f32.mrf.mxu0
      %v2240 = vadd.f32 %v2108, %v2239
      %2241 = vmatmul.f32.gmra.mxu0 %v2130
      %v2242 = vpop.f32.mrf.mxu0
      %v2243 = vadd.f32 %v2108, %v2242
      %2244 = vmatmul.f32.gmra.mxu0 %v2133
      %v2245 = vpop.f32.mrf.mxu0
      %v2246 = vadd.f32 %v2108, %v2245
      %2247 = vmatmul.f32.gmra.mxu0 %v2136
      %v2248 = vpop.f32.mrf.mxu0
      %v2249 = vadd.f32 %v2108, %v2248
      %2250 = vmatmul.f32.gmra.mxu0 %v2139
      %v2251 = vpop.f32.mrf.mxu0
      %v2252 = vadd.f32 %v2108, %v2251
      %2253 = vmatmul.f32.gmra.mxu0 %v2142
      %v2254 = vpop.f32.mrf.mxu0
      %v2255 = vadd.f32 %v2108, %v2254
      %2256 = vmatmul.f32.gmra.mxu0 %v2145
      %v2257 = vpop.f32.mrf.mxu0
      %v2258 = vadd.f32 %v2108, %v2257
      %2259 = vmatmul.f32.gmra.mxu0 %v2148
      %v2260 = vpop.f32.mrf.mxu0
      %v2261 = vadd.f32 %v2108, %v2260
      %2262 = vmatmul.f32.gmra.mxu0 %v2151
      %v2263 = vpop.f32.mrf.mxu0
      %v2264 = vadd.f32 %v2108, %v2263
      %2265 = vmatmul.f32.gmra.mxu0 %v2154
      %v2266 = vpop.f32.mrf.mxu0
      %v2267 = vadd.f32 %v2108, %v2266
      %2268 = vmatmul.f32.gmra.mxu0 %v2157
      %v2269 = vpop.f32.mrf.mxu0
      %v2270 = vadd.f32 %v2108, %v2269
      %2271 = vmatmul.f32.gmra.mxu0 %v2160
      %v2272 = vpop.f32.mrf.mxu0
      %v2273 = vadd.f32 %v2108, %v2272
      %2274 = vmatmul.f32.gmra.mxu0 %v2163
      %v2275 = vpop.f32.mrf.mxu0
      %v2276 = vadd.f32 %v2108, %v2275
      %2277 = vmatmul.f32.gmra.mxu0 %v2166
      %v2278 = vpop.f32.mrf.mxu0
      %v2279 = vadd.f32 %v2108, %v2278
      %2280 = vmatmul.f32.gmra.mxu0 %v2169
      %v2281 = vpop.f32.mrf.mxu0
      %v2282 = vadd.f32 %v2108, %v2281
      %2283 = vmatmul.f32.gmra.mxu0 %v2172
      %v2284 = vpop.f32.mrf.mxu0
      %v2285 = vadd.f32 %v2108, %v2284
      %2286 = vmatmul.f32.gmra.mxu0 %v2175
      %v2287 = vpop.f32.mrf.mxu0
      %v2288 = vadd.f32 %v2108, %v2287
      %2289 = vmatmul.f32.gmra.mxu0 %v2178
      %v2290 = vpop.f32.mrf.mxu0
      %v2291 = vadd.f32 %v2108, %v2290
      %2292 = vmatmul.f32.gmra.mxu0 %v2181
      %v2293 = vpop.f32.mrf.mxu0
      %v2294 = vadd.f32 %v2108, %v2293
      %2295 = vmatmul.f32.gmra.mxu0 %v2184
      %v2296 = vpop.f32.mrf.mxu0
      %v2297 = vadd.f32 %v2108, %v2296
      %2298 = vmatmul.f32.gmra.mxu0 %v2187
      %v2299 = vpop.f32.mrf.mxu0
      %v2300 = vadd.f32 %v2108, %v2299
      %2301 = vmatmul.f32.gmra.mxu0 %v2190
      %v2302 = vpop.f32.mrf.mxu0
      %v2303 = vadd.f32 %v2108, %v2302
      %2304 = vmatmul.f32.gmra.mxu0 %v2193
      %v2305 = vpop.f32.mrf.mxu0
      %v2306 = vadd.f32 %v2108, %v2305
      %2307 = vmatmul.f32.gmra.mxu0 %v2196
      %v2308 = vpop.f32.mrf.mxu0
      %v2309 = vadd.f32 %v2108, %v2308
      %2310 = vmatmul.f32.gmra.mxu0 %v2199
      %v2311 = vpop.f32.mrf.mxu0
      %v2312 = vadd.f32 %v2108, %v2311
      %2313 = vmatmul.f32.gmra.mxu0 %v2202
      %v2314 = vpop.f32.mrf.mxu0
      %v2315 = vadd.f32 %v2108, %v2314
      %2316 = vmatmul.f32.gmra.mxu0 %v2205
      %v2317 = vpop.f32.mrf.mxu0
      %v2318 = vadd.f32 %v2108, %v2317
      %2319 = vdwg.mxu0
      %2320 = vst.msk [vmem:[%s289] sm:$0xff] %vm296, %v2225
      %2321 = vst.msk [vmem:[%s289 + $0x8] sm:$0xff] %vm296, %v2228
      %2322 = vst.msk [vmem:[%s289 + $0x10] sm:$0xff] %vm296, %v2231
      %2323 = vst.msk [vmem:[%s289 + $0x18] sm:$0xff] %vm296, %v2234
      %2324 = vst.msk [vmem:[%s289 + $0x20] sm:$0xff] %vm296, %v2237
      %2325 = vst.msk [vmem:[%s289 + $0x28] sm:$0xff] %vm296, %v2240
      %2326 = vst.msk [vmem:[%s289 + $0x30] sm:$0xff] %vm296, %v2243
      %2327 = vst.msk [vmem:[%s289 + $0x38] sm:$0xff] %vm296, %v2246
      %2328 = vst.msk [vmem:[%s289 + $0x40] sm:$0xff] %vm296, %v2249
      %2329 = vst.msk [vmem:[%s289 + $0x48] sm:$0xff] %vm296, %v2252
      %2330 = vst.msk [vmem:[%s289 + $0x50] sm:$0xff] %vm296, %v2255
      %2331 = vst.msk [vmem:[%s289 + $0x58] sm:$0xff] %vm296, %v2258
      %2332 = vst.msk [vmem:[%s289 + $0x60] sm:$0xff] %vm296, %v2261
      %2333 = vst.msk [vmem:[%s289 + $0x68] sm:$0xff] %vm296, %v2264
      %2334 = vst.msk [vmem:[%s289 + $0x70] sm:$0xff] %vm296, %v2267
      %2335 = vst.msk [vmem:[%s289 + $0x78] sm:$0xff] %vm296, %v2270
      %2336 = vst.msk [vmem:[%s289 + $0x80] sm:$0xff] %vm296, %v2273
      %2337 = vst.msk [vmem:[%s289 + $0x88] sm:$0xff] %vm296, %v2276
      %2338 = vst.msk [vmem:[%s289 + $0x90] sm:$0xff] %vm296, %v2279
      %2339 = vst.msk [vmem:[%s289 + $0x98] sm:$0xff] %vm296, %v2282
      %2340 = vst.msk [vmem:[%s289 + $0xa0] sm:$0xff] %vm296, %v2285
      %2341 = vst.msk [vmem:[%s289 + $0xa8] sm:$0xff] %vm296, %v2288
      %2342 = vst.msk [vmem:[%s289 + $0xb0] sm:$0xff] %vm296, %v2291
      %2343 = vst.msk [vmem:[%s289 + $0xb8] sm:$0xff] %vm296, %v2294
      %2344 = vst.msk [vmem:[%s289 + $0xc0] sm:$0xff] %vm296, %v2297
      %2345 = vst.msk [vmem:[%s289 + $0xc8] sm:$0xff] %vm296, %v2300
      %2346 = vst.msk [vmem:[%s289 + $0xd0] sm:$0xff] %vm296, %v2303
      %2347 = vst.msk [vmem:[%s289 + $0xd8] sm:$0xff] %vm296, %v2306
      %2348 = vst.msk [vmem:[%s289 + $0xe0] sm:$0xff] %vm296, %v2309
      %2349 = vst.msk [vmem:[%s289 + $0xe8] sm:$0xff] %vm296, %v2312
      %2350 = vst.msk [vmem:[%s289 + $0xf0] sm:$0xff] %vm296, %v2315
      %2351 = vst.msk [vmem:[%s289 + $0xf8] sm:$0xff] %vm296, %v2318
      %v2352 = vsel %vm296, %v2225, 0.0
      %v2353 = vsel %vm296, %v2228, 0.0
      %v2354 = vadd.f32 %v2352, %v2353
      %v2355 = vsel %vm296, %v2231, 0.0
      %v2356 = vadd.f32 %v2354, %v2355
      %v2357 = vsel %vm296, %v2234, 0.0
      %v2358 = vadd.f32 %v2356, %v2357
      %v2359 = vsel %vm296, %v2237, 0.0
      %v2360 = vadd.f32 %v2358, %v2359
      %v2361 = vsel %vm296, %v2240, 0.0
      %v2362 = vadd.f32 %v2360, %v2361
      %v2363 = vsel %vm296, %v2243, 0.0
      %v2364 = vadd.f32 %v2362, %v2363
      %v2365 = vsel %vm296, %v2246, 0.0
      %v2366 = vadd.f32 %v2364, %v2365
      %v2367 = vsel %vm296, %v2249, 0.0
      %v2368 = vadd.f32 %v2366, %v2367
      %v2369 = vsel %vm296, %v2252, 0.0
      %v2370 = vadd.f32 %v2368, %v2369
      %v2371 = vsel %vm296, %v2255, 0.0
      %v2372 = vadd.f32 %v2370, %v2371
      %v2373 = vsel %vm296, %v2258, 0.0
      %v2374 = vadd.f32 %v2372, %v2373
      %v2375 = vsel %vm296, %v2261, 0.0
      %v2376 = vadd.f32 %v2374, %v2375
      %v2377 = vsel %vm296, %v2264, 0.0
      %v2378 = vadd.f32 %v2376, %v2377
      %v2379 = vsel %vm296, %v2267, 0.0
      %v2380 = vadd.f32 %v2378, %v2379
      %v2381 = vsel %vm296, %v2270, 0.0
      %v2382 = vadd.f32 %v2380, %v2381
      %v2383 = vsel %vm296, %v2273, 0.0
      %v2384 = vadd.f32 %v2382, %v2383
      %v2385 = vsel %vm296, %v2276, 0.0
      %v2386 = vadd.f32 %v2384, %v2385
      %v2387 = vsel %vm296, %v2279, 0.0
      %v2388 = vadd.f32 %v2386, %v2387
      %v2389 = vsel %vm296, %v2282, 0.0
      %v2390 = vadd.f32 %v2388, %v2389
      %v2391 = vsel %vm296, %v2285, 0.0
      %v2392 = vadd.f32 %v2390, %v2391
      %v2393 = vsel %vm296, %v2288, 0.0
      %v2394 = vadd.f32 %v2392, %v2393
      %v2395 = vsel %vm296, %v2291, 0.0
      %v2396 = vadd.f32 %v2394, %v2395
      %v2397 = vsel %vm296, %v2294, 0.0
      %v2398 = vadd.f32 %v2396, %v2397
      %v2399 = vsel %vm296, %v2297, 0.0
      %v2400 = vadd.f32 %v2398, %v2399
      %v2401 = vsel %vm296, %v2300, 0.0
      %v2402 = vadd.f32 %v2400, %v2401
      %v2403 = vsel %vm296, %v2303, 0.0
      %v2404 = vadd.f32 %v2402, %v2403
      %v2405 = vsel %vm296, %v2306, 0.0
      %v2406 = vadd.f32 %v2404, %v2405
      %v2407 = vsel %vm296, %v2309, 0.0
      %v2408 = vadd.f32 %v2406, %v2407
      %v2409 = vsel %vm296, %v2312, 0.0
      %v2410 = vadd.f32 %v2408, %v2409
      %v2411 = vsel %vm296, %v2315, 0.0
      %v2412 = vadd.f32 %v2410, %v2411
      %v2413 = vsel %vm296, %v2318, 0.0
      %v2414 = vadd.f32 %v2412, %v2413
      %v2415 = vrot.slane %v2414, 4
      %v2416 = vadd.f32 %v2414, %v2415
      %v2417 = vrot.slane %v2416, 2
      %v2418 = vadd.f32 %v2416, %v2417
      %v2419 = vrot.slane %v2418, 1
      %v2420 = vadd.f32 %v2418, %v2419
      %vm2421 = vcmask 57344
      %2422 = vst.msk [vmem:[%s292] sm:$0x1] %vm2421, %v2420
      %v2423 = vmul.f32 %v2225, %v2225
      %v2424 = vmul.f32 %v2228, %v2228
      %v2425 = vmul.f32 %v2231, %v2231
      %v2426 = vmul.f32 %v2234, %v2234
      %v2427 = vmul.f32 %v2237, %v2237
      %v2428 = vmul.f32 %v2240, %v2240
      %v2429 = vmul.f32 %v2243, %v2243
      %v2430 = vmul.f32 %v2246, %v2246
      %v2431 = vmul.f32 %v2249, %v2249
      %v2432 = vmul.f32 %v2252, %v2252
      %v2433 = vmul.f32 %v2255, %v2255
      %v2434 = vmul.f32 %v2258, %v2258
      %v2435 = vmul.f32 %v2261, %v2261
      %v2436 = vmul.f32 %v2264, %v2264
      %v2437 = vmul.f32 %v2267, %v2267
      %v2438 = vmul.f32 %v2270, %v2270
      %v2439 = vmul.f32 %v2273, %v2273
      %v2440 = vmul.f32 %v2276, %v2276
      %v2441 = vmul.f32 %v2279, %v2279
      %v2442 = vmul.f32 %v2282, %v2282
      %v2443 = vmul.f32 %v2285, %v2285
      %v2444 = vmul.f32 %v2288, %v2288
      %v2445 = vmul.f32 %v2291, %v2291
      %v2446 = vmul.f32 %v2294, %v2294
      %v2447 = vmul.f32 %v2297, %v2297
      %v2448 = vmul.f32 %v2300, %v2300
      %v2449 = vmul.f32 %v2303, %v2303
      %v2450 = vmul.f32 %v2306, %v2306
      %v2451 = vmul.f32 %v2309, %v2309
      %v2452 = vmul.f32 %v2312, %v2312
      %v2453 = vmul.f32 %v2315, %v2315
      %v2454 = vmul.f32 %v2318, %v2318
      %v2455 = vsel %vm296, %v2423, 0.0
      %v2456 = vsel %vm296, %v2424, 0.0
      %v2457 = vadd.f32 %v2455, %v2456
      %v2458 = vsel %vm296, %v2425, 0.0
      %v2459 = vadd.f32 %v2457, %v2458
      %v2460 = vsel %vm296, %v2426, 0.0
      %v2461 = vadd.f32 %v2459, %v2460
      %v2462 = vsel %vm296, %v2427, 0.0
      %v2463 = vadd.f32 %v2461, %v2462
      %v2464 = vsel %vm296, %v2428, 0.0
      %v2465 = vadd.f32 %v2463, %v2464
      %v2466 = vsel %vm296, %v2429, 0.0
      %v2467 = vadd.f32 %v2465, %v2466
      %v2468 = vsel %vm296, %v2430, 0.0
      %v2469 = vadd.f32 %v2467, %v2468
      %v2470 = vsel %vm296, %v2431, 0.0
      %v2471 = vadd.f32 %v2469, %v2470
      %v2472 = vsel %vm296, %v2432, 0.0
      %v2473 = vadd.f32 %v2471, %v2472
      %v2474 = vsel %vm296, %v2433, 0.0
      %v2475 = vadd.f32 %v2473, %v2474
      %v2476 = vsel %vm296, %v2434, 0.0
      %v2477 = vadd.f32 %v2475, %v2476
      %v2478 = vsel %vm296, %v2435, 0.0
      %v2479 = vadd.f32 %v2477, %v2478
      %v2480 = vsel %vm296, %v2436, 0.0
      %v2481 = vadd.f32 %v2479, %v2480
      %v2482 = vsel %vm296, %v2437, 0.0
      %v2483 = vadd.f32 %v2481, %v2482
      %v2484 = vsel %vm296, %v2438, 0.0
      %v2485 = vadd.f32 %v2483, %v2484
      %v2486 = vsel %vm296, %v2439, 0.0
      %v2487 = vadd.f32 %v2485, %v2486
      %v2488 = vsel %vm296, %v2440, 0.0
      %v2489 = vadd.f32 %v2487, %v2488
      %v2490 = vsel %vm296, %v2441, 0.0
      %v2491 = vadd.f32 %v2489, %v2490
      %v2492 = vsel %vm296, %v2442, 0.0
      %v2493 = vadd.f32 %v2491, %v2492
      %v2494 = vsel %vm296, %v2443, 0.0
      %v2495 = vadd.f32 %v2493, %v2494
      %v2496 = vsel %vm296, %v2444, 0.0
      %v2497 = vadd.f32 %v2495, %v2496
      %v2498 = vsel %vm296, %v2445, 0.0
      %v2499 = vadd.f32 %v2497, %v2498
      %v2500 = vsel %vm296, %v2446, 0.0
      %v2501 = vadd.f32 %v2499, %v2500
      %v2502 = vsel %vm296, %v2447, 0.0
      %v2503 = vadd.f32 %v2501, %v2502
      %v2504 = vsel %vm296, %v2448, 0.0
      %v2505 = vadd.f32 %v2503, %v2504
      %v2506 = vsel %vm296, %v2449, 0.0
      %v2507 = vadd.f32 %v2505, %v2506
      %v2508 = vsel %vm296, %v2450, 0.0
      %v2509 = vadd.f32 %v2507, %v2508
      %v2510 = vsel %vm296, %v2451, 0.0
      %v2511 = vadd.f32 %v2509, %v2510
      %v2512 = vsel %vm296, %v2452, 0.0
      %v2513 = vadd.f32 %v2511, %v2512
      %v2514 = vsel %vm296, %v2453, 0.0
      %v2515 = vadd.f32 %v2513, %v2514
      %v2516 = vsel %vm296, %v2454, 0.0
      %v2517 = vadd.f32 %v2515, %v2516
      %v2518 = vrot.slane %v2517, 4
      %v2519 = vadd.f32 %v2517, %v2518
      %v2520 = vrot.slane %v2519, 2
      %v2521 = vadd.f32 %v2519, %v2520
      %v2522 = vrot.slane %v2521, 1
      %v2523 = vadd.f32 %v2521, %v2522
      %2524 = vst.msk [vmem:[%s295] sm:$0x1] %vm2421, %v2523
      %p2525 = scmp.lt.s32.totalorder %s19, 1
      %s2526 = scalar_select %p2525, %s19, 1
      %s2527 = smul.addr %s2526, 32
      %s2528 = smul.addr %s2527, 8
      %s2529 = scalar_lea.vmem %s5, %s2528
      %p2530 = scmp.lt.s32.totalorder %s19, 1
      %s2531 = scalar_select %p2530, %s19, 1
      %s2532 = scalar_lea.vmem %s6, %s2531
      %p2533 = scmp.lt.s32.totalorder %s19, 1
      %s2534 = scalar_select %p2533, %s19, 1
      %s2535 = scalar_lea.vmem %s7, %s2534
      // Predicated region
      $region41: #{nested_up_forward.4} parent=39 // pred_check
        %p2536 = pneg %p147
      $region42: #{nested_up_forward.4} parent=39 // pred_check_branch
        %2538 = sbr.rel (%p2536) target = $region44
      $region43: #{nested_up_forward.4} parent=39 // pred_region
        _
      $region44: #{nested_up_forward.4} parent=39 // pred_fallthru
        _
      // Predicated region
      $region45: #{nested_up_forward.4} parent=39 // pred_check
        %p2539 = pneg %p173
      $region46: #{nested_up_forward.4} parent=39 // pred_check_branch
        %2541 = sbr.rel (%p2539) target = $region48
      $region47: #{nested_up_forward.4} parent=39 // pred_region
        _
      $region48: #{nested_up_forward.4} parent=39 // pred_fallthru
        _
      // Predicated region
      $region49: #{nested_up_forward.4} parent=39 // pred_check
        %p2542 = pneg %p199
      $region50: #{nested_up_forward.4} parent=39 // pred_check_branch
        %2544 = sbr.rel (%p2542) target = $region52
      $region51: #{nested_up_forward.4} parent=39 // pred_region
        _
      $region52: #{nested_up_forward.4} parent=39 // pred_fallthru
        _
    $region40: #{nested_up_forward.4} parent=5 // pred_fallthru
      _
    %p2545 = scmp.le.s32.totalorder 2, %s14
    // Predicated region
    $region53: #{nested_up_forward.4} parent=5 // pred_check
      %p2546 = pneg %p2545
    $region54: #{nested_up_forward.4} parent=5 // pred_check_branch
      %2548 = sbr.rel (%p2546) target = $region56
    $region55: #{nested_up_forward.4} parent=5 // pred_region
      %s2549 = ssub.s32 %s14, 2
      // Predicated region
      $region57: #{nested_up_forward.4} parent=55 // pred_check
        %p2550 = pneg %p153
      $region58: #{nested_up_forward.4} parent=55 // pred_check_branch
        %2552 = sbr.rel (%p2550) target = $region60
      $region59: #{nested_up_forward.4} parent=55 // pred_region
        %p2553 = scmp.lt.s32.totalorder %s20, 1
        %s2554 = scalar_select %p2553, %s20, 1
        %s2555 = smul.addr %s2554, 32
        %s2556 = smul.addr %s2555, 8
        %s2557 = scalar_lea.vmem %s5, %s2556
      $region60: #{nested_up_forward.4} parent=55 // pred_fallthru
        _
      // Predicated region
      $region61: #{nested_up_forward.4} parent=55 // pred_check
        %p2558 = pneg %p179
      $region62: #{nested_up_forward.4} parent=55 // pred_check_branch
        %2560 = sbr.rel (%p2558) target = $region64
      $region63: #{nested_up_forward.4} parent=55 // pred_region
        %p2561 = scmp.lt.s32.totalorder %s20, 1
        %s2562 = scalar_select %p2561, %s20, 1
        %s2563 = scalar_lea.vmem %s6, %s2562
      $region64: #{nested_up_forward.4} parent=55 // pred_fallthru
        _
      // Predicated region
      $region65: #{nested_up_forward.4} parent=55 // pred_check
        %p2564 = pneg %p205
      $region66: #{nested_up_forward.4} parent=55 // pred_check_branch
        %2566 = sbr.rel (%p2564) target = $region68
      $region67: #{nested_up_forward.4} parent=55 // pred_region
        %p2567 = scmp.lt.s32.totalorder %s20, 1
        %s2568 = scalar_select %p2567, %s20, 1
        %s2569 = scalar_lea.vmem %s7, %s2568
      $region68: #{nested_up_forward.4} parent=55 // pred_fallthru
        _
    $region56: #{nested_up_forward.4} parent=5 // pred_fallthru
      _
  $region6: #{nested_up_forward.4} parent=0 // loop_footer
    %s18 = sadd.s32 1, %s14
  $region7: #{nested_up_forward.4} parent=0 // loop_footer_branch
    %13 = sbr.rel target = $region3
  $region8: #{nested_up_forward.4} parent=0 // loop_exit
    _

// kernel: nested_up_forward.3
$region0: #{nested_up_forward.3}
  #allocation0 [shape = 'u32[]', space=smem, size = 0x4, offset = 0x4, fixed_abs, tag = 'smem constant byte address 0x4 - core index']
  #allocation1 [shape = 'u32[72,128]{1,0:T(1,128)}', space=vmem, size = 0x9000, scoped, tag = 'internal scratch']
  #allocation2 [shape = 'f32[18,18,12]{2,1,0:T(8,128)}', space=vmem, size = 0x36000, scoped, tag = 'scratch operand']
  %s0 = inlined_call_operand.vmem [shape: f32[2,16,16,4], index: 0, kind: input, shape index: {}]
  %s1 = inlined_call_operand.vmem [shape: f32[2,8,8,8], index: 1, kind: input, shape index: {}]
  %s2 = inlined_call_operand.vmem [shape: f32[256,64], index: 2, kind: input, shape index: {}]
  %s3 = inlined_call_operand.vmem [shape: f32[108,8], index: 3, kind: input, shape index: {}]
  %s4 = inlined_call_operand.vmem [shape: f32[1,8], index: 4, kind: input, shape index: {}]
  %s5 = inlined_call_operand.vmem [shape: f32[2,256,8], index: 5, kind: output, shape index: {0}]
  %s6 = inlined_call_operand.vmem [shape: f32[2,1,8], index: 6, kind: output, shape index: {1}]
  %s7 = inlined_call_operand.vmem [shape: f32[2,1,8], index: 7, kind: output, shape index: {2}]
  %8 = xla_tuple %s5, %s6, %s7
  %s9 = sld [smem:[#allocation0]]
  $region69: #{nested_up_forward.3} parent=0
    _
  %s11 = ssub.s32 1, %s9
  %s12 = scalar_select 0, %s11, %s9
  loop: start=0, step=1, limit=4
  $region2: #{nested_up_forward.3} parent=0 // loop_pre_header
    _
  $region3: #{nested_up_forward.3} parent=0 // loop_header
    %s14 = sphi 0, %s18
    %p15 = scmp.ge.s32.totalorder %s14, 4
    %s24 = sphi 0, %s26
    %s27 = sphi 0, %s24
    %s28 = sphi 0, %s27
    %s44 = sphi 0, %s28
    %s50 = sphi 0, %s52
    %s53 = sphi 0, %s50
    %s54 = sphi 0, %s53
    %s70 = sphi 0, %s54
    %s74 = sphi 0, %s74
    %s76 = sphi 0, %s74
    %s77 = sphi 0, %s76
    %s91 = sphi 0, %s77
    %s95 = sphi 0, %s95
    %s97 = sphi 0, %s95
    %s98 = sphi 0, %s97
    %s112 = sphi 0, %s98
    %s116 = sphi 0, %s116
    %s118 = sphi 0, %s116
    %s119 = sphi 0, %s118
    %s133 = sphi 0, %s119
    %s139 = sphi 0, %s141
    %s142 = sphi 0, %s139
    %s143 = sphi 0, %s142
    %s159 = sphi 0, %s143
    %s165 = sphi 0, %s167
    %s168 = sphi 0, %s165
    %s169 = sphi 0, %s168
    %s185 = sphi 0, %s169
    %s191 = sphi 0, %s193
    %s194 = sphi 0, %s191
    %s195 = sphi 0, %s194
    %s211 = sphi 0, %s195
  $region4: #{nested_up_forward.3} parent=0 // loop_header_branch
    %17 = sbr.rel (%p15) target = $region8
  $region5: #{nested_up_forward.3} parent=0 // loop_body
    %s19 = ssub.s32 %s14, 1
    %s20 = ssub.s32 %s14, 2
    %s21 = sadd.s32 %s14, 1
    %s22 = ssub.s32 %s14, %s21
    %p23 = scmp.eq.s32.totalorder %s22, 0
    %s25 = sadd.s32 %s24, 1
    %s26 = scalar_select %p23, %s24, %s25
    %p29 = pneg %p23
    %p30 = scmp.eq.s32.totalorder %s14, 1
    %p31 = por %p29, %p30
    %p32 = scmp.ne.s32.totalorder %s24, %s27
    %p33 = scmp.eq.s32.totalorder %s14, 0
    %p34 = por %p32, %p33
    %p35 = scmp.ne.s32.totalorder %s24, %s27
    %p36 = scmp.eq.s32.totalorder %s19, 1
    %p37 = por %p35, %p36
    %p38 = scmp.ne.s32.totalorder %s27, %s28
    %p39 = scmp.eq.s32.totalorder %s19, 0
    %p40 = por %p38, %p39
    %p41 = scmp.ne.s32.totalorder %s27, %s28
    %p42 = scmp.eq.s32.totalorder %s20, 1
    %p43 = por %p41, %p42
    %p45 = scmp.ne.s32.totalorder %s28, %s44
    %p46 = scmp.eq.s32.totalorder %s20, 0
    %p47 = por %p45, %p46
    %s48 = ssub.s32 %s14, %s21
    %p49 = scmp.eq.s32.totalorder %s48, 0
    %s51 = sadd.s32 %s50, 1
    %s52 = scalar_select %p49, %s50, %s51
    %p55 = pneg %p49
    %p56 = scmp.eq.s32.totalorder %s14, 1
    %p57 = por %p55, %p56
    %p58 = scmp.ne.s32.totalorder %s50, %s53
    %p59 = scmp.eq.s32.totalorder %s14, 0
    %p60 = por %p58, %p59
    %p61 = scmp.ne.s32.totalorder %s50, %s53
    %p62 = scmp.eq.s32.totalorder %s19, 1
    %p63 = por %p61, %p62
    %p64 = scmp.ne.s32.totalorder %s53, %s54
    %p65 = scmp.eq.s32.totalorder %s19, 0
    %p66 = por %p64, %p65
    %p67 = scmp.ne.s32.totalorder %s53, %s54
    %p68 = scmp.eq.s32.totalorder %s20, 1
    %p69 = por %p67, %p68
    %p71 = scmp.ne.s32.totalorder %s54, %s70
    %p72 = scmp.eq.s32.totalorder %s20, 0
    %p73 = por %p71, %p72
    %s75 = sadd.s32 %s74, 1
    %p78 = scmp.eq.s32.totalorder %s14, 1
    %p79 = scmp.ne.s32.totalorder %s74, %s76
    %p80 = scmp.eq.s32.totalorder %s14, 0
    %p81 = por %p79, %p80
    %p82 = scmp.ne.s32.totalorder %s74, %s76
    %p83 = scmp.eq.s32.totalorder %s19, 1
    %p84 = por %p82, %p83
    %p85 = scmp.ne.s32.totalorder %s76, %s77
    %p86 = scmp.eq.s32.totalorder %s19, 0
    %p87 = por %p85, %p86
    %p88 = scmp.ne.s32.totalorder %s76, %s77
    %p89 = scmp.eq.s32.totalorder %s20, 1
    %p90 = por %p88, %p89
    %p92 = scmp.ne.s32.totalorder %s77, %s91
    %p93 = scmp.eq.s32.totalorder %s20, 0
    %p94 = por %p92, %p93
    %s96 = sadd.s32 %s95, 1
    %p99 = scmp.eq.s32.totalorder %s14, 1
    %p100 = scmp.ne.s32.totalorder %s95, %s97
    %p101 = scmp.eq.s32.totalorder %s14, 0
    %p102 = por %p100, %p101
    %p103 = scmp.ne.s32.totalorder %s95, %s97
    %p104 = scmp.eq.s32.totalorder %s19, 1
    %p105 = por %p103, %p104
    %p106 = scmp.ne.s32.totalorder %s97, %s98
    %p107 = scmp.eq.s32.totalorder %s19, 0
    %p108 = por %p106, %p107
    %p109 = scmp.ne.s32.totalorder %s97, %s98
    %p110 = scmp.eq.s32.totalorder %s20, 1
    %p111 = por %p109, %p110
    %p113 = scmp.ne.s32.totalorder %s98, %s112
    %p114 = scmp.eq.s32.totalorder %s20, 0
    %p115 = por %p113, %p114
    %s117 = sadd.s32 %s116, 1
    %p120 = scmp.eq.s32.totalorder %s14, 1
    %p121 = scmp.ne.s32.totalorder %s116, %s118
    %p122 = scmp.eq.s32.totalorder %s14, 0
    %p123 = por %p121, %p122
    %p124 = scmp.ne.s32.totalorder %s116, %s118
    %p125 = scmp.eq.s32.totalorder %s19, 1
    %p126 = por %p124, %p125
    %p127 = scmp.ne.s32.totalorder %s118, %s119
    %p128 = scmp.eq.s32.totalorder %s19, 0
    %p129 = por %p127, %p128
    %p130 = scmp.ne.s32.totalorder %s118, %s119
    %p131 = scmp.eq.s32.totalorder %s20, 1
    %p132 = por %p130, %p131
    %p134 = scmp.ne.s32.totalorder %s119, %s133
    %p135 = scmp.eq.s32.totalorder %s20, 0
    %p136 = por %p134, %p135
    %s137 = ssub.s32 %s14, %s21
    %p138 = scmp.eq.s32.totalorder %s137, 0
    %s140 = sadd.s32 %s139, 1
    %s141 = scalar_select %p138, %s139, %s140
    %p144 = pneg %p138
    %p145 = scmp.eq.s32.totalorder %s14, 1
    %p146 = por %p144, %p145
    %p147 = scmp.ne.s32.totalorder %s139, %s142
    %p148 = scmp.eq.s32.totalorder %s14, 0
    %p149 = por %p147, %p148
    %p150 = scmp.ne.s32.totalorder %s139, %s142
    %p151 = scmp.eq.s32.totalorder %s19, 1
    %p152 = por %p150, %p151
    %p153 = scmp.ne.s32.totalorder %s142, %s143
    %p154 = scmp.eq.s32.totalorder %s19, 0
    %p155 = por %p153, %p154
    %p156 = scmp.ne.s32.totalorder %s142, %s143
    %p157 = scmp.eq.s32.totalorder %s20, 1
    %p158 = por %p156, %p157
    %p160 = scmp.ne.s32.totalorder %s143, %s159
    %p161 = scmp.eq.s32.totalorder %s20, 0
    %p162 = por %p160, %p161
    %s163 = ssub.s32 %s14, %s21
    %p164 = scmp.eq.s32.totalorder %s163, 0
    %s166 = sadd.s32 %s165, 1
    %s167 = scalar_select %p164, %s165, %s166
    %p170 = pneg %p164
    %p171 = scmp.eq.s32.totalorder %s14, 1
    %p172 = por %p170, %p171
    %p173 = scmp.ne.s32.totalorder %s165, %s168
    %p174 = scmp.eq.s32.totalorder %s14, 0
    %p175 = por %p173, %p174
    %p176 = scmp.ne.s32.totalorder %s165, %s168
    %p177 = scmp.eq.s32.totalorder %s19, 1
    %p178 = por %p176, %p177
    %p179 = scmp.ne.s32.totalorder %s168, %s169
    %p180 = scmp.eq.s32.totalorder %s19, 0
    %p181 = por %p179, %p180
    %p182 = scmp.ne.s32.totalorder %s168, %s169
    %p183 = scmp.eq.s32.totalorder %s20, 1
    %p184 = por %p182, %p183
    %p186 = scmp.ne.s32.totalorder %s169, %s185
    %p187 = scmp.eq.s32.totalorder %s20, 0
    %p188 = por %p186, %p187
    %s189 = ssub.s32 %s14, %s21
    %p190 = scmp.eq.s32.totalorder %s189, 0
    %s192 = sadd.s32 %s191, 1
    %s193 = scalar_select %p190, %s191, %s192
    %p196 = pneg %p190
    %p197 = scmp.eq.s32.totalorder %s14, 1
    %p198 = por %p196, %p197
    %p199 = scmp.ne.s32.totalorder %s191, %s194
    %p200 = scmp.eq.s32.totalorder %s14, 0
    %p201 = por %p199, %p200
    %p202 = scmp.ne.s32.totalorder %s191, %s194
    %p203 = scmp.eq.s32.totalorder %s19, 1
    %p204 = por %p202, %p203
    %p205 = scmp.ne.s32.totalorder %s194, %s195
    %p206 = scmp.eq.s32.totalorder %s19, 0
    %p207 = por %p205, %p206
    %p208 = scmp.ne.s32.totalorder %s194, %s195
    %p209 = scmp.eq.s32.totalorder %s20, 1
    %p210 = por %p208, %p209
    %p212 = scmp.ne.s32.totalorder %s195, %s211
    %p213 = scmp.eq.s32.totalorder %s20, 0
    %p214 = por %p212, %p213
    %p215 = scmp.le.s32.totalorder 1, %s14
    %p216 = scmp.lt.s32.totalorder %s14, 3
    %p217 = pnand %p215, %p216
    %p218 = pneg %p217
    // Predicated region
    $region9: #{nested_up_forward.3} parent=5 // pred_check
      _
    $region10: #{nested_up_forward.3} parent=5 // pred_check_branch
      %220 = sbr.rel (%p217) target = $region12
    $region11: #{nested_up_forward.3} parent=5 // pred_region
      %s221 = ssub.s32 %s14, 1
      // Predicated region
      $region13: #{nested_up_forward.3} parent=11 // pred_check
        %p222 = pneg %p87
      $region14: #{nested_up_forward.3} parent=11 // pred_check_branch
        %224 = sbr.rel (%p222) target = $region16
      $region15: #{nested_up_forward.3} parent=11 // pred_region
        _
      $region16: #{nested_up_forward.3} parent=11 // pred_fallthru
        _
      // Predicated region
      $region17: #{nested_up_forward.3} parent=11 // pred_check
        %p225 = pneg %p108
      $region18: #{nested_up_forward.3} parent=11 // pred_check_branch
        %227 = sbr.rel (%p225) target = $region20
      $region19: #{nested_up_forward.3} parent=11 // pred_region
        _
      $region20: #{nested_up_forward.3} parent=11 // pred_fallthru
        _
      // Predicated region
      $region21: #{nested_up_forward.3} parent=11 // pred_check
        %p228 = pneg %p129
      $region22: #{nested_up_forward.3} parent=11 // pred_check_branch
        %230 = sbr.rel (%p228) target = $region24
      $region23: #{nested_up_forward.3} parent=11 // pred_region
        _
      $region24: #{nested_up_forward.3} parent=11 // pred_fallthru
        _
    $region12: #{nested_up_forward.3} parent=5 // pred_fallthru
      _
    %p231 = scmp.lt.s32.totalorder %s14, 2
    // Predicated region
    $region25: #{nested_up_forward.3} parent=5 // pred_check
      %p232 = pneg %p231
    $region26: #{nested_up_forward.3} parent=5 // pred_check_branch
      %234 = sbr.rel (%p232) target = $region28
    $region27: #{nested_up_forward.3} parent=5 // pred_region
      // Predicated region
      $region29: #{nested_up_forward.3} parent=27 // pred_check
        %p235 = pneg %p34
      $region30: #{nested_up_forward.3} parent=27 // pred_check_branch
        %237 = sbr.rel (%p235) target = $region32
      $region31: #{nested_up_forward.3} parent=27 // pred_region
        %p238 = scmp.lt.s32.totalorder %s14, 1
        %s239 = scalar_select %p238, %s14, 1
        %s240 = smul.addr %s239, 32
        %s241 = smul.addr %s240, 8
        %s242 = scalar_lea.vmem %s0, %s241
      $region32: #{nested_up_forward.3} parent=27 // pred_fallthru
        _
      // Predicated region
      $region33: #{nested_up_forward.3} parent=27 // pred_check
        %p243 = pneg %p60
      $region34: #{nested_up_forward.3} parent=27 // pred_check_branch
        %245 = sbr.rel (%p243) target = $region36
      $region35: #{nested_up_forward.3} parent=27 // pred_region
        %p246 = scmp.lt.s32.totalorder %s14, 1
        %s247 = scalar_select %p246, %s14, 1
        %s248 = smul.addr %s247, 8
        %s249 = smul.addr %s248, 8
        %s250 = scalar_lea.vmem %s1, %s249
      $region36: #{nested_up_forward.3} parent=27 // pred_fallthru
        _
    $region28: #{nested_up_forward.3} parent=5 // pred_fallthru
      _
    %p251 = scmp.le.s32.totalorder 1, %s14
    %p252 = scmp.lt.s32.totalorder %s14, 3
    %p253 = pnand %p251, %p252
    %p254 = pneg %p253
    // Predicated region
    $region37: #{nested_up_forward.3} parent=5 // pred_check
      _
    $region38: #{nested_up_forward.3} parent=5 // pred_check_branch
      %256 = sbr.rel (%p253) target = $region40
    $region39: #{nested_up_forward.3} parent=5 // pred_region
      %s257 = ssub.s32 %s14, 1
      %p258 = scmp.lt.s32.totalorder %s19, 1
      %s259 = scalar_select %p258, %s19, 1
      %s260 = smul.addr %s259, 32
      %s261 = smul.addr %s260, 8
      %s262 = scalar_lea.vmem %s0, %s261
      %p263 = pneg %p40
      %p264 = pneg %p37
      %p265 = scmp.lt.s32.totalorder %s19, 1
      %s266 = scalar_select %p265, %s19, 1
      %s267 = smul.addr %s266, 8
      %s268 = smul.addr %s267, 8
      %s269 = scalar_lea.vmem %s1, %s268
      %p270 = pneg %p66
      %p271 = pneg %p63
      %p272 = pneg %p87
      %p273 = pneg %p84
      %p274 = pneg %p108
      %p275 = pneg %p105
      %p276 = pneg %p129
      %p277 = pneg %p126
      %p278 = pneg %p155
      %p279 = pneg %p152
      %p280 = scmp.lt.s32.totalorder %s19, 1
      %s281 = scalar_select %p280, %s19, 1
      %s282 = smul.addr %s281, 32
      %s283 = smul.addr %s282, 8
      %s284 = scalar_lea.vmem %s5, %s283
      %p285 = pneg %p181
      %p286 = pneg %p178
      %p287 = scmp.lt.s32.totalorder %s19, 1
      %s288 = scalar_select %p287, %s19, 1
      %s289 = scalar_lea.vmem %s6, %s288
      %p290 = pneg %p207
      %p291 = pneg %p204
      %p292 = scmp.lt.s32.totalorder %s19, 1
      %s293 = scalar_select %p292, %s19, 1
      %s294 = scalar_lea.vmem %s7, %s293
      %p295 = scmp.lt.s32.totalorder %s19, 1
      %s296 = scalar_select %p295, %s19, 1
      %s297 = smul.addr %s296, 32
      %s298 = smul.addr %s297, 8
      %s299 = scalar_lea.vmem %s0, %s298
      %p300 = scmp.lt.s32.totalorder %s19, 1
      %s301 = scalar_select %p300, %s19, 1
      %s302 = smul.addr %s301, 8
      %s303 = smul.addr %s302, 8
      %s304 = scalar_lea.vmem %s1, %s303
      %p305 = scmp.lt.s32.totalorder %s19, 1
      %s306 = scalar_select %p305, %s19, 1
      %s307 = smul.addr %s306, 32
      %s308 = smul.addr %s307, 8
      %s309 = scalar_lea.vmem %s5, %s308
      %p310 = scmp.lt.s32.totalorder %s19, 1
      %s311 = scalar_select %p310, %s19, 1
      %s312 = scalar_lea.vmem %s6, %s311
      %p313 = scmp.lt.s32.totalorder %s19, 1
      %s314 = scalar_select %p313, %s19, 1
      %s315 = scalar_lea.vmem %s7, %s314
      %vm316 = vcmask 97280
      %317 = vst.msk [vmem:[#allocation2] sm:$0xff] %vm316, 0.0
      %318 = vst.msk [vmem:[#allocation2 + $0x8] sm:$0xff] %vm316, 0.0
      %vm319 = vcmask 91136
      %320 = vst.msk [vmem:[#allocation2 + $0x10] sm:$0x3] %vm319, 0.0
      %321 = vst.msk [vmem:[#allocation2 + $0x18] sm:$0xff] %vm316, 0.0
      %322 = vst.msk [vmem:[#allocation2 + $0x20] sm:$0xff] %vm316, 0.0
      %323 = vst.msk [vmem:[#allocation2 + $0x28] sm:$0x3] %vm319, 0.0
      %324 = vst.msk [vmem:[#allocation2 + $0x30] sm:$0xff] %vm316, 0.0
      %325 = vst.msk [vmem:[#allocation2 + $0x38] sm:$0xff] %vm316, 0.0
      %326 = vst.msk [vmem:[#allocation2 + $0x40] sm:$0x3] %vm319, 0.0
      %327 = vst.msk [vmem:[#allocation2 + $0x48] sm:$0xff] %vm316, 0.0
      %328 = vst.msk [vmem:[#allocation2 + $0x50] sm:$0xff] %vm316, 0.0
      %329 = vst.msk [vmem:[#allocation2 + $0x58] sm:$0x3] %vm319, 0.0
      %330 = vst.msk [vmem:[#allocation2 + $0x60] sm:$0xff] %vm316, 0.0
      %331 = vst.msk [vmem:[#allocation2 + $0x68] sm:$0xff] %vm316, 0.0
      %332 = vst.msk [vmem:[#allocation2 + $0x70] sm:$0x3] %vm319, 0.0
      %333 = vst.msk [vmem:[#allocation2 + $0x78] sm:$0xff] %vm316, 0.0
      %334 = vst.msk [vmem:[#allocation2 + $0x80] sm:$0xff] %vm316, 0.0
      %335 = vst.msk [vmem:[#allocation2 + $0x88] sm:$0x3] %vm319, 0.0
      %336 = vst.msk [vmem:[#allocation2 + $0x90] sm:$0xff] %vm316, 0.0
      %337 = vst.msk [vmem:[#allocation2 + $0x98] sm:$0xff] %vm316, 0.0
      %338 = vst.msk [vmem:[#allocation2 + $0xa0] sm:$0x3] %vm319, 0.0
      %339 = vst.msk [vmem:[#allocation2 + $0xa8] sm:$0xff] %vm316, 0.0
      %340 = vst.msk [vmem:[#allocation2 + $0xb0] sm:$0xff] %vm316, 0.0
      %341 = vst.msk [vmem:[#allocation2 + $0xb8] sm:$0x3] %vm319, 0.0
      %342 = vst.msk [vmem:[#allocation2 + $0xc0] sm:$0xff] %vm316, 0.0
      %343 = vst.msk [vmem:[#allocation2 + $0xc8] sm:$0xff] %vm316, 0.0
      %344 = vst.msk [vmem:[#allocation2 + $0xd0] sm:$0x3] %vm319, 0.0
      %345 = vst.msk [vmem:[#allocation2 + $0xd8] sm:$0xff] %vm316, 0.0
      %346 = vst.msk [vmem:[#allocation2 + $0xe0] sm:$0xff] %vm316, 0.0
      %347 = vst.msk [vmem:[#allocation2 + $0xe8] sm:$0x3] %vm319, 0.0
      %348 = vst.msk [vmem:[#allocation2 + $0xf0] sm:$0xff] %vm316, 0.0
      %349 = vst.msk [vmem:[#allocation2 + $0xf8] sm:$0xff] %vm316, 0.0
      %350 = vst.msk [vmem:[#allocation2 + $0x100] sm:$0x3] %vm319, 0.0
      %351 = vst.msk [vmem:[#allocation2 + $0x108] sm:$0xff] %vm316, 0.0
      %352 = vst.msk [vmem:[#allocation2 + $0x110] sm:$0xff] %vm316, 0.0
      %353 = vst.msk [vmem:[#allocation2 + $0x118] sm:$0x3] %vm319, 0.0
      %354 = vst.msk [vmem:[#allocation2 + $0x120] sm:$0xff] %vm316, 0.0
      %355 = vst.msk [vmem:[#allocation2 + $0x128] sm:$0xff] %vm316, 0.0
      %356 = vst.msk [vmem:[#allocation2 + $0x130] sm:$0x3] %vm319, 0.0
      %357 = vst.msk [vmem:[#allocation2 + $0x138] sm:$0xff] %vm316, 0.0
      %358 = vst.msk [vmem:[#allocation2 + $0x140] sm:$0xff] %vm316, 0.0
      %359 = vst.msk [vmem:[#allocation2 + $0x148] sm:$0x3] %vm319, 0.0
      %360 = vst.msk [vmem:[#allocation2 + $0x150] sm:$0xff] %vm316, 0.0
      %361 = vst.msk [vmem:[#allocation2 + $0x158] sm:$0xff] %vm316, 0.0
      %362 = vst.msk [vmem:[#allocation2 + $0x160] sm:$0x3] %vm319, 0.0
      %363 = vst.msk [vmem:[#allocation2 + $0x168] sm:$0xff] %vm316, 0.0
      %364 = vst.msk [vmem:[#allocation2 + $0x170] sm:$0xff] %vm316, 0.0
      %365 = vst.msk [vmem:[#allocation2 + $0x178] sm:$0x3] %vm319, 0.0
      %366 = vst.msk [vmem:[#allocation2 + $0x180] sm:$0xff] %vm316, 0.0
      %367 = vst.msk [vmem:[#allocation2 + $0x188] sm:$0xff] %vm316, 0.0
      %368 = vst.msk [vmem:[#allocation2 + $0x190] sm:$0x3] %vm319, 0.0
      %369 = vst.msk [vmem:[#allocation2 + $0x198] sm:$0xff] %vm316, 0.0
      %370 = vst.msk [vmem:[#allocation2 + $0x1a0] sm:$0xff] %vm316, 0.0
      %371 = vst.msk [vmem:[#allocation2 + $0x1a8] sm:$0x3] %vm319, 0.0
      %v372 = vld [vmem:[%s2] sm:$0xff]
      %v373 = vld [vmem:[%s2 + $0x8] sm:$0xff]
      %v374 = vld [vmem:[%s2 + $0x10] sm:$0xff]
      %v375 = vld [vmem:[%s2 + $0x18] sm:$0xff]
      %v376 = vld [vmem:[%s2 + $0x20] sm:$0xff]
      %v377 = vld [vmem:[%s2 + $0x28] sm:$0xff]
      %v378 = vld [vmem:[%s2 + $0x30] sm:$0xff]
      %v379 = vld [vmem:[%s2 + $0x38] sm:$0xff]
      %v380 = vld [vmem:[%s2 + $0x40] sm:$0xff]
      %v381 = vld [vmem:[%s2 + $0x48] sm:$0xff]
      %v382 = vld [vmem:[%s2 + $0x50] sm:$0xff]
      %v383 = vld [vmem:[%s2 + $0x58] sm:$0xff]
      %v384 = vld [vmem:[%s2 + $0x60] sm:$0xff]
      %v385 = vld [vmem:[%s2 + $0x68] sm:$0xff]
      %v386 = vld [vmem:[%s2 + $0x70] sm:$0xff]
      %v387 = vld [vmem:[%s2 + $0x78] sm:$0xff]
      %v388 = vld [vmem:[%s2 + $0x80] sm:$0xff]
      %v389 = vld [vmem:[%s2 + $0x88] sm:$0xff]
      %v390 = vld [vmem:[%s2 + $0x90] sm:$0xff]
      %v391 = vld [vmem:[%s2 + $0x98] sm:$0xff]
      %v392 = vld [vmem:[%s2 + $0xa0] sm:$0xff]
      %v393 = vld [vmem:[%s2 + $0xa8] sm:$0xff]
      %v394 = vld [vmem:[%s2 + $0xb0] sm:$0xff]
      %v395 = vld [vmem:[%s2 + $0xb8] sm:$0xff]
      %v396 = vld [vmem:[%s2 + $0xc0] sm:$0xff]
      %v397 = vld [vmem:[%s2 + $0xc8] sm:$0xff]
      %v398 = vld [vmem:[%s2 + $0xd0] sm:$0xff]
      %v399 = vld [vmem:[%s2 + $0xd8] sm:$0xff]
      %v400 = vld [vmem:[%s2 + $0xe0] sm:$0xff]
      %v401 = vld [vmem:[%s2 + $0xe8] sm:$0xff]
      %v402 = vld [vmem:[%s2 + $0xf0] sm:$0xff]
      %v403 = vld [vmem:[%s2 + $0xf8] sm:$0xff]
      %v404 = vld [vmem:[%s304] sm:$0xff]
      %v405 = vld [vmem:[%s304 + $0x8] sm:$0xff]
      %v406 = vld [vmem:[%s304 + $0x10] sm:$0xff]
      %v407 = vld [vmem:[%s304 + $0x18] sm:$0xff]
      %v408 = vld [vmem:[%s304 + $0x20] sm:$0xff]
      %v409 = vld [vmem:[%s304 + $0x28] sm:$0xff]
      %v410 = vld [vmem:[%s304 + $0x30] sm:$0xff]
      %v411 = vld [vmem:[%s304 + $0x38] sm:$0xff]
      %vm412 = vcmask 523264
      %v414 = vsel %vm412, %v372, 0
      %v417 = vsel %vm412, %v373, 0
      %v420 = vsel %vm412, %v374, 0
      %v423 = vsel %vm412, %v375, 0
      %v426 = vsel %vm412, %v376, 0
      %v429 = vsel %vm412, %v377, 0
      %v432 = vsel %vm412, %v378, 0
      %v435 = vsel %vm412, %v379, 0
      %v438 = vsel %vm412, %v380, 0
      %v441 = vsel %vm412, %v381, 0
      %v444 = vsel %vm412, %v382, 0
      %v447 = vsel %vm412, %v383, 0
      %v450 = vsel %vm412, %v384, 0
      %v453 = vsel %vm412, %v385, 0
      %v456 = vsel %vm412, %v386, 0
      %v459 = vsel %vm412, %v387, 0
      %v462 = vsel %vm412, %v388, 0
      %v465 = vsel %vm412, %v389, 0
      %v468 = vsel %vm412, %v390, 0
      %v471 = vsel %vm412, %v391, 0
      %v474 = vsel %vm412, %v392, 0
      %v477 = vsel %vm412, %v393, 0
      %v480 = vsel %vm412, %v394, 0
      %v483 = vsel %vm412, %v395, 0
      %v486 = vsel %vm412, %v396, 0
      %v489 = vsel %vm412, %v397, 0
      %v492 = vsel %vm412, %v398, 0
      %v495 = vsel %vm412, %v399, 0
      %v498 = vsel %vm412, %v400, 0
      %v501 = vsel %vm412, %v401, 0
      %v504 = vsel %vm412, %v402, 0
      %v507 = vsel %vm412, %v403, 0
      %509 = vmatpush.msra.mxu0 0.0
      %510 = vmatpush.msra.mxu0 0.0
      %511 = vmatpush.msra.mxu0 0.0
      %512 = vmatpush.msra.mxu0 0.0
      %513 = vmatpush.msra.mxu0 0.0
      %514 = vmatpush.msra.mxu0 0.0
      %515 = vmatpush.msra.mxu0 0.0
      %516 = vmatpush.msra.mxu0 0.0
      %517 = vmatpush.msra.mxu0 %v411
      %518 = vmatpush.msra.mxu0 %v410
      %519 = vmatpush.msra.mxu0 %v409
      %520 = vmatpush.msra.mxu0 %v408
      %521 = vmatpush.msra.mxu0 %v407
      %522 = vmatpush.msra.mxu0 %v406
      %523 = vmatpush.msra.mxu0 %v405
      %524 = vmatpush.msra.mxu0 %v404
      %525 = vmatmul.f32.gmra.mxu0 %v414
      %v526 = vpop.f32.mrf.mxu0
      %v527 = vadd.f32 0.0, %v526
      %528 = vmatmul.f32.gmra.mxu0 %v417
      %v529 = vpop.f32.mrf.mxu0
      %v530 = vadd.f32 0.0, %v529
      %531 = vmatmul.f32.gmra.mxu0 %v420
      %v532 = vpop.f32.mrf.mxu0
      %v533 = vadd.f32 0.0, %v532
      %534 = vmatmul.f32.gmra.mxu0 %v423
      %v535 = vpop.f32.mrf.mxu0
      %v536 = vadd.f32 0.0, %v535
      %537 = vmatmul.f32.gmra.mxu0 %v426
      %v538 = vpop.f32.mrf.mxu0
      %v539 = vadd.f32 0.0, %v538
      %540 = vmatmul.f32.gmra.mxu0 %v429
      %v541 = vpop.f32.mrf.mxu0
      %v542 = vadd.f32 0.0, %v541
      %543 = vmatmul.f32.gmra.mxu0 %v432
      %v544 = vpop.f32.mrf.mxu0
      %v545 = vadd.f32 0.0, %v544
      %546 = vmatmul.f32.gmra.mxu0 %v435
      %v547 = vpop.f32.mrf.mxu0
      %v548 = vadd.f32 0.0, %v547
      %549 = vmatmul.f32.gmra.mxu0 %v438
      %v550 = vpop.f32.mrf.mxu0
      %v551 = vadd.f32 0.0, %v550
      %552 = vmatmul.f32.gmra.mxu0 %v441
      %v553 = vpop.f32.mrf.mxu0
      %v554 = vadd.f32 0.0, %v553
      %555 = vmatmul.f32.gmra.mxu0 %v444
      %v556 = vpop.f32.mrf.mxu0
      %v557 = vadd.f32 0.0, %v556
      %558 = vmatmul.f32.gmra.mxu0 %v447
      %v559 = vpop.f32.mrf.mxu0
      %v560 = vadd.f32 0.0, %v559
      %561 = vmatmul.f32.gmra.mxu0 %v450
      %v562 = vpop.f32.mrf.mxu0
      %v563 = vadd.f32 0.0, %v562
      %564 = vmatmul.f32.gmra.mxu0 %v453
      %v565 = vpop.f32.mrf.mxu0
      %v566 = vadd.f32 0.0, %v565
      %567 = vmatmul.f32.gmra.mxu0 %v456
      %v568 = vpop.f32.mrf.mxu0
      %v569 = vadd.f32 0.0, %v568
      %570 = vmatmul.f32.gmra.mxu0 %v459
      %v571 = vpop.f32.mrf.mxu0
      %v572 = vadd.f32 0.0, %v571
      %573 = vmatmul.f32.gmra.mxu0 %v462
      %v574 = vpop.f32.mrf.mxu0
      %v575 = vadd.f32 0.0, %v574
      %576 = vmatmul.f32.gmra.mxu0 %v465
      %v577 = vpop.f32.mrf.mxu0
      %v578 = vadd.f32 0.0, %v577
      %579 = vmatmul.f32.gmra.mxu0 %v468
      %v580 = vpop.f32.mrf.mxu0
      %v581 = vadd.f32 0.0, %v580
      %582 = vmatmul.f32.gmra.mxu0 %v471
      %v583 = vpop.f32.mrf.mxu0
      %v584 = vadd.f32 0.0, %v583
      %585 = vmatmul.f32.gmra.mxu0 %v474
      %v586 = vpop.f32.mrf.mxu0
      %v587 = vadd.f32 0.0, %v586
      %588 = vmatmul.f32.gmra.mxu0 %v477
      %v589 = vpop.f32.mrf.mxu0
      %v590 = vadd.f32 0.0, %v589
      %591 = vmatmul.f32.gmra.mxu0 %v480
      %v592 = vpop.f32.mrf.mxu0
      %v593 = vadd.f32 0.0, %v592
      %594 = vmatmul.f32.gmra.mxu0 %v483
      %v595 = vpop.f32.mrf.mxu0
      %v596 = vadd.f32 0.0, %v595
      %597 = vmatmul.f32.gmra.mxu0 %v486
      %v598 = vpop.f32.mrf.mxu0
      %v599 = vadd.f32 0.0, %v598
      %600 = vmatmul.f32.gmra.mxu0 %v489
      %v601 = vpop.f32.mrf.mxu0
      %v602 = vadd.f32 0.0, %v601
      %603 = vmatmul.f32.gmra.mxu0 %v492
      %v604 = vpop.f32.mrf.mxu0
      %v605 = vadd.f32 0.0, %v604
      %606 = vmatmul.f32.gmra.mxu0 %v495
      %v607 = vpop.f32.mrf.mxu0
      %v608 = vadd.f32 0.0, %v607
      %609 = vmatmul.f32.gmra.mxu0 %v498
      %v610 = vpop.f32.mrf.mxu0
      %v611 = vadd.f32 0.0, %v610
      %612 = vmatmul.f32.gmra.mxu0 %v501
      %v613 = vpop.f32.mrf.mxu0
      %v614 = vadd.f32 0.0, %v613
      %615 = vmatmul.f32.gmra.mxu0 %v504
      %v616 = vpop.f32.mrf.mxu0
      %v617 = vadd.f32 0.0, %v616
      %618 = vmatmul.f32.gmra.mxu0 %v507
      %v619 = vpop.f32.mrf.mxu0
      %v620 = vadd.f32 0.0, %v619
      %621 = vdwg.mxu0
      %v622 = vld [vmem:[%s299] sm:$0xff]
      %v623 = vld [vmem:[%s299 + $0x8] sm:$0xff]
      %v624 = vld [vmem:[%s299 + $0x10] sm:$0xff]
      %v625 = vld [vmem:[%s299 + $0x18] sm:$0xff]
      %v626 = vld [vmem:[%s299 + $0x20] sm:$0xff]
      %v627 = vld [vmem:[%s299 + $0x28] sm:$0xff]
      %v628 = vld [vmem:[%s299 + $0x30] sm:$0xff]
      %v629 = vld [vmem:[%s299 + $0x38] sm:$0xff]
      %v630 = vld [vmem:[%s299 + $0x40] sm:$0xff]
      %v631 = vld [vmem:[%s299 + $0x48] sm:$0xff]
      %v632 = vld [vmem:[%s299 + $0x50] sm:$0xff]
      %v633 = vld [vmem:[%s299 + $0x58] sm:$0xff]
      %v634 = vld [vmem:[%s299 + $0x60] sm:$0xff]
      %v635 = vld [vmem:[%s299 + $0x68] sm:$0xff]
      %v636 = vld [vmem:[%s299 + $0x70] sm:$0xff]
      %v637 = vld [vmem:[%s299 + $0x78] sm:$0xff]
      %v638 = vld [vmem:[%s299 + $0x80] sm:$0xff]
      %v639 = vld [vmem:[%s299 + $0x88] sm:$0xff]
      %v640 = vld [vmem:[%s299 + $0x90] sm:$0xff]
      %v641 = vld [vmem:[%s299 + $0x98] sm:$0xff]
      %v642 = vld [vmem:[%s299 + $0xa0] sm:$0xff]
      %v643 = vld [vmem:[%s299 + $0xa8] sm:$0xff]
      %v644 = vld [vmem:[%s299 + $0xb0] sm:$0xff]
      %v645 = vld [vmem:[%s299 + $0xb8] sm:$0xff]
      %v646 = vld [vmem:[%s299 + $0xc0] sm:$0xff]
      %v647 = vld [vmem:[%s299 + $0xc8] sm:$0xff]
      %v648 = vld [vmem:[%s299 + $0xd0] sm:$0xff]
      %v649 = vld [vmem:[%s299 + $0xd8] sm:$0xff]
      %v650 = vld [vmem:[%s299 + $0xe0] sm:$0xff]
      %v651 = vld [vmem:[%s299 + $0xe8] sm:$0xff]
      %v652 = vld [vmem:[%s299 + $0xf0] sm:$0xff]
      %v653 = vld [vmem:[%s299 + $0xf8] sm:$0xff]
      %s654 = scalar_lea.vmem [#allocation2], 24
      %vm655 = vcmask 31744
      %656 = vst.msk [vmem:[%s654 + $0x1] sm:$0xff] %vm655, %v622
      %657 = vst.msk [vmem:[%s654 + $0x9] sm:$0xff] %vm655, %v623
      %658 = vst.msk [vmem:[%s654 + $0x19] sm:$0xff] %vm655, %v624
      %659 = vst.msk [vmem:[%s654 + $0x21] sm:$0xff] %vm655, %v625
      %660 = vst.msk [vmem:[%s654 + $0x31] sm:$0xff] %vm655, %v626
      %661 = vst.msk [vmem:[%s654 + $0x39] sm:$0xff] %vm655, %v627
      %662 = vst.msk [vmem:[%s654 + $0x49] sm:$0xff] %vm655, %v628
      %663 = vst.msk [vmem:[%s654 + $0x51] sm:$0xff] %vm655, %v629
      %664 = vst.msk [vmem:[%s654 + $0x61] sm:$0xff] %vm655, %v630
      %665 = vst.msk [vmem:[%s654 + $0x69] sm:$0xff] %vm655, %v631
      %666 = vst.msk [vmem:[%s654 + $0x79] sm:$0xff] %vm655, %v632
      %667 = vst.msk [vmem:[%s654 + $0x81] sm:$0xff] %vm655, %v633
      %668 = vst.msk [vmem:[%s654 + $0x91] sm:$0xff] %vm655, %v634
      %669 = vst.msk [vmem:[%s654 + $0x99] sm:$0xff] %vm655, %v635
      %670 = vst.msk [vmem:[%s654 + $0xa9] sm:$0xff] %vm655, %v636
      %671 = vst.msk [vmem:[%s654 + $0xb1] sm:$0xff] %vm655, %v637
      %672 = vst.msk [vmem:[%s654 + $0xc1] sm:$0xff] %vm655, %v638
      %673 = vst.msk [vmem:[%s654 + $0xc9] sm:$0xff] %vm655, %v639
      %674 = vst.msk [vmem:[%s654 + $0xd9] sm:$0xff] %vm655, %v640
      %675 = vst.msk [vmem:[%s654 + $0xe1] sm:$0xff] %vm655, %v641
      %676 = vst.msk [vmem:[%s654 + $0xf1] sm:$0xff] %vm655, %v642
      %677 = vst.msk [vmem:[%s654 + $0xf9] sm:$0xff] %vm655, %v643
      %678 = vst.msk [vmem:[%s654 + $0x109] sm:$0xff] %vm655, %v644
      %679 = vst.msk [vmem:[%s654 + $0x111] sm:$0xff] %vm655, %v645
      %680 = vst.msk [vmem:[%s654 + $0x121] sm:$0xff] %vm655, %v646
      %681 = vst.msk [vmem:[%s654 + $0x129] sm:$0xff] %vm655, %v647
      %682 = vst.msk [vmem:[%s654 + $0x139] sm:$0xff] %vm655, %v648
      %683 = vst.msk [vmem:[%s654 + $0x141] sm:$0xff] %vm655, %v649
      %684 = vst.msk [vmem:[%s654 + $0x151] sm:$0xff] %vm655, %v650
      %685 = vst.msk [vmem:[%s654 + $0x159] sm:$0xff] %vm655, %v651
      %686 = vst.msk [vmem:[%s654 + $0x169] sm:$0xff] %vm655, %v652
      %687 = vst.msk [vmem:[%s654 + $0x171] sm:$0xff] %vm655, %v653
      %720 = vrot.lane.b32.xlu0 %v527, 4
      %v721 = vpop.permute.xlu0 %720
      %722 = vrot.lane.b32.xlu0 %v530, 4
      %v723 = vpop.permute.xlu0 %722
      %724 = vrot.lane.b32.xlu0 %v533, 4
      %v725 = vpop.permute.xlu0 %724
      %726 = vrot.lane.b32.xlu0 %v536, 4
      %v727 = vpop.permute.xlu0 %726
      %728 = vrot.lane.b32.xlu0 %v539, 4
      %v729 = vpop.permute.xlu0 %728
      %730 = vrot.lane.b32.xlu0 %v542, 4
      %v731 = vpop.permute.xlu0 %730
      %732 = vrot.lane.b32.xlu0 %v545, 4
      %v733 = vpop.permute.xlu0 %732
      %734 = vrot.lane.b32.xlu0 %v548, 4
      %v735 = vpop.permute.xlu0 %734
      %736 = vrot.lane.b32.xlu0 %v551, 4
      %v737 = vpop.permute.xlu0 %736
      %738 = vrot.lane.b32.xlu0 %v554, 4
      %v739 = vpop.permute.xlu0 %738
      %740 = vrot.lane.b32.xlu0 %v557, 4
      %v741 = vpop.permute.xlu0 %740
      %742 = vrot.lane.b32.xlu0 %v560, 4
      %v743 = vpop.permute.xlu0 %742
      %744 = vrot.lane.b32.xlu0 %v563, 4
      %v745 = vpop.permute.xlu0 %744
      %746 = vrot.lane.b32.xlu0 %v566, 4
      %v747 = vpop.permute.xlu0 %746
      %748 = vrot.lane.b32.xlu0 %v569, 4
      %v749 = vpop.permute.xlu0 %748
      %750 = vrot.lane.b32.xlu0 %v572, 4
      %v751 = vpop.permute.xlu0 %750
      %752 = vrot.lane.b32.xlu0 %v575, 4
      %v753 = vpop.permute.xlu0 %752
      %754 = vrot.lane.b32.xlu0 %v578, 4
      %v755 = vpop.permute.xlu0 %754
      %756 = vrot.lane.b32.xlu0 %v581, 4
      %v757 = vpop.permute.xlu0 %756
      %758 = vrot.lane.b32.xlu0 %v584, 4
      %v759 = vpop.permute.xlu0 %758
      %760 = vrot.lane.b32.xlu0 %v587, 4
      %v761 = vpop.permute.xlu0 %760
      %762 = vrot.lane.b32.xlu0 %v590, 4
      %v763 = vpop.permute.xlu0 %762
      %764 = vrot.lane.b32.xlu0 %v593, 4
      %v765 = vpop.permute.xlu0 %764
      %766 = vrot.lane.b32.xlu0 %v596, 4
      %v767 = vpop.permute.xlu0 %766
      %768 = vrot.lane.b32.xlu0 %v599, 4
      %v769 = vpop.permute.xlu0 %768
      %770 = vrot.lane.b32.xlu0 %v602, 4
      %v771 = vpop.permute.xlu0 %770
      %772 = vrot.lane.b32.xlu0 %v605, 4
      %v773 = vpop.permute.xlu0 %772
      %774 = vrot.lane.b32.xlu0 %v608, 4
      %v775 = vpop.permute.xlu0 %774
      %776 = vrot.lane.b32.xlu0 %v611, 4
      %v777 = vpop.permute.xlu0 %776
      %778 = vrot.lane.b32.xlu0 %v614, 4
      %v779 = vpop.permute.xlu0 %778
      %780 = vrot.lane.b32.xlu0 %v617, 4
      %v781 = vpop.permute.xlu0 %780
      %782 = vrot.lane.b32.xlu0 %v620, 4
      %v783 = vpop.permute.xlu0 %782
      %vm816 = vcmask 97312
      %817 = vst.msk [vmem:[%s654 + $0x1] sm:$0xff] %vm816, %v721
      %818 = vst.msk [vmem:[%s654 + $0x9] sm:$0xff] %vm816, %v723
      %819 = vst.msk [vmem:[%s654 + $0x19] sm:$0xff] %vm816, %v725
      %820 = vst.msk [vmem:[%s654 + $0x21] sm:$0xff] %vm816, %v727
      %821 = vst.msk [vmem:[%s654 + $0x31] sm:$0xff] %vm816, %v729
      %822 = vst.msk [vmem:[%s654 + $0x39] sm:$0xff] %vm816, %v731
      %823 = vst.msk [vmem:[%s654 + $0x49] sm:$0xff] %vm816, %v733
      %824 = vst.msk [vmem:[%s654 + $0x51] sm:$0xff] %vm816, %v735
      %825 = vst.msk [vmem:[%s654 + $0x61] sm:$0xff] %vm816, %v737
      %826 = vst.msk [vmem:[%s654 + $0x69] sm:$0xff] %vm816, %v739
      %827 = vst.msk [vmem:[%s654 + $0x79] sm:$0xff] %vm816, %v741
      %828 = vst.msk [vmem:[%s654 + $0x81] sm:$0xff] %vm816, %v743
      %829 = vst.msk [vmem:[%s654 + $0x91] sm:$0xff] %vm816, %v745
      %830 = vst.msk [vmem:[%s654 + $0x99] sm:$0xff] %vm816, %v747
      %831 = vst.msk [vmem:[%s654 + $0xa9] sm:$0xff] %vm816, %v749
      %832 = vst.msk [vmem:[%s654 + $0xb1] sm:$0xff] %vm816, %v751
      %833 = vst.msk [vmem:[%s654 + $0xc1] sm:$0xff] %vm816, %v753
      %834 = vst.msk [vmem:[%s654 + $0xc9] sm:$0xff] %vm816, %v755
      %835 = vst.msk [vmem:[%s654 + $0xd9] sm:$0xff] %vm816, %v757
      %836 = vst.msk [vmem:[%s654 + $0xe1] sm:$0xff] %vm816, %v759
      %837 = vst.msk [vmem:[%s654 + $0xf1] sm:$0xff] %vm816, %v761
      %838 = vst.msk [vmem:[%s654 + $0xf9] sm:$0xff] %vm816, %v763
      %839 = vst.msk [vmem:[%s654 + $0x109] sm:$0xff] %vm816, %v765
      %840 = vst.msk [vmem:[%s654 + $0x111] sm:$0xff] %vm816, %v767
      %841 = vst.msk [vmem:[%s654 + $0x121] sm:$0xff] %vm816, %v769
      %842 = vst.msk [vmem:[%s654 + $0x129] sm:$0xff] %vm816, %v771
      %843 = vst.msk [vmem:[%s654 + $0x139] sm:$0xff] %vm816, %v773
      %844 = vst.msk [vmem:[%s654 + $0x141] sm:$0xff] %vm816, %v775
      %845 = vst.msk [vmem:[%s654 + $0x151] sm:$0xff] %vm816, %v777
      %846 = vst.msk [vmem:[%s654 + $0x159] sm:$0xff] %vm816, %v779
      %847 = vst.msk [vmem:[%s654 + $0x169] sm:$0xff] %vm816, %v781
      %848 = vst.msk [vmem:[%s654 + $0x171] sm:$0xff] %vm816, %v783
      %v849 = vld [vmem:[#allocation2] sm:$0xff]
      %v850 = vld [vmem:[#allocation2 + $0x8] sm:$0xff]
      %v851 = vld [vmem:[#allocation2 + $0x18] sm:$0xff]
      %v852 = vld [vmem:[#allocation2 + $0x20] sm:$0xff]
      %v853 = vld [vmem:[#allocation2 + $0x30] sm:$0xff]
      %v854 = vld [vmem:[#allocation2 + $0x38] sm:$0xff]
      %v855 = vld [vmem:[#allocation2 + $0x48] sm:$0xff]
      %v856 = vld [vmem:[#allocation2 + $0x50] sm:$0xff]
      %v857 = vld [vmem:[#allocation2 + $0x60] sm:$0xff]
      %v858 = vld [vmem:[#allocation2 + $0x68] sm:$0xff]
      %v859 = vld [vmem:[#allocation2 + $0x78] sm:$0xff]
      %v860 = vld [vmem:[#allocation2 + $0x80] sm:$0xff]
      %v861 = vld [vmem:[#allocation2 + $0x90] sm:$0xff]
      %v862 = vld [vmem:[#allocation2 + $0x98] sm:$0xff]
      %v863 = vld [vmem:[#allocation2 + $0xa8] sm:$0xff]
      %v864 = vld [vmem:[#allocation2 + $0xb0] sm:$0xff]
      %v865 = vld [vmem:[#allocation2 + $0xc0] sm:$0xff]
      %v866 = vld [vmem:[#allocation2 + $0xc8] sm:$0xff]
      %v867 = vld [vmem:[#allocation2 + $0xd8] sm:$0xff]
      %v868 = vld [vmem:[#allocation2 + $0xe0] sm:$0xff]
      %v869 = vld [vmem:[#allocation2 + $0xf0] sm:$0xff]
      %v870 = vld [vmem:[#allocation2 + $0xf8] sm:$0xff]
      %v871 = vld [vmem:[#allocation2 + $0x108] sm:$0xff]
      %v872 = vld [vmem:[#allocation2 + $0x110] sm:$0xff]
      %v873 = vld [vmem:[#allocation2 + $0x120] sm:$0xff]
      %v874 = vld [vmem:[#allocation2 + $0x128] sm:$0xff]
      %v875 = vld [vmem:[#allocation2 + $0x138] sm:$0xff]
      %v876 = vld [vmem:[#allocation2 + $0x140] sm:$0xff]
      %v877 = vld [vmem:[#allocation2 + $0x150] sm:$0xff]
      %v878 = vld [vmem:[#allocation2 + $0x158] sm:$0xff]
      %v879 = vld [vmem:[#allocation2 + $0x168] sm:$0xff]
      %v880 = vld [vmem:[#allocation2 + $0x170] sm:$0xff]
      %v881 = vld [vmem:[#allocation2 + $0x1] sm:$0xff]
      %v882 = vld [vmem:[#allocation2 + $0x9] sm:$0xff]
      %v883 = vld [vmem:[#allocation2 + $0x19] sm:$0xff]
      %v884 = vld [vmem:[#allocation2 + $0x21] sm:$0xff]
      %v885 = vld [vmem:[#allocation2 + $0x31] sm:$0xff]
      %v886 = vld [vmem:[#allocation2 + $0x39] sm:$0xff]
      %v887 = vld [vmem:[#allocation2 + $0x49] sm:$0xff]
      %v888 = vld [vmem:[#allocation2 + $0x51] sm:$0xff]
      %v889 = vld [vmem:[#allocation2 + $0x61] sm:$0xff]
      %v890 = vld [vmem:[#allocation2 + $0x69] sm:$0xff]
      %v891 = vld [vmem:[#allocation2 + $0x79] sm:$0xff]
      %v892 = vld [vmem:[#allocation2 + $0x81] sm:$0xff]
      %v893 = vld [vmem:[#allocation2 + $0x91] sm:$0xff]
      %v894 = vld [vmem:[#allocation2 + $0x99] sm:$0xff]
      %v895 = vld [vmem:[#allocation2 + $0xa9] sm:$0xff]
      %v896 = vld [vmem:[#allocation2 + $0xb1] sm:$0xff]
      %v897 = vld [vmem:[#allocation2 + $0xc1] sm:$0xff]
      %v898 = vld [vmem:[#allocation2 + $0xc9] sm:$0xff]
      %v899 = vld [vmem:[#allocation2 + $0xd9] sm:$0xff]
      %v900 = vld [vmem:[#allocation2 + $0xe1] sm:$0xff]
      %v901 = vld [vmem:[#allocation2 + $0xf1] sm:$0xff]
      %v902 = vld [vmem:[#allocation2 + $0xf9] sm:$0xff]
      %v903 = vld [vmem:[#allocation2 + $0x109] sm:$0xff]
      %v904 = vld [vmem:[#allocation2 + $0x111] sm:$0xff]
      %v905 = vld [vmem:[#allocation2 + $0x121] sm:$0xff]
      %v906 = vld [vmem:[#allocation2 + $0x129] sm:$0xff]
      %v907 = vld [vmem:[#allocation2 + $0x139] sm:$0xff]
      %v908 = vld [vmem:[#allocation2 + $0x141] sm:$0xff]
      %v909 = vld [vmem:[#allocation2 + $0x151] sm:$0xff]
      %v910 = vld [vmem:[#allocation2 + $0x159] sm:$0xff]
      %v911 = vld [vmem:[#allocation2 + $0x169] sm:$0xff]
      %v912 = vld [vmem:[#allocation2 + $0x171] sm:$0xff]
      %v913 = vld [vmem:[#allocation2 + $0x2] sm:$0xff]
      %v914 = vld [vmem:[#allocation2 + $0xa] sm:$0xff]
      %v915 = vld [vmem:[#allocation2 + $0x1a] sm:$0xff]
      %v916 = vld [vmem:[#allocation2 + $0x22] sm:$0xff]
      %v917 = vld [vmem:[#allocation2 + $0x32] sm:$0xff]
      %v918 = vld [vmem:[#allocation2 + $0x3a] sm:$0xff]
      %v919 = vld [vmem:[#allocation2 + $0x4a] sm:$0xff]
      %v920 = vld [vmem:[#allocation2 + $0x52] sm:$0xff]
      %v921 = vld [vmem:[#allocation2 + $0x62] sm:$0xff]
      %v922 = vld [vmem:[#allocation2 + $0x6a] sm:$0xff]
      %v923 = vld [vmem:[#allocation2 + $0x7a] sm:$0xff]
      %v924 = vld [vmem:[#allocation2 + $0x82] sm:$0xff]
      %v925 = vld [vmem:[#allocation2 + $0x92] sm:$0xff]
      %v926 = vld [vmem:[#allocation2 + $0x9a] sm:$0xff]
      %v927 = vld [vmem:[#allocation2 + $0xaa] sm:$0xff]
      %v928 = vld [vmem:[#allocation2 + $0xb2] sm:$0xff]
      %v929 = vld [vmem:[#allocation2 + $0xc2] sm:$0xff]
      %v930 = vld [vmem:[#allocation2 + $0xca] sm:$0xff]
      %v931 = vld [vmem:[#allocation2 + $0xda] sm:$0xff]
      %v932 = vld [vmem:[#allocation2 + $0xe2] sm:$0xff]
      %v933 = vld [vmem:[#allocation2 + $0xf2] sm:$0xff]
      %v934 = vld [vmem:[#allocation2 + $0xfa] sm:$0xff]
      %v935 = vld [vmem:[#allocation2 + $0x10a] sm:$0xff]
      %v936 = vld [vmem:[#allocation2 + $0x112] sm:$0xff]
      %v937 = vld [vmem:[#allocation2 + $0x122] sm:$0xff]
      %v938 = vld [vmem:[#allocation2 + $0x12a] sm:$0xff]
      %v939 = vld [vmem:[#allocation2 + $0x13a] sm:$0xff]
      %v940 = vld [vmem:[#allocation2 + $0x142] sm:$0xff]
      %v941 = vld [vmem:[#allocation2 + $0x152] sm:$0xff]
      %v942 = vld [vmem:[#allocation2 + $0x15a] sm:$0xff]
      %v943 = vld [vmem:[#allocation2 + $0x16a] sm:$0xff]
      %v944 = vld [vmem:[#allocation2 + $0x172] sm:$0xff]
      %v945 = vld [vmem:[%s654] sm:$0xff]
      %v946 = vld [vmem:[%s654 + $0x8] sm:$0xff]
      %v947 = vld [vmem:[%s654 + $0x18] sm:$0xff]
      %v948 = vld [vmem:[%s654 + $0x20] sm:$0xff]
      %v949 = vld [vmem:[%s654 + $0x30] sm:$0xff]
      %v950 = vld [vmem:[%s654 + $0x38] sm:$0xff]
      %v951 = vld [vmem:[%s654 + $0x48] sm:$0xff]
      %v952 = vld [vmem:[%s654 + $0x50] sm:$0xff]
      %v953 = vld [vmem:[%s654 + $0x60] sm:$0xff]
      %v954 = vld [vmem:[%s654 + $0x68] sm:$0xff]
      %v955 = vld [vmem:[%s654 + $0x78] sm:$0xff]
      %v956 = vld [vmem:[%s654 + $0x80] sm:$0xff]
      %v957 = vld [vmem:[%s654 + $0x90] sm:$0xff]
      %v958 = vld [vmem:[%s654 + $0x98] sm:$0xff]
      %v959 = vld [vmem:[%s654 + $0xa8] sm:$0xff]
      %v960 = vld [vmem:[%s654 + $0xb0] sm:$0xff]
      %v961 = vld [vmem:[%s654 + $0xc0] sm:$0xff]
      %v962 = vld [vmem:[%s654 + $0xc8] sm:$0xff]
      %v963 = vld [vmem:[%s654 + $0xd8] sm:$0xff]
      %v964 = vld [vmem:[%s654 + $0xe0] sm:$0xff]
      %v965 = vld [vmem:[%s654 + $0xf0] sm:$0xff]
      %v966 = vld [vmem:[%s654 + $0xf8] sm:$0xff]
      %v967 = vld [vmem:[%s654 + $0x108] sm:$0xff]
      %v968 = vld [vmem:[%s654 + $0x110] sm:$0xff]
      %v969 = vld [vmem:[%s654 + $0x120] sm:$0xff]
      %v970 = vld [vmem:[%s654 + $0x128] sm:$0xff]
      %v971 = vld [vmem:[%s654 + $0x138] sm:$0xff]
      %v972 = vld [vmem:[%s654 + $0x140] sm:$0xff]
      %v973 = vld [vmem:[%s654 + $0x150] sm:$0xff]
      %v974 = vld [vmem:[%s654 + $0x158] sm:$0xff]
      %v975 = vld [vmem:[%s654 + $0x168] sm:$0xff]
      %v976 = vld [vmem:[%s654 + $0x170] sm:$0xff]
      %v977 = vld [vmem:[%s654 + $0x1] sm:$0xff]
      %v978 = vld [vmem:[%s654 + $0x9] sm:$0xff]
      %v979 = vld [vmem:[%s654 + $0x19] sm:$0xff]
      %v980 = vld [vmem:[%s654 + $0x21] sm:$0xff]
      %v981 = vld [vmem:[%s654 + $0x31] sm:$0xff]
      %v982 = vld [vmem:[%s654 + $0x39] sm:$0xff]
      %v983 = vld [vmem:[%s654 + $0x49] sm:$0xff]
      %v984 = vld [vmem:[%s654 + $0x51] sm:$0xff]
      %v985 = vld [vmem:[%s654 + $0x61] sm:$0xff]
      %v986 = vld [vmem:[%s654 + $0x69] sm:$0xff]
      %v987 = vld [vmem:[%s654 + $0x79] sm:$0xff]
      %v988 = vld [vmem:[%s654 + $0x81] sm:$0xff]
      %v989 = vld [vmem:[%s654 + $0x91] sm:$0xff]
      %v990 = vld [vmem:[%s654 + $0x99] sm:$0xff]
      %v991 = vld [vmem:[%s654 + $0xa9] sm:$0xff]
      %v992 = vld [vmem:[%s654 + $0xb1] sm:$0xff]
      %v993 = vld [vmem:[%s654 + $0xc1] sm:$0xff]
      %v994 = vld [vmem:[%s654 + $0xc9] sm:$0xff]
      %v995 = vld [vmem:[%s654 + $0xd9] sm:$0xff]
      %v996 = vld [vmem:[%s654 + $0xe1] sm:$0xff]
      %v997 = vld [vmem:[%s654 + $0xf1] sm:$0xff]
      %v998 = vld [vmem:[%s654 + $0xf9] sm:$0xff]
      %v999 = vld [vmem:[%s654 + $0x109] sm:$0xff]
      %v1000 = vld [vmem:[%s654 + $0x111] sm:$0xff]
      %v1001 = vld [vmem:[%s654 + $0x121] sm:$0xff]
      %v1002 = vld [vmem:[%s654 + $0x129] sm:$0xff]
      %v1003 = vld [vmem:[%s654 + $0x139] sm:$0xff]
      %v1004 = vld [vmem:[%s654 + $0x141] sm:$0xff]
      %v1005 = vld [vmem:[%s654 + $0x151] sm:$0xff]
      %v1006 = vld [vmem:[%s654 + $0x159] sm:$0xff]
      %v1007 = vld [vmem:[%s654 + $0x169] sm:$0xff]
      %v1008 = vld [vmem:[%s654 + $0x171] sm:$0xff]
      %v1009 = vld [vmem:[%s654 + $0x2] sm:$0xff]
      %v1010 = vld [vmem:[%s654 + $0xa] sm:$0xff]
      %v1011 = vld [vmem:[%s654 + $0x1a] sm:$0xff]
      %v1012 = vld [vmem:[%s654 + $0x22] sm:$0xff]
      %v1013 = vld [vmem:[%s654 + $0x32] sm:$0xff]
      %v1014 = vld [vmem:[%s654 + $0x3a] sm:$0xff]
      %v1015 = vld [vmem:[%s654 + $0x4a] sm:$0xff]
      %v1016 = vld [vmem:[%s654 + $0x52] sm:$0xff]
      %v1017 = vld [vmem:[%s654 + $0x62] sm:$0xff]
      %v1018 = vld [vmem:[%s654 + $0x6a] sm:$0xff]
      %v1019 = vld [vmem:[%s654 + $0x7a] sm:$0xff]
      %v1020 = vld [vmem:[%s654 + $0x82] sm:$0xff]
      %v1021 = vld [vmem:[%s654 + $0x92] sm:$0xff]
      %v1022 = vld [vmem:[%s654 + $0x9a] sm:$0xff]
      %v1023 = vld [vmem:[%s654 + $0xaa] sm:$0xff]
      %v1024 = vld [vmem:[%s654 + $0xb2] sm:$0xff]
      %v1025 = vld [vmem:[%s654 + $0xc2] sm:$0xff]
      %v1026 = vld [vmem:[%s654 + $0xca] sm:$0xff]
      %v1027 = vld [vmem:[%s654 + $0xda] sm:$0xff]
      %v1028 = vld [vmem:[%s654 + $0xe2] sm:$0xff]
      %v1029 = vld [vmem:[%s654 + $0xf2] sm:$0xff]
      %v1030 = vld [vmem:[%s654 + $0xfa] sm:$0xff]
      %v1031 = vld [vmem:[%s654 + $0x10a] sm:$0xff]
      %v1032 = vld [vmem:[%s654 + $0x112] sm:$0xff]
      %v1033 = vld [vmem:[%s654 + $0x122] sm:$0xff]
      %v1034 = vld [vmem:[%s654 + $0x12a] sm:$0xff]
      %v1035 = vld [vmem:[%s654 + $0x13a] sm:$0xff]
      %v1036 = vld [vmem:[%s654 + $0x142] sm:$0xff]
      %v1037 = vld [vmem:[%s654 + $0x152] sm:$0xff]
      %v1038 = vld [vmem:[%s654 + $0x15a] sm:$0xff]
      %v1039 = vld [vmem:[%s654 + $0x16a] sm:$0xff]
      %v1040 = vld [vmem:[%s654 + $0x172] sm:$0xff]
      %s1041 = scalar_lea.vmem [#allocation2], 48
      %v1042 = vld [vmem:[%s1041] sm:$0xff]
      %v1043 = vld [vmem:[%s1041 + $0x8] sm:$0xff]
      %v1044 = vld [vmem:[%s1041 + $0x18] sm:$0xff]
      %v1045 = vld [vmem:[%s1041 + $0x20] sm:$0xff]
      %v1046 = vld [vmem:[%s1041 + $0x30] sm:$0xff]
      %v1047 = vld [vmem:[%s1041 + $0x38] sm:$0xff]
      %v1048 = vld [vmem:[%s1041 + $0x48] sm:$0xff]
      %v1049 = vld [vmem:[%s1041 + $0x50] sm:$0xff]
      %v1050 = vld [vmem:[%s1041 + $0x60] sm:$0xff]
      %v1051 = vld [vmem:[%s1041 + $0x68] sm:$0xff]
      %v1052 = vld [vmem:[%s1041 + $0x78] sm:$0xff]
      %v1053 = vld [vmem:[%s1041 + $0x80] sm:$0xff]
      %v1054 = vld [vmem:[%s1041 + $0x90] sm:$0xff]
      %v1055 = vld [vmem:[%s1041 + $0x98] sm:$0xff]
      %v1056 = vld [vmem:[%s1041 + $0xa8] sm:$0xff]
      %v1057 = vld [vmem:[%s1041 + $0xb0] sm:$0xff]
      %v1058 = vld [vmem:[%s1041 + $0xc0] sm:$0xff]
      %v1059 = vld [vmem:[%s1041 + $0xc8] sm:$0xff]
      %v1060 = vld [vmem:[%s1041 + $0xd8] sm:$0xff]
      %v1061 = vld [vmem:[%s1041 + $0xe0] sm:$0xff]
      %v1062 = vld [vmem:[%s1041 + $0xf0] sm:$0xff]
      %v1063 = vld [vmem:[%s1041 + $0xf8] sm:$0xff]
      %v1064 = vld [vmem:[%s1041 + $0x108] sm:$0xff]
      %v1065 = vld [vmem:[%s1041 + $0x110] sm:$0xff]
      %v1066 = vld [vmem:[%s1041 + $0x120] sm:$0xff]
      %v1067 = vld [vmem:[%s1041 + $0x128] sm:$0xff]
      %v1068 = vld [vmem:[%s1041 + $0x138] sm:$0xff]
      %v1069 = vld [vmem:[%s1041 + $0x140] sm:$0xff]
      %v1070 = vld [vmem:[%s1041 + $0x150] sm:$0xff]
      %v1071 = vld [vmem:[%s1041 + $0x158] sm:$0xff]
      %v1072 = vld [vmem:[%s1041 + $0x168] sm:$0xff]
      %v1073 = vld [vmem:[%s1041 + $0x170] sm:$0xff]
      %v1074 = vld [vmem:[%s1041 + $0x1] sm:$0xff]
      %v1075 = vld [vmem:[%s1041 + $0x9] sm:$0xff]
      %v1076 = vld [vmem:[%s1041 + $0x19] sm:$0xff]
      %v1077 = vld [vmem:[%s1041 + $0x21] sm:$0xff]
      %v1078 = vld [vmem:[%s1041 + $0x31] sm:$0xff]
      %v1079 = vld [vmem:[%s1041 + $0x39] sm:$0xff]
      %v1080 = vld [vmem:[%s1041 + $0x49] sm:$0xff]
      %v1081 = vld [vmem:[%s1041 + $0x51] sm:$0xff]
      %v1082 = vld [vmem:[%s1041 + $0x61] sm:$0xff]
      %v1083 = vld [vmem:[%s1041 + $0x69] sm:$0xff]
      %v1084 = vld [vmem:[%s1041 + $0x79] sm:$0xff]
      %v1085 = vld [vmem:[%s1041 + $0x81] sm:$0xff]
      %v1086 = vld [vmem:[%s1041 + $0x91] sm:$0xff]
      %v1087 = vld [vmem:[%s1041 + $0x99] sm:$0xff]
      %v1088 = vld [vmem:[%s1041 + $0xa9] sm:$0xff]
      %v1089 = vld [vmem:[%s1041 + $0xb1] sm:$0xff]
      %v1090 = vld [vmem:[%s1041 + $0xc1] sm:$0xff]
      %v1091 = vld [vmem:[%s1041 + $0xc9] sm:$0xff]
      %v1092 = vld [vmem:[%s1041 + $0xd9] sm:$0xff]
      %v1093 = vld [vmem:[%s1041 + $0xe1] sm:$0xff]
      %v1094 = vld [vmem:[%s1041 + $0xf1] sm:$0xff]
      %v1095 = vld [vmem:[%s1041 + $0xf9] sm:$0xff]
      %v1096 = vld [vmem:[%s1041 + $0x109] sm:$0xff]
      %v1097 = vld [vmem:[%s1041 + $0x111] sm:$0xff]
      %v1098 = vld [vmem:[%s1041 + $0x121] sm:$0xff]
      %v1099 = vld [vmem:[%s1041 + $0x129] sm:$0xff]
      %v1100 = vld [vmem:[%s1041 + $0x139] sm:$0xff]
      %v1101 = vld [vmem:[%s1041 + $0x141] sm:$0xff]
      %v1102 = vld [vmem:[%s1041 + $0x151] sm:$0xff]
      %v1103 = vld [vmem:[%s1041 + $0x159] sm:$0xff]
      %v1104 = vld [vmem:[%s1041 + $0x169] sm:$0xff]
      %v1105 = vld [vmem:[%s1041 + $0x171] sm:$0xff]
      %v1106 = vld [vmem:[%s1041 + $0x2] sm:$0xff]
      %v1107 = vld [vmem:[%s1041 + $0xa] sm:$0xff]
      %v1108 = vld [vmem:[%s1041 + $0x1a] sm:$0xff]
      %v1109 = vld [vmem:[%s1041 + $0x22] sm:$0xff]
      %v1110 = vld [vmem:[%s1041 + $0x32] sm:$0xff]
      %v1111 = vld [vmem:[%s1041 + $0x3a] sm:$0xff]
      %v1112 = vld [vmem:[%s1041 + $0x4a] sm:$0xff]
      %v1113 = vld [vmem:[%s1041 + $0x52] sm:$0xff]
      %v1114 = vld [vmem:[%s1041 + $0x62] sm:$0xff]
      %v1115 = vld [vmem:[%s1041 + $0x6a] sm:$0xff]
      %v1116 = vld [vmem:[%s1041 + $0x7a] sm:$0xff]
      %v1117 = vld [vmem:[%s1041 + $0x82] sm:$0xff]
      %v1118 = vld [vmem:[%s1041 + $0x92] sm:$0xff]
      %v1119 = vld [vmem:[%s1041 + $0x9a] sm:$0xff]
      %v1120 = vld [vmem:[%s1041 + $0xaa] sm:$0xff]
      %v1121 = vld [vmem:[%s1041 + $0xb2] sm:$0xff]
      %v1122 = vld [vmem:[%s1041 + $0xc2] sm:$0xff]
      %v1123 = vld [vmem:[%s1041 + $0xca] sm:$0xff]
      %v1124 = vld [vmem:[%s1041 + $0xda] sm:$0xff]
      %v1125 = vld [vmem:[%s1041 + $0xe2] sm:$0xff]
      %v1126 = vld [vmem:[%s1041 + $0xf2] sm:$0xff]
      %v1127 = vld [vmem:[%s1041 + $0xfa] sm:$0xff]
      %v1128 = vld [vmem:[%s1041 + $0x10a] sm:$0xff]
      %v1129 = vld [vmem:[%s1041 + $0x112] sm:$0xff]
      %v1130 = vld [vmem:[%s1041 + $0x122] sm:$0xff]
      %v1131 = vld [vmem:[%s1041 + $0x12a] sm:$0xff]
      %v1132 = vld [vmem:[%s1041 + $0x13a] sm:$0xff]
      %v1133 = vld [vmem:[%s1041 + $0x142] sm:$0xff]
      %v1134 = vld [vmem:[%s1041 + $0x152] sm:$0xff]
      %v1135 = vld [vmem:[%s1041 + $0x15a] sm:$0xff]
      %v1136 = vld [vmem:[%s1041 + $0x16a] sm:$0xff]
      %v1137 = vld [vmem:[%s1041 + $0x172] sm:$0xff]
      %1170 = vrot.lane.b32.xlu0 %v881, 12
      %v1171 = vpop.permute.xlu0 %1170
      %1172 = vrot.lane.b32.xlu0 %v882, 12
      %v1173 = vpop.permute.xlu0 %1172
      %1174 = vrot.lane.b32.xlu0 %v883, 12
      %v1175 = vpop.permute.xlu0 %1174
      %1176 = vrot.lane.b32.xlu0 %v884, 12
      %v1177 = vpop.permute.xlu0 %1176
      %1178 = vrot.lane.b32.xlu0 %v885, 12
      %v1179 = vpop.permute.xlu0 %1178
      %1180 = vrot.lane.b32.xlu0 %v886, 12
      %v1181 = vpop.permute.xlu0 %1180
      %1182 = vrot.lane.b32.xlu0 %v887, 12
      %v1183 = vpop.permute.xlu0 %1182
      %1184 = vrot.lane.b32.xlu0 %v888, 12
      %v1185 = vpop.permute.xlu0 %1184
      %1186 = vrot.lane.b32.xlu0 %v889, 12
      %v1187 = vpop.permute.xlu0 %1186
      %1188 = vrot.lane.b32.xlu0 %v890, 12
      %v1189 = vpop.permute.xlu0 %1188
      %1190 = vrot.lane.b32.xlu0 %v891, 12
      %v1191 = vpop.permute.xlu0 %1190
      %1192 = vrot.lane.b32.xlu0 %v892, 12
      %v1193 = vpop.permute.xlu0 %1192
      %1194 = vrot.lane.b32.xlu0 %v893, 12
      %v1195 = vpop.permute.xlu0 %1194
      %1196 = vrot.lane.b32.xlu0 %v894, 12
      %v1197 = vpop.permute.xlu0 %1196
      %1198 = vrot.lane.b32.xlu0 %v895, 12
      %v1199 = vpop.permute.xlu0 %1198
      %1200 = vrot.lane.b32.xlu0 %v896, 12
      %v1201 = vpop.permute.xlu0 %1200
      %1202 = vrot.lane.b32.xlu0 %v897, 12
      %v1203 = vpop.permute.xlu0 %1202
      %1204 = vrot.lane.b32.xlu0 %v898, 12
      %v1205 = vpop.permute.xlu0 %1204
      %1206 = vrot.lane.b32.xlu0 %v899, 12
      %v1207 = vpop.permute.xlu0 %1206
      %1208 = vrot.lane.b32.xlu0 %v900, 12
      %v1209 = vpop.permute.xlu0 %1208
      %1210 = vrot.lane.b32.xlu0 %v901, 12
      %v1211 = vpop.permute.xlu0 %1210
      %1212 = vrot.lane.b32.xlu0 %v902, 12
      %v1213 = vpop.permute.xlu0 %1212
      %1214 = vrot.lane.b32.xlu0 %v903, 12
      %v1215 = vpop.permute.xlu0 %1214
      %1216 = vrot.lane.b32.xlu0 %v904, 12
      %v1217 = vpop.permute.xlu0 %1216
      %1218 = vrot.lane.b32.xlu0 %v905, 12
      %v1219 = vpop.permute.xlu0 %1218
      %1220 = vrot.lane.b32.xlu0 %v906, 12
      %v1221 = vpop.permute.xlu0 %1220
      %1222 = vrot.lane.b32.xlu0 %v907, 12
      %v1223 = vpop.permute.xlu0 %1222
      %1224 = vrot.lane.b32.xlu0 %v908, 12
      %v1225 = vpop.permute.xlu0 %1224
      %1226 = vrot.lane.b32.xlu0 %v909, 12
      %v1227 = vpop.permute.xlu0 %1226
      %1228 = vrot.lane.b32.xlu0 %v910, 12
      %v1229 = vpop.permute.xlu0 %1228
      %1230 = vrot.lane.b32.xlu0 %v911, 12
      %v1231 = vpop.permute.xlu0 %1230
      %1232 = vrot.lane.b32.xlu0 %v912, 12
      %v1233 = vpop.permute.xlu0 %1232
      %1298 = vrot.lane.b32.xlu0 %v913, 24
      %v1299 = vpop.permute.xlu0 %1298
      %1300 = vrot.lane.b32.xlu0 %v914, 24
      %v1301 = vpop.permute.xlu0 %1300
      %1302 = vrot.lane.b32.xlu0 %v915, 24
      %v1303 = vpop.permute.xlu0 %1302
      %1304 = vrot.lane.b32.xlu0 %v916, 24
      %v1305 = vpop.permute.xlu0 %1304
      %1306 = vrot.lane.b32.xlu0 %v917, 24
      %v1307 = vpop.permute.xlu0 %1306
      %1308 = vrot.lane.b32.xlu0 %v918, 24
      %v1309 = vpop.permute.xlu0 %1308
      %1310 = vrot.lane.b32.xlu0 %v919, 24
      %v1311 = vpop.permute.xlu0 %1310
      %1312 = vrot.lane.b32.xlu0 %v920, 24
      %v1313 = vpop.permute.xlu0 %1312
      %1314 = vrot.lane.b32.xlu0 %v921, 24
      %v1315 = vpop.permute.xlu0 %1314
      %1316 = vrot.lane.b32.xlu0 %v922, 24
      %v1317 = vpop.permute.xlu0 %1316
      %1318 = vrot.lane.b32.xlu0 %v923, 24
      %v1319 = vpop.permute.xlu0 %1318
      %1320 = vrot.lane.b32.xlu0 %v924, 24
      %v1321 = vpop.permute.xlu0 %1320
      %1322 = vrot.lane.b32.xlu0 %v925, 24
      %v1323 = vpop.permute.xlu0 %1322
      %1324 = vrot.lane.b32.xlu0 %v926, 24
      %v1325 = vpop.permute.xlu0 %1324
      %1326 = vrot.lane.b32.xlu0 %v927, 24
      %v1327 = vpop.permute.xlu0 %1326
      %1328 = vrot.lane.b32.xlu0 %v928, 24
      %v1329 = vpop.permute.xlu0 %1328
      %1330 = vrot.lane.b32.xlu0 %v929, 24
      %v1331 = vpop.permute.xlu0 %1330
      %1332 = vrot.lane.b32.xlu0 %v930, 24
      %v1333 = vpop.permute.xlu0 %1332
      %1334 = vrot.lane.b32.xlu0 %v931, 24
      %v1335 = vpop.permute.xlu0 %1334
      %1336 = vrot.lane.b32.xlu0 %v932, 24
      %v1337 = vpop.permute.xlu0 %1336
      %1338 = vrot.lane.b32.xlu0 %v933, 24
      %v1339 = vpop.permute.xlu0 %1338
      %1340 = vrot.lane.b32.xlu0 %v934, 24
      %v1341 = vpop.permute.xlu0 %1340
      %1342 = vrot.lane.b32.xlu0 %v935, 24
      %v1343 = vpop.permute.xlu0 %1342
      %1344 = vrot.lane.b32.xlu0 %v936, 24
      %v1345 = vpop.permute.xlu0 %1344
      %1346 = vrot.lane.b32.xlu0 %v937, 24
      %v1347 = vpop.permute.xlu0 %1346
      %1348 = vrot.lane.b32.xlu0 %v938, 24
      %v1349 = vpop.permute.xlu0 %1348
      %1350 = vrot.lane.b32.xlu0 %v939, 24
      %v1351 = vpop.permute.xlu0 %1350
      %1352 = vrot.lane.b32.xlu0 %v940, 24
      %v1353 = vpop.permute.xlu0 %1352
      %1354 = vrot.lane.b32.xlu0 %v941, 24
      %v1355 = vpop.permute.xlu0 %1354
      %1356 = vrot.lane.b32.xlu0 %v942, 24
      %v1357 = vpop.permute.xlu0 %1356
      %1358 = vrot.lane.b32.xlu0 %v943, 24
      %v1359 = vpop.permute.xlu0 %1358
      %1360 = vrot.lane.b32.xlu0 %v944, 24
      %v1361 = vpop.permute.xlu0 %1360
      %1426 = vrot.lane.b32.xlu0 %v945, 36
      %v1427 = vpop.permute.xlu0 %1426
      %1428 = vrot.lane.b32.xlu0 %v946, 36
      %v1429 = vpop.permute.xlu0 %1428
      %1430 = vrot.lane.b32.xlu0 %v947, 36
      %v1431 = vpop.permute.xlu0 %1430
      %1432 = vrot.lane.b32.xlu0 %v948, 36
      %v1433 = vpop.permute.xlu0 %1432
      %1434 = vrot.lane.b32.xlu0 %v949, 36
      %v1435 = vpop.permute.xlu0 %1434
      %1436 = vrot.lane.b32.xlu0 %v950, 36
      %v1437 = vpop.permute.xlu0 %1436
      %1438 = vrot.lane.b32.xlu0 %v951, 36
      %v1439 = vpop.permute.xlu0 %1438
      %1440 = vrot.lane.b32.xlu0 %v952, 36
      %v1441 = vpop.permute.xlu0 %1440
      %1442 = vrot.lane.b32.xlu0 %v953, 36
      %v1443 = vpop.permute.xlu0 %1442
      %1444 = vrot.lane.b32.xlu0 %v954, 36
      %v1445 = vpop.permute.xlu0 %1444
      %1446 = vrot.lane.b32.xlu0 %v955, 36
      %v1447 = vpop.permute.xlu0 %1446
      %1448 = vrot.lane.b32.xlu0 %v956, 36
      %v1449 = vpop.permute.xlu0 %1448
      %1450 = vrot.lane.b32.xlu0 %v957, 36
      %v1451 = vpop.permute.xlu0 %1450
      %1452 = vrot.lane.b32.xlu0 %v958, 36
      %v1453 = vpop.permute.xlu0 %1452
      %1454 = vrot.lane.b32.xlu0 %v959, 36
      %v1455 = vpop.permute.xlu0 %1454
      %1456 = vrot.lane.b32.xlu0 %v960, 36
      %v1457 = vpop.permute.xlu0 %1456
      %1458 = vrot.lane.b32.xlu0 %v961, 36
      %v1459 = vpop.permute.xlu0 %1458
      %1460 = vrot.lane.b32.xlu0 %v962, 36
      %v1461 = vpop.permute.xlu0 %1460
      %1462 = vrot.lane.b32.xlu0 %v963, 36
      %v1463 = vpop.permute.xlu0 %1462
      %1464 = vrot.lane.b32.xlu0 %v964, 36
      %v1465 = vpop.permute.xlu0 %1464
      %1466 = vrot.lane.b32.xlu0 %v965, 36
      %v1467 = vpop.permute.xlu0 %1466
      %1468 = vrot.lane.b32.xlu0 %v966, 36
      %v1469 = vpop.permute.xlu0 %1468
      %1470 = vrot.lane.b32.xlu0 %v967, 36
      %v1471 = vpop.permute.xlu0 %1470
      %1472 = vrot.lane.b32.xlu0 %v968, 36
      %v1473 = vpop.permute.xlu0 %1472
      %1474 = vrot.lane.b32.xlu0 %v969, 36
      %v1475 = vpop.permute.xlu0 %1474
      %1476 = vrot.lane.b32.xlu0 %v970, 36
      %v1477 = vpop.permute.xlu0 %1476
      %1478 = vrot.lane.b32.xlu0 %v971, 36
      %v1479 = vpop.permute.xlu0 %1478
      %1480 = vrot.lane.b32.xlu0 %v972, 36
      %v1481 = vpop.permute.xlu0 %1480
      %1482 = vrot.lane.b32.xlu0 %v973, 36
      %v1483 = vpop.permute.xlu0 %1482
      %1484 = vrot.lane.b32.xlu0 %v974, 36
      %v1485 = vpop.permute.xlu0 %1484
      %1486 = vrot.lane.b32.xlu0 %v975, 36
      %v1487 = vpop.permute.xlu0 %1486
      %1488 = vrot.lane.b32.xlu0 %v976, 36
      %v1489 = vpop.permute.xlu0 %1488
      %1554 = vrot.lane.b32.xlu0 %v977, 48
      %v1555 = vpop.permute.xlu0 %1554
      %1556 = vrot.lane.b32.xlu0 %v978, 48
      %v1557 = vpop.permute.xlu0 %1556
      %1558 = vrot.lane.b32.xlu0 %v979, 48
      %v1559 = vpop.permute.xlu0 %1558
      %1560 = vrot.lane.b32.xlu0 %v980, 48
      %v1561 = vpop.permute.xlu0 %1560
      %1562 = vrot.lane.b32.xlu0 %v981, 48
      %v1563 = vpop.permute.xlu0 %1562
      %1564 = vrot.lane.b32.xlu0 %v982, 48
      %v1565 = vpop.permute.xlu0 %1564
      %1566 = vrot.lane.b32.xlu0 %v983, 48
      %v1567 = vpop.permute.xlu0 %1566
      %1568 = vrot.lane.b32.xlu0 %v984, 48
      %v1569 = vpop.permute.xlu0 %1568
      %1570 = vrot.lane.b32.xlu0 %v985, 48
      %v1571 = vpop.permute.xlu0 %1570
      %1572 = vrot.lane.b32.xlu0 %v986, 48
      %v1573 = vpop.permute.xlu0 %1572
      %1574 = vrot.lane.b32.xlu0 %v987, 48
      %v1575 = vpop.permute.xlu0 %1574
      %1576 = vrot.lane.b32.xlu0 %v988, 48
      %v1577 = vpop.permute.xlu0 %1576
      %1578 = vrot.lane.b32.xlu0 %v989, 48
      %v1579 = vpop.permute.xlu0 %1578
      %1580 = vrot.lane.b32.xlu0 %v990, 48
      %v1581 = vpop.permute.xlu0 %1580
      %1582 = vrot.lane.b32.xlu0 %v991, 48
      %v1583 = vpop.permute.xlu0 %1582
      %1584 = vrot.lane.b32.xlu0 %v992, 48
      %v1585 = vpop.permute.xlu0 %1584
      %1586 = vrot.lane.b32.xlu0 %v993, 48
      %v1587 = vpop.permute.xlu0 %1586
      %1588 = vrot.lane.b32.xlu0 %v994, 48
      %v1589 = vpop.permute.xlu0 %1588
      %1590 = vrot.lane.b32.xlu0 %v995, 48
      %v1591 = vpop.permute.xlu0 %1590
      %1592 = vrot.lane.b32.xlu0 %v996, 48
      %v1593 = vpop.permute.xlu0 %1592
      %1594 = vrot.lane.b32.xlu0 %v997, 48
      %v1595 = vpop.permute.xlu0 %1594
      %1596 = vrot.lane.b32.xlu0 %v998, 48
      %v1597 = vpop.permute.xlu0 %1596
      %1598 = vrot.lane.b32.xlu0 %v999, 48
      %v1599 = vpop.permute.xlu0 %1598
      %1600 = vrot.lane.b32.xlu0 %v1000, 48
      %v1601 = vpop.permute.xlu0 %1600
      %1602 = vrot.lane.b32.xlu0 %v1001, 48
      %v1603 = vpop.permute.xlu0 %1602
      %1604 = vrot.lane.b32.xlu0 %v1002, 48
      %v1605 = vpop.permute.xlu0 %1604
      %1606 = vrot.lane.b32.xlu0 %v1003, 48
      %v1607 = vpop.permute.xlu0 %1606
      %1608 = vrot.lane.b32.xlu0 %v1004, 48
      %v1609 = vpop.permute.xlu0 %1608
      %1610 = vrot.lane.b32.xlu0 %v1005, 48
      %v1611 = vpop.permute.xlu0 %1610
      %1612 = vrot.lane.b32.xlu0 %v1006, 48
      %v1613 = vpop.permute.xlu0 %1612
      %1614 = vrot.lane.b32.xlu0 %v1007, 48
      %v1615 = vpop.permute.xlu0 %1614
      %1616 = vrot.lane.b32.xlu0 %v1008, 48
      %v1617 = vpop.permute.xlu0 %1616
      %1682 = vrot.lane.b32.xlu0 %v1009, 60
      %v1683 = vpop.permute.xlu0 %1682
      %1684 = vrot.lane.b32.xlu0 %v1010, 60
      %v1685 = vpop.permute.xlu0 %1684
      %1686 = vrot.lane.b32.xlu0 %v1011, 60
      %v1687 = vpop.permute.xlu0 %1686
      %1688 = vrot.lane.b32.xlu0 %v1012, 60
      %v1689 = vpop.permute.xlu0 %1688
      %1690 = vrot.lane.b32.xlu0 %v1013, 60
      %v1691 = vpop.permute.xlu0 %1690
      %1692 = vrot.lane.b32.xlu0 %v1014, 60
      %v1693 = vpop.permute.xlu0 %1692
      %1694 = vrot.lane.b32.xlu0 %v1015, 60
      %v1695 = vpop.permute.xlu0 %1694
      %1696 = vrot.lane.b32.xlu0 %v1016, 60
      %v1697 = vpop.permute.xlu0 %1696
      %1698 = vrot.lane.b32.xlu0 %v1017, 60
      %v1699 = vpop.permute.xlu0 %1698
      %1700 = vrot.lane.b32.xlu0 %v1018, 60
      %v1701 = vpop.permute.xlu0 %1700
      %1702 = vrot.lane.b32.xlu0 %v1019, 60
      %v1703 = vpop.permute.xlu0 %1702
      %1704 = vrot.lane.b32.xlu0 %v1020, 60
      %v1705 = vpop.permute.xlu0 %1704
      %1706 = vrot.lane.b32.xlu0 %v1021, 60
      %v1707 = vpop.permute.xlu0 %1706
      %1708 = vrot.lane.b32.xlu0 %v1022, 60
      %v1709 = vpop.permute.xlu0 %1708
      %1710 = vrot.lane.b32.xlu0 %v1023, 60
      %v1711 = vpop.permute.xlu0 %1710
      %1712 = vrot.lane.b32.xlu0 %v1024, 60
      %v1713 = vpop.permute.xlu0 %1712
      %1714 = vrot.lane.b32.xlu0 %v1025, 60
      %v1715 = vpop.permute.xlu0 %1714
      %1716 = vrot.lane.b32.xlu0 %v1026, 60
      %v1717 = vpop.permute.xlu0 %1716
      %1718 = vrot.lane.b32.xlu0 %v1027, 60
      %v1719 = vpop.permute.xlu0 %1718
      %1720 = vrot.lane.b32.xlu0 %v1028, 60
      %v1721 = vpop.permute.xlu0 %1720
      %1722 = vrot.lane.b32.xlu0 %v1029, 60
      %v1723 = vpop.permute.xlu0 %1722
      %1724 = vrot.lane.b32.xlu0 %v1030, 60
      %v1725 = vpop.permute.xlu0 %1724
      %1726 = vrot.lane.b32.xlu0 %v1031, 60
      %v1727 = vpop.permute.xlu0 %1726
      %1728 = vrot.lane.b32.xlu0 %v1032, 60
      %v1729 = vpop.permute.xlu0 %1728
      %1730 = vrot.lane.b32.xlu0 %v1033, 60
      %v1731 = vpop.permute.xlu0 %1730
      %1732 = vrot.lane.b32.xlu0 %v1034, 60
      %v1733 = vpop.permute.xlu0 %1732
      %1734 = vrot.lane.b32.xlu0 %v1035, 60
      %v1735 = vpop.permute.xlu0 %1734
      %1736 = vrot.lane.b32.xlu0 %v1036, 60
      %v1737 = vpop.permute.xlu0 %1736
      %1738 = vrot.lane.b32.xlu0 %v1037, 60
      %v1739 = vpop.permute.xlu0 %1738
      %1740 = vrot.lane.b32.xlu0 %v1038, 60
      %v1741 = vpop.permute.xlu0 %1740
      %1742 = vrot.lane.b32.xlu0 %v1039, 60
      %v1743 = vpop.permute.xlu0 %1742
      %1744 = vrot.lane.b32.xlu0 %v1040, 60
      %v1745 = vpop.permute.xlu0 %1744
      %1810 = vrot.lane.b32.xlu0 %v1042, 72
      %v1811 = vpop.permute.xlu0 %1810
      %1812 = vrot.lane.b32.xlu0 %v1043, 72
      %v1813 = vpop.permute.xlu0 %1812
      %1814 = vrot.lane.b32.xlu0 %v1044, 72
      %v1815 = vpop.permute.xlu0 %1814
      %1816 = vrot.lane.b32.xlu0 %v1045, 72
      %v1817 = vpop.permute.xlu0 %1816
      %1818 = vrot.lane.b32.xlu0 %v1046, 72
      %v1819 = vpop.permute.xlu0 %1818
      %1820 = vrot.lane.b32.xlu0 %v1047, 72
      %v1821 = vpop.permute.xlu0 %1820
      %1822 = vrot.lane.b32.xlu0 %v1048, 72
      %v1823 = vpop.permute.xlu0 %1822
      %1824 = vrot.lane.b32.xlu0 %v1049, 72
      %v1825 = vpop.permute.xlu0 %1824
      %1826 = vrot.lane.b32.xlu0 %v1050, 72
      %v1827 = vpop.permute.xlu0 %1826
      %1828 = vrot.lane.b32.xlu0 %v1051, 72
      %v1829 = vpop.permute.xlu0 %1828
      %1830 = vrot.lane.b32.xlu0 %v1052, 72
      %v1831 = vpop.permute.xlu0 %1830
      %1832 = vrot.lane.b32.xlu0 %v1053, 72
      %v1833 = vpop.permute.xlu0 %1832
      %1834 = vrot.lane.b32.xlu0 %v1054, 72
      %v1835 = vpop.permute.xlu0 %1834
      %1836 = vrot.lane.b32.xlu0 %v1055, 72
      %v1837 = vpop.permute.xlu0 %1836
      %1838 = vrot.lane.b32.xlu0 %v1056, 72
      %v1839 = vpop.permute.xlu0 %1838
      %1840 = vrot.lane.b32.xlu0 %v1057, 72
      %v1841 = vpop.permute.xlu0 %1840
      %1842 = vrot.lane.b32.xlu0 %v1058, 72
      %v1843 = vpop.permute.xlu0 %1842
      %1844 = vrot.lane.b32.xlu0 %v1059, 72
      %v1845 = vpop.permute.xlu0 %1844
      %1846 = vrot.lane.b32.xlu0 %v1060, 72
      %v1847 = vpop.permute.xlu0 %1846
      %1848 = vrot.lane.b32.xlu0 %v1061, 72
      %v1849 = vpop.permute.xlu0 %1848
      %1850 = vrot.lane.b32.xlu0 %v1062, 72
      %v1851 = vpop.permute.xlu0 %1850
      %1852 = vrot.lane.b32.xlu0 %v1063, 72
      %v1853 = vpop.permute.xlu0 %1852
      %1854 = vrot.lane.b32.xlu0 %v1064, 72
      %v1855 = vpop.permute.xlu0 %1854
      %1856 = vrot.lane.b32.xlu0 %v1065, 72
      %v1857 = vpop.permute.xlu0 %1856
      %1858 = vrot.lane.b32.xlu0 %v1066, 72
      %v1859 = vpop.permute.xlu0 %1858
      %1860 = vrot.lane.b32.xlu0 %v1067, 72
      %v1861 = vpop.permute.xlu0 %1860
      %1862 = vrot.lane.b32.xlu0 %v1068, 72
      %v1863 = vpop.permute.xlu0 %1862
      %1864 = vrot.lane.b32.xlu0 %v1069, 72
      %v1865 = vpop.permute.xlu0 %1864
      %1866 = vrot.lane.b32.xlu0 %v1070, 72
      %v1867 = vpop.permute.xlu0 %1866
      %1868 = vrot.lane.b32.xlu0 %v1071, 72
      %v1869 = vpop.permute.xlu0 %1868
      %1870 = vrot.lane.b32.xlu0 %v1072, 72
      %v1871 = vpop.permute.xlu0 %1870
      %1872 = vrot.lane.b32.xlu0 %v1073, 72
      %v1873 = vpop.permute.xlu0 %1872
      %1938 = vrot.lane.b32.xlu0 %v1074, 84
      %v1939 = vpop.permute.xlu0 %1938
      %1940 = vrot.lane.b32.xlu0 %v1075, 84
      %v1941 = vpop.permute.xlu0 %1940
      %1942 = vrot.lane.b32.xlu0 %v1076, 84
      %v1943 = vpop.permute.xlu0 %1942
      %1944 = vrot.lane.b32.xlu0 %v1077, 84
      %v1945 = vpop.permute.xlu0 %1944
      %1946 = vrot.lane.b32.xlu0 %v1078, 84
      %v1947 = vpop.permute.xlu0 %1946
      %1948 = vrot.lane.b32.xlu0 %v1079, 84
      %v1949 = vpop.permute.xlu0 %1948
      %1950 = vrot.lane.b32.xlu0 %v1080, 84
      %v1951 = vpop.permute.xlu0 %1950
      %1952 = vrot.lane.b32.xlu0 %v1081, 84
      %v1953 = vpop.permute.xlu0 %1952
      %1954 = vrot.lane.b32.xlu0 %v1082, 84
      %v1955 = vpop.permute.xlu0 %1954
      %1956 = vrot.lane.b32.xlu0 %v1083, 84
      %v1957 = vpop.permute.xlu0 %1956
      %1958 = vrot.lane.b32.xlu0 %v1084, 84
      %v1959 = vpop.permute.xlu0 %1958
      %1960 = vrot.lane.b32.xlu0 %v1085, 84
      %v1961 = vpop.permute.xlu0 %1960
      %1962 = vrot.lane.b32.xlu0 %v1086, 84
      %v1963 = vpop.permute.xlu0 %1962
      %1964 = vrot.lane.b32.xlu0 %v1087, 84
      %v1965 = vpop.permute.xlu0 %1964
      %1966 = vrot.lane.b32.xlu0 %v1088, 84
      %v1967 = vpop.permute.xlu0 %1966
      %1968 = vrot.lane.b32.xlu0 %v1089, 84
      %v1969 = vpop.permute.xlu0 %1968
      %1970 = vrot.lane.b32.xlu0 %v1090, 84
      %v1971 = vpop.permute.xlu0 %1970
      %1972 = vrot.lane.b32.xlu0 %v1091, 84
      %v1973 = vpop.permute.xlu0 %1972
      %1974 = vrot.lane.b32.xlu0 %v1092, 84
      %v1975 = vpop.permute.xlu0 %1974
      %1976 = vrot.lane.b32.xlu0 %v1093, 84
      %v1977 = vpop.permute.xlu0 %1976
      %1978 = vrot.lane.b32.xlu0 %v1094, 84
      %v1979 = vpop.permute.xlu0 %1978
      %1980 = vrot.lane.b32.xlu0 %v1095, 84
      %v1981 = vpop.permute.xlu0 %1980
      %1982 = vrot.lane.b32.xlu0 %v1096, 84
      %v1983 = vpop.permute.xlu0 %1982
      %1984 = vrot.lane.b32.xlu0 %v1097, 84
      %v1985 = vpop.permute.xlu0 %1984
      %1986 = vrot.lane.b32.xlu0 %v1098, 84
      %v1987 = vpop.permute.xlu0 %1986
      %1988 = vrot.lane.b32.xlu0 %v1099, 84
      %v1989 = vpop.permute.xlu0 %1988
      %1990 = vrot.lane.b32.xlu0 %v1100, 84
      %v1991 = vpop.permute.xlu0 %1990
      %1992 = vrot.lane.b32.xlu0 %v1101, 84
      %v1993 = vpop.permute.xlu0 %1992
      %1994 = vrot.lane.b32.xlu0 %v1102, 84
      %v1995 = vpop.permute.xlu0 %1994
      %1996 = vrot.lane.b32.xlu0 %v1103, 84
      %v1997 = vpop.permute.xlu0 %1996
      %1998 = vrot.lane.b32.xlu0 %v1104, 84
      %v1999 = vpop.permute.xlu0 %1998
      %2000 = vrot.lane.b32.xlu0 %v1105, 84
      %v2001 = vpop.permute.xlu0 %2000
      %2066 = vrot.lane.b32.xlu0 %v1106, 96
      %v2067 = vpop.permute.xlu0 %2066
      %2068 = vrot.lane.b32.xlu0 %v1107, 96
      %v2069 = vpop.permute.xlu0 %2068
      %2070 = vrot.lane.b32.xlu0 %v1108, 96
      %v2071 = vpop.permute.xlu0 %2070
      %2072 = vrot.lane.b32.xlu0 %v1109, 96
      %v2073 = vpop.permute.xlu0 %2072
      %2074 = vrot.lane.b32.xlu0 %v1110, 96
      %v2075 = vpop.permute.xlu0 %2074
      %2076 = vrot.lane.b32.xlu0 %v1111, 96
      %v2077 = vpop.permute.xlu0 %2076
      %2078 = vrot.lane.b32.xlu0 %v1112, 96
      %v2079 = vpop.permute.xlu0 %2078
      %2080 = vrot.lane.b32.xlu0 %v1113, 96
      %v2081 = vpop.permute.xlu0 %2080
      %2082 = vrot.lane.b32.xlu0 %v1114, 96
      %v2083 = vpop.permute.xlu0 %2082
      %2084 = vrot.lane.b32.xlu0 %v1115, 96
      %v2085 = vpop.permute.xlu0 %2084
      %2086 = vrot.lane.b32.xlu0 %v1116, 96
      %v2087 = vpop.permute.xlu0 %2086
      %2088 = vrot.lane.b32.xlu0 %v1117, 96
      %v2089 = vpop.permute.xlu0 %2088
      %2090 = vrot.lane.b32.xlu0 %v1118, 96
      %v2091 = vpop.permute.xlu0 %2090
      %2092 = vrot.lane.b32.xlu0 %v1119, 96
      %v2093 = vpop.permute.xlu0 %2092
      %2094 = vrot.lane.b32.xlu0 %v1120, 96
      %v2095 = vpop.permute.xlu0 %2094
      %2096 = vrot.lane.b32.xlu0 %v1121, 96
      %v2097 = vpop.permute.xlu0 %2096
      %2098 = vrot.lane.b32.xlu0 %v1122, 96
      %v2099 = vpop.permute.xlu0 %2098
      %2100 = vrot.lane.b32.xlu0 %v1123, 96
      %v2101 = vpop.permute.xlu0 %2100
      %2102 = vrot.lane.b32.xlu0 %v1124, 96
      %v2103 = vpop.permute.xlu0 %2102
      %2104 = vrot.lane.b32.xlu0 %v1125, 96
      %v2105 = vpop.permute.xlu0 %2104
      %2106 = vrot.lane.b32.xlu0 %v1126, 96
      %v2107 = vpop.permute.xlu0 %2106
      %2108 = vrot.lane.b32.xlu0 %v1127, 96
      %v2109 = vpop.permute.xlu0 %2108
      %2110 = vrot.lane.b32.xlu0 %v1128, 96
      %v2111 = vpop.permute.xlu0 %2110
      %2112 = vrot.lane.b32.xlu0 %v1129, 96
      %v2113 = vpop.permute.xlu0 %2112
      %2114 = vrot.lane.b32.xlu0 %v1130, 96
      %v2115 = vpop.permute.xlu0 %2114
      %2116 = vrot.lane.b32.xlu0 %v1131, 96
      %v2117 = vpop.permute.xlu0 %2116
      %2118 = vrot.lane.b32.xlu0 %v1132, 96
      %v2119 = vpop.permute.xlu0 %2118
      %2120 = vrot.lane.b32.xlu0 %v1133, 96
      %v2121 = vpop.permute.xlu0 %2120
      %2122 = vrot.lane.b32.xlu0 %v1134, 96
      %v2123 = vpop.permute.xlu0 %2122
      %2124 = vrot.lane.b32.xlu0 %v1135, 96
      %v2125 = vpop.permute.xlu0 %2124
      %2126 = vrot.lane.b32.xlu0 %v1136, 96
      %v2127 = vpop.permute.xlu0 %2126
      %2128 = vrot.lane.b32.xlu0 %v1137, 96
      %v2129 = vpop.permute.xlu0 %2128
      %v2162 = vsel %vm316, %v849, %v1171
      %v2163 = vsel %vm316, %v850, %v1173
      %v2164 = vsel %vm316, %v851, %v1175
      %v2165 = vsel %vm316, %v852, %v1177
      %v2166 = vsel %vm316, %v853, %v1179
      %v2167 = vsel %vm316, %v854, %v1181
      %v2168 = vsel %vm316, %v855, %v1183
      %v2169 = vsel %vm316, %v856, %v1185
      %v2170 = vsel %vm316, %v857, %v1187
      %v2171 = vsel %vm316, %v858, %v1189
      %v2172 = vsel %vm316, %v859, %v1191
      %v2173 = vsel %vm316, %v860, %v1193
      %v2174 = vsel %vm316, %v861, %v1195
      %v2175 = vsel %vm316, %v862, %v1197
      %v2176 = vsel %vm316, %v863, %v1199
      %v2177 = vsel %vm316, %v864, %v1201
      %v2178 = vsel %vm316, %v865, %v1203
      %v2179 = vsel %vm316, %v866, %v1205
      %v2180 = vsel %vm316, %v867, %v1207
      %v2181 = vsel %vm316, %v868, %v1209
      %v2182 = vsel %vm316, %v869, %v1211
      %v2183 = vsel %vm316, %v870, %v1213
      %v2184 = vsel %vm316, %v871, %v1215
      %v2185 = vsel %vm316, %v872, %v1217
      %v2186 = vsel %vm316, %v873, %v1219
      %v2187 = vsel %vm316, %v874, %v1221
      %v2188 = vsel %vm316, %v875, %v1223
      %v2189 = vsel %vm316, %v876, %v1225
      %v2190 = vsel %vm316, %v877, %v1227
      %v2191 = vsel %vm316, %v878, %v1229
      %v2192 = vsel %vm316, %v879, %v1231
      %v2193 = vsel %vm316, %v880, %v1233
      %vm2194 = vcmask 195584
      %v2195 = vsel %vm2194, %v2162, %v1299
      %v2196 = vsel %vm2194, %v2163, %v1301
      %v2197 = vsel %vm2194, %v2164, %v1303
      %v2198 = vsel %vm2194, %v2165, %v1305
      %v2199 = vsel %vm2194, %v2166, %v1307
      %v2200 = vsel %vm2194, %v2167, %v1309
      %v2201 = vsel %vm2194, %v2168, %v1311
      %v2202 = vsel %vm2194, %v2169, %v1313
      %v2203 = vsel %vm2194, %v2170, %v1315
      %v2204 = vsel %vm2194, %v2171, %v1317
      %v2205 = vsel %vm2194, %v2172, %v1319
      %v2206 = vsel %vm2194, %v2173, %v1321
      %v2207 = vsel %vm2194, %v2174, %v1323
      %v2208 = vsel %vm2194, %v2175, %v1325
      %v2209 = vsel %vm2194, %v2176, %v1327
      %v2210 = vsel %vm2194, %v2177, %v1329
      %v2211 = vsel %vm2194, %v2178, %v1331
      %v2212 = vsel %vm2194, %v2179, %v1333
      %v2213 = vsel %vm2194, %v2180, %v1335
      %v2214 = vsel %vm2194, %v2181, %v1337
      %v2215 = vsel %vm2194, %v2182, %v1339
      %v2216 = vsel %vm2194, %v2183, %v1341
      %v2217 = vsel %vm2194, %v2184, %v1343
      %v2218 = vsel %vm2194, %v2185, %v1345
      %v2219 = vsel %vm2194, %v2186, %v1347
      %v2220 = vsel %vm2194, %v2187, %v1349
      %v2221 = vsel %vm2194, %v2188, %v1351
      %v2222 = vsel %vm2194, %v2189, %v1353
      %v2223 = vsel %vm2194, %v2190, %v1355
      %v2224 = vsel %vm2194, %v2191, %v1357
      %v2225 = vsel %vm2194, %v2192, %v1359
      %v2226 = vsel %vm2194, %v2193, %v1361
      %vm2227 = vcmask 293888
      %v2228 = vsel %vm2227, %v2195, %v1427
      %v2229 = vsel %vm2227, %v2196, %v1429
      %v2230 = vsel %vm2227, %v2197, %v1431
      %v2231 = vsel %vm2227, %v2198, %v1433
      %v2232 = vsel %vm2227, %v2199, %v1435
      %v2233 = vsel %vm2227, %v2200, %v1437
      %v2234 = vsel %vm2227, %v2201, %v1439
      %v2235 = vsel %vm2227, %v2202, %v1441
      %v2236 = vsel %vm2227, %v2203, %v1443
      %v2237 = vsel %vm2227, %v2204, %v1445
      %v2238 = vsel %vm2227, %v2205, %v1447
      %v2239 = vsel %vm2227, %v2206, %v1449
      %v2240 = vsel %vm2227, %v2207, %v1451
      %v2241 = vsel %vm2227, %v2208, %v1453
      %v2242 = vsel %vm2227, %v2209, %v1455
      %v2243 = vsel %vm2227, %v2210, %v1457
      %v2244 = vsel %vm2227, %v2211, %v1459
      %v2245 = vsel %vm2227, %v2212, %v1461
      %v2246 = vsel %vm2227, %v2213, %v1463
      %v2247 = vsel %vm2227, %v2214, %v1465
      %v2248 = vsel %vm2227, %v2215, %v1467
      %v2249 = vsel %vm2227, %v2216, %v1469
      %v2250 = vsel %vm2227, %v2217, %v1471
      %v2251 = vsel %vm2227, %v2218, %v1473
      %v2252 = vsel %vm2227, %v2219, %v1475
      %v2253 = vsel %vm2227, %v2220, %v1477
      %v2254 = vsel %vm2227, %v2221, %v1479
      %v2255 = vsel %vm2227, %v2222, %v1481
      %v2256 = vsel %vm2227, %v2223, %v1483
      %v2257 = vsel %vm2227, %v2224, %v1485
      %v2258 = vsel %vm2227, %v2225, %v1487
      %v2259 = vsel %vm2227, %v2226, %v1489
      %vm2260 = vcmask 392192
      %v2261 = vsel %vm2260, %v2228, %v1555
      %v2262 = vsel %vm2260, %v2229, %v1557
      %v2263 = vsel %vm2260, %v2230, %v1559
      %v2264 = vsel %vm2260, %v2231, %v1561
      %v2265 = vsel %vm2260, %v2232, %v1563
      %v2266 = vsel %vm2260, %v2233, %v1565
      %v2267 = vsel %vm2260, %v2234, %v1567
      %v2268 = vsel %vm2260, %v2235, %v1569
      %v2269 = vsel %vm2260, %v2236, %v1571
      %v2270 = vsel %vm2260, %v2237, %v1573
      %v2271 = vsel %vm2260, %v2238, %v1575
      %v2272 = vsel %vm2260, %v2239, %v1577
      %v2273 = vsel %vm2260, %v2240, %v1579
      %v2274 = vsel %vm2260, %v2241, %v1581
      %v2275 = vsel %vm2260, %v2242, %v1583
      %v2276 = vsel %vm2260, %v2243, %v1585
      %v2277 = vsel %vm2260, %v2244, %v1587
      %v2278 = vsel %vm2260, %v2245, %v1589
      %v2279 = vsel %vm2260, %v2246, %v1591
      %v2280 = vsel %vm2260, %v2247, %v1593
      %v2281 = vsel %vm2260, %v2248, %v1595
      %v2282 = vsel %vm2260, %v2249, %v1597
      %v2283 = vsel %vm2260, %v2250, %v1599
      %v2284 = vsel %vm2260, %v2251, %v1601
      %v2285 = vsel %vm2260, %v2252, %v1603
      %v2286 = vsel %vm2260, %v2253, %v1605
      %v2287 = vsel %vm2260, %v2254, %v1607
      %v2288 = vsel %vm2260, %v2255, %v1609
      %v2289 = vsel %vm2260, %v2256, %v1611
      %v2290 = vsel %vm2260, %v2257, %v1613
      %v2291 = vsel %vm2260, %v2258, %v1615
      %v2292 = vsel %vm2260, %v2259, %v1617
      %vm2293 = vcmask 490496
      %v2294 = vsel %vm2293, %v2261, %v1683
      %v2295 = vsel %vm2293, %v2262, %v1685
      %v2296 = vsel %vm2293, %v2263, %v1687
      %v2297 = vsel %vm2293, %v2264, %v1689
      %v2298 = vsel %vm2293, %v2265, %v1691
      %v2299 = vsel %vm2293, %v2266, %v1693
      %v2300 = vsel %vm2293, %v2267, %v1695
      %v2301 = vsel %vm2293, %v2268, %v1697
      %v2302 = vsel %vm2293, %v2269, %v1699
      %v2303 = vsel %vm2293, %v2270, %v1701
      %v2304 = vsel %vm2293, %v2271, %v1703
      %v2305 = vsel %vm2293, %v2272, %v1705
      %v2306 = vsel %vm2293, %v2273, %v1707
      %v2307 = vsel %vm2293, %v2274, %v1709
      %v2308 = vsel %vm2293, %v2275, %v1711
      %v2309 = vsel %vm2293, %v2276, %v1713
      %v2310 = vsel %vm2293, %v2277, %v1715
      %v2311 = vsel %vm2293, %v2278, %v1717
      %v2312 = vsel %vm2293, %v2279, %v1719
      %v2313 = vsel %vm2293, %v2280, %v1721
      %v2314 = vsel %vm2293, %v2281, %v1723
      %v2315 = vsel %vm2293, %v2282, %v1725
      %v2316 = vsel %vm2293, %v2283, %v1727
      %v2317 = vsel %vm2293, %v2284, %v1729
      %v2318 = vsel %vm2293, %v2285, %v1731
      %v2319 = vsel %vm2293, %v2286, %v1733
      %v2320 = vsel %vm2293, %v2287, %v1735
      %v2321 = vsel %vm2293, %v2288, %v1737
      %v2322 = vsel %vm2293, %v2289, %v1739
      %v2323 = vsel %vm2293, %v2290, %v1741
      %v2324 = vsel %vm2293, %v2291, %v1743
      %v2325 = vsel %vm2293, %v2292, %v1745
      %vm2326 = vcmask 588800
      %v2327 = vsel %vm2326, %v2294, %v1811
      %v2328 = vsel %vm2326, %v2295, %v1813
      %v2329 = vsel %vm2326, %v2296, %v1815
      %v2330 = vsel %vm2326, %v2297, %v1817
      %v2331 = vsel %vm2326, %v2298, %v1819
      %v2332 = vsel %vm2326, %v2299, %v1821
      %v2333 = vsel %vm2326, %v2300, %v1823
      %v2334 = vsel %vm2326, %v2301, %v1825
      %v2335 = vsel %vm2326, %v2302, %v1827
      %v2336 = vsel %vm2326, %v2303, %v1829
      %v2337 = vsel %vm2326, %v2304, %v1831
      %v2338 = vsel %vm2326, %v2305, %v1833
      %v2339 = vsel %vm2326, %v2306, %v1835
      %v2340 = vsel %vm2326, %v2307, %v1837
      %v2341 = vsel %vm2326, %v2308, %v1839
      %v2342 = vsel %vm2326, %v2309, %v1841
      %v2343 = vsel %vm2326, %v2310, %v1843
      %v2344 = vsel %vm2326, %v2311, %v1845
      %v2345 = vsel %vm2326, %v2312, %v1847
      %v2346 = vsel %vm2326, %v2313, %v1849
      %v2347 = vsel %vm2326, %v2314, %v1851
      %v2348 = vsel %vm2326, %v2315, %v1853
      %v2349 = vsel %vm2326, %v2316, %v1855
      %v2350 = vsel %vm2326, %v2317, %v1857
      %v2351 = vsel %vm2326, %v2318, %v1859
      %v2352 = vsel %vm2326, %v2319, %v1861
      %v2353 = vsel %vm2326, %v2320, %v1863
      %v2354 = vsel %vm2326, %v2321, %v1865
      %v2355 = vsel %vm2326, %v2322, %v1867
      %v2356 = vsel %vm2326, %v2323, %v1869
      %v2357 = vsel %vm2326, %v2324, %v1871
      %v2358 = vsel %vm2326, %v2325, %v1873
      %vm2359 = vcmask 687104
      %v2360 = vsel %vm2359, %v2327, %v1939
      %v2361 = vsel %vm2359, %v2328, %v1941
      %v2362 = vsel %vm2359, %v2329, %v1943
      %v2363 = vsel %vm2359, %v2330, %v1945
      %v2364 = vsel %vm2359, %v2331, %v1947
      %v2365 = vsel %vm2359, %v2332, %v1949
      %v2366 = vsel %vm2359, %v2333, %v1951
      %v2367 = vsel %vm2359, %v2334, %v1953
      %v2368 = vsel %vm2359, %v2335, %v1955
      %v2369 = vsel %vm2359, %v2336, %v1957
      %v2370 = vsel %vm2359, %v2337, %v1959
      %v2371 = vsel %vm2359, %v2338, %v1961
      %v2372 = vsel %vm2359, %v2339, %v1963
      %v2373 = vsel %vm2359, %v2340, %v1965
      %v2374 = vsel %vm2359, %v2341, %v1967
      %v2375 = vsel %vm2359, %v2342, %v1969
      %v2376 = vsel %vm2359, %v2343, %v1971
      %v2377 = vsel %vm2359, %v2344, %v1973
      %v2378 = vsel %vm2359, %v2345, %v1975
      %v2379 = vsel %vm2359, %v2346, %v1977
      %v2380 = vsel %vm2359, %v2347, %v1979
      %v2381 = vsel %vm2359, %v2348, %v1981
      %v2382 = vsel %vm2359, %v2349, %v1983
      %v2383 = vsel %vm2359, %v2350, %v1985
      %v2384 = vsel %vm2359, %v2351, %v1987
      %v2385 = vsel %vm2359, %v2352, %v1989
      %v2386 = vsel %vm2359, %v2353, %v1991
      %v2387 = vsel %vm2359, %v2354, %v1993
      %v2388 = vsel %vm2359, %v2355, %v1995
      %v2389 = vsel %vm2359, %v2356, %v1997
      %v2390 = vsel %vm2359, %v2357, %v1999
      %v2391 = vsel %vm2359, %v2358, %v2001
      %vm2392 = vcmask 785408
      %v2393 = vsel %vm2392, %v2360, %v2067
      %v2394 = vsel %vm2392, %v2361, %v2069
      %v2395 = vsel %vm2392, %v2362, %v2071
      %v2396 = vsel %vm2392, %v2363, %v2073
      %v2397 = vsel %vm2392, %v2364, %v2075
      %v2398 = vsel %vm2392, %v2365, %v2077
      %v2399 = vsel %vm2392, %v2366, %v2079
      %v2400 = vsel %vm2392, %v2367, %v2081
      %v2401 = vsel %vm2392, %v2368, %v2083
      %v2402 = vsel %vm2392, %v2369, %v2085
      %v2403 = vsel %vm2392, %v2370, %v2087
      %v2404 = vsel %vm2392, %v2371, %v2089
      %v2405 = vsel %vm2392, %v2372, %v2091
      %v2406 = vsel %vm2392, %v2373, %v2093
      %v2407 = vsel %vm2392, %v2374, %v2095
      %v2408 = vsel %vm2392, %v2375, %v2097
      %v2409 = vsel %vm2392, %v2376, %v2099
      %v2410 = vsel %vm2392, %v2377, %v2101
      %v2411 = vsel %vm2392, %v2378, %v2103
      %v2412 = vsel %vm2392, %v2379, %v2105
      %v2413 = vsel %vm2392, %v2380, %v2107
      %v2414 = vsel %vm2392, %v2381, %v2109
      %v2415 = vsel %vm2392, %v2382, %v2111
      %v2416 = vsel %vm2392, %v2383, %v2113
      %v2417 = vsel %vm2392, %v2384, %v2115
      %v2418 = vsel %vm2392, %v2385, %v2117
      %v2419 = vsel %vm2392, %v2386, %v2119
      %v2420 = vsel %vm2392, %v2387, %v2121
      %v2421 = vsel %vm2392, %v2388, %v2123
      %v2422 = vsel %vm2392, %v2389, %v2125
      %v2423 = vsel %vm2392, %v2390, %v2127
      %v2424 = vsel %vm2392, %v2391, %v2129
      %v2425 = vld [vmem:[%s3] sm:$0xff]
      %v2426 = vld [vmem:[%s3 + $0x8] sm:$0xff]
      %v2427 = vld [vmem:[%s3 + $0x10] sm:$0xff]
      %v2428 = vld [vmem:[%s3 + $0x18] sm:$0xff]
      %v2429 = vld [vmem:[%s3 + $0x20] sm:$0xff]
      %v2430 = vld [vmem:[%s3 + $0x28] sm:$0xff]
      %v2431 = vld [vmem:[%s3 + $0x30] sm:$0xff]
      %v2432 = vld [vmem:[%s3 + $0x38] sm:$0xff]
      %v2433 = vld [vmem:[%s3 + $0x40] sm:$0xff]
      %v2434 = vld [vmem:[%s3 + $0x48] sm:$0xff]
      %v2435 = vld [vmem:[%s3 + $0x50] sm:$0xff]
      %v2436 = vld [vmem:[%s3 + $0x58] sm:$0xff]
      %v2437 = vld [vmem:[%s3 + $0x60] sm:$0xff]
      %v2438 = vld [vmem:[%s3 + $0x68] sm:$0xf]
      %v2439 = vld [vmem:[%s4] sm:$0x1]
      %v2441 = vperm.slane %v2439, 0
      %vm2443 = vcmask 883712
      %v2445 = vsel %vm2443, %v2393, 0
      %v2448 = vsel %vm2443, %v2394, 0
      %v2451 = vsel %vm2443, %v2395, 0
      %v2454 = vsel %vm2443, %v2396, 0
      %v2457 = vsel %vm2443, %v2397, 0
      %v2460 = vsel %vm2443, %v2398, 0
      %v2463 = vsel %vm2443, %v2399, 0
      %v2466 = vsel %vm2443, %v2400, 0
      %v2469 = vsel %vm2443, %v2401, 0
      %v2472 = vsel %vm2443, %v2402, 0
      %v2475 = vsel %vm2443, %v2403, 0
      %v2478 = vsel %vm2443, %v2404, 0
      %v2481 = vsel %vm2443, %v2405, 0
      %v2484 = vsel %vm2443, %v2406, 0
      %v2487 = vsel %vm2443, %v2407, 0
      %v2490 = vsel %vm2443, %v2408, 0
      %v2493 = vsel %vm2443, %v2409, 0
      %v2496 = vsel %vm2443, %v2410, 0
      %v2499 = vsel %vm2443, %v2411, 0
      %v2502 = vsel %vm2443, %v2412, 0
      %v2505 = vsel %vm2443, %v2413, 0
      %v2508 = vsel %vm2443, %v2414, 0
      %v2511 = vsel %vm2443, %v2415, 0
      %v2514 = vsel %vm2443, %v2416, 0
      %v2517 = vsel %vm2443, %v2417, 0
      %v2520 = vsel %vm2443, %v2418, 0
      %v2523 = vsel %vm2443, %v2419, 0
      %v2526 = vsel %vm2443, %v2420, 0
      %v2529 = vsel %vm2443, %v2421, 0
      %v2532 = vsel %vm2443, %v2422, 0
      %v2535 = vsel %vm2443, %v2423, 0
      %v2538 = vsel %vm2443, %v2424, 0
      %vm2540 = vcmask 1043456
      %v2542 = vsel %vm2540, %v2438, 0
      %2544 = vmatpush.msra.mxu0 0.0
      %2545 = vmatpush.msra.mxu0 0.0
      %2546 = vmatpush.msra.mxu0 %v2542
      %2547 = vmatpush.msra.mxu0 %v2437
      %2548 = vmatpush.msra.mxu0 %v2436
      %2549 = vmatpush.msra.mxu0 %v2435
      %2550 = vmatpush.msra.mxu0 %v2434
      %2551 = vmatpush.msra.mxu0 %v2433
      %2552 = vmatpush.msra.mxu0 %v2432
      %2553 = vmatpush.msra.mxu0 %v2431
      %2554 = vmatpush.msra.mxu0 %v2430
      %2555 = vmatpush.msra.mxu0 %v2429
      %2556 = vmatpush.msra.mxu0 %v2428
      %2557 = vmatpush.msra.mxu0 %v2427
      %2558 = vmatpush.msra.mxu0 %v2426
      %2559 = vmatpush.msra.mxu0 %v2425
      %2560 = vmatmul.f32.gmra.mxu0 %v2445
      %v2561 = vpop.f32.mrf.mxu0
      %v2562 = vadd.f32 %v2441, %v2561
      %2563 = vmatmul.f32.gmra.mxu0 %v2448
      %v2564 = vpop.f32.mrf.mxu0
      %v2565 = vadd.f32 %v2441, %v2564
      %2566 = vmatmul.f32.gmra.mxu0 %v2451
      %v2567 = vpop.f32.mrf.mxu0
      %v2568 = vadd.f32 %v2441, %v2567
      %2569 = vmatmul.f32.gmra.mxu0 %v2454
      %v2570 = vpop.f32.mrf.mxu0
      %v2571 = vadd.f32 %v2441, %v2570
      %2572 = vmatmul.f32.gmra.mxu0 %v2457
      %v2573 = vpop.f32.mrf.mxu0
      %v2574 = vadd.f32 %v2441, %v2573
      %2575 = vmatmul.f32.gmra.mxu0 %v2460
      %v2576 = vpop.f32.mrf.mxu0
      %v2577 = vadd.f32 %v2441, %v2576
      %2578 = vmatmul.f32.gmra.mxu0 %v2463
      %v2579 = vpop.f32.mrf.mxu0
      %v2580 = vadd.f32 %v2441, %v2579
      %2581 = vmatmul.f32.gmra.mxu0 %v2466
      %v2582 = vpop.f32.mrf.mxu0
      %v2583 = vadd.f32 %v2441, %v2582
      %2584 = vmatmul.f32.gmra.mxu0 %v2469
      %v2585 = vpop.f32.mrf.mxu0
      %v2586 = vadd.f32 %v2441, %v2585
      %2587 = vmatmul.f32.gmra.mxu0 %v2472
      %v2588 = vpop.f32.mrf.mxu0
      %v2589 = vadd.f32 %v2441, %v2588
      %2590 = vmatmul.f32.gmra.mxu0 %v2475
      %v2591 = vpop.f32.mrf.mxu0
      %v2592 = vadd.f32 %v2441, %v2591
      %2593 = vmatmul.f32.gmra.mxu0 %v2478
      %v2594 = vpop.f32.mrf.mxu0
      %v2595 = vadd.f32 %v2441, %v2594
      %2596 = vmatmul.f32.gmra.mxu0 %v2481
      %v2597 = vpop.f32.mrf.mxu0
      %v2598 = vadd.f32 %v2441, %v2597
      %2599 = vmatmul.f32.gmra.mxu0 %v2484
      %v2600 = vpop.f32.mrf.mxu0
      %v2601 = vadd.f32 %v2441, %v2600
      %2602 = vmatmul.f32.gmra.mxu0 %v2487
      %v2603 = vpop.f32.mrf.mxu0
      %v2604 = vadd.f32 %v2441, %v2603
      %2605 = vmatmul.f32.gmra.mxu0 %v2490
      %v2606 = vpop.f32.mrf.mxu0
      %v2607 = vadd.f32 %v2441, %v2606
      %2608 = vmatmul.f32.gmra.mxu0 %v2493
      %v2609 = vpop.f32.mrf.mxu0
      %v2610 = vadd.f32 %v2441, %v2609
      %2611 = vmatmul.f32.gmra.mxu0 %v2496
      %v2612 = vpop.f32.mrf.mxu0
      %v2613 = vadd.f32 %v2441, %v2612
      %2614 = vmatmul.f32.gmra.mxu0 %v2499
      %v2615 = vpop.f32.mrf.mxu0
      %v2616 = vadd.f32 %v2441, %v2615
      %2617 = vmatmul.f32.gmra.mxu0 %v2502
      %v2618 = vpop.f32.mrf.mxu0
      %v2619 = vadd.f32 %v2441, %v2618
      %2620 = vmatmul.f32.gmra.mxu0 %v2505
      %v2621 = vpop.f32.mrf.mxu0
      %v2622 = vadd.f32 %v2441, %v2621
      %2623 = vmatmul.f32.gmra.mxu0 %v2508
      %v2624 = vpop.f32.mrf.mxu0
      %v2625 = vadd.f32 %v2441, %v2624
      %2626 = vmatmul.f32.gmra.mxu0 %v2511
      %v2627 = vpop.f32.mrf.mxu0
      %v2628 = vadd.f32 %v2441, %v2627
      %2629 = vmatmul.f32.gmra.mxu0 %v2514
      %v2630 = vpop.f32.mrf.mxu0
      %v2631 = vadd.f32 %v2441, %v2630
      %2632 = vmatmul.f32.gmra.mxu0 %v2517
      %v2633 = vpop.f32.mrf.mxu0
      %v2634 = vadd.f32 %v2441, %v2633
      %2635 = vmatmul.f32.gmra.mxu0 %v2520
      %v2636 = vpop.f32.mrf.mxu0
      %v2637 = vadd.f32 %v2441, %v2636
      %2638 = vmatmul.f32.gmra.mxu0 %v2523
      %v2639 = vpop.f32.mrf.mxu0
      %v2640 = vadd.f32 %v2441, %v2639
      %2641 = vmatmul.f32.gmra.mxu0 %v2526
      %v2642 = vpop.f32.mrf.mxu0
      %v2643 = vadd.f32 %v2441, %v2642
      %2644 = vmatmul.f32.gmra.mxu0 %v2529
      %v2645 = vpop.f32.mrf.mxu0
      %v2646 = vadd.f32 %v2441, %v2645
      %2647 = vmatmul.f32.gmra.mxu0 %v2532
      %v2648 = vpop.f32.mrf.mxu0
      %v2649 = vadd.f32 %v2441, %v2648
      %2650 = vmatmul.f32.gmra.mxu0 %v2535
      %v2651 = vpop.f32.mrf.mxu0
      %v2652 = vadd.f32 %v2441, %v2651
      %2653 = vmatmul.f32.gmra.mxu0 %v2538
      %v2654 = vpop.f32.mrf.mxu0
      %v2655 = vadd.f32 %v2441, %v2654
      %2656 = vdwg.mxu0
      %vm2657 = vcmask 64512
      %2658 = vst.msk [vmem:[%s309] sm:$0xff] %vm2657, %v2562
      %2659 = vst.msk [vmem:[%s309 + $0x8] sm:$0xff] %vm2657, %v2565
      %2660 = vst.msk [vmem:[%s309 + $0x10] sm:$0xff] %vm2657, %v2568
      %2661 = vst.msk [vmem:[%s309 + $0x18] sm:$0xff] %vm2657, %v2571
      %2662 = vst.msk [vmem:[%s309 + $0x20] sm:$0xff] %vm2657, %v2574
      %2663 = vst.msk [vmem:[%s309 + $0x28] sm:$0xff] %vm2657, %v2577
      %2664 = vst.msk [vmem:[%s309 + $0x30] sm:$0xff] %vm2657, %v2580
      %2665 = vst.msk [vmem:[%s309 + $0x38] sm:$0xff] %vm2657, %v2583
      %2666 = vst.msk [vmem:[%s309 + $0x40] sm:$0xff] %vm2657, %v2586
      %2667 = vst.msk [vmem:[%s309 + $0x48] sm:$0xff] %vm2657, %v2589
      %2668 = vst.msk [vmem:[%s309 + $0x50] sm:$0xff] %vm2657, %v2592
      %2669 = vst.msk [vmem:[%s309 + $0x58] sm:$0xff] %vm2657, %v2595
      %2670 = vst.msk [vmem:[%s309 + $0x60] sm:$0xff] %vm2657, %v2598
      %2671 = vst.msk [vmem:[%s309 + $0x68] sm:$0xff] %vm2657, %v2601
      %2672 = vst.msk [vmem:[%s309 + $0x70] sm:$0xff] %vm2657, %v2604
      %2673 = vst.msk [vmem:[%s309 + $0x78] sm:$0xff] %vm2657, %v2607
      %2674 = vst.msk [vmem:[%s309 + $0x80] sm:$0xff] %vm2657, %v2610
      %2675 = vst.msk [vmem:[%s309 + $0x88] sm:$0xff] %vm2657, %v2613
      %2676 = vst.msk [vmem:[%s309 + $0x90] sm:$0xff] %vm2657, %v2616
      %2677 = vst.msk [vmem:[%s309 + $0x98] sm:$0xff] %vm2657, %v2619
      %2678 = vst.msk [vmem:[%s309 + $0xa0] sm:$0xff] %vm2657, %v2622
      %2679 = vst.msk [vmem:[%s309 + $0xa8] sm:$0xff] %vm2657, %v2625
      %2680 = vst.msk [vmem:[%s309 + $0xb0] sm:$0xff] %vm2657, %v2628
      %2681 = vst.msk [vmem:[%s309 + $0xb8] sm:$0xff] %vm2657, %v2631
      %2682 = vst.msk [vmem:[%s309 + $0xc0] sm:$0xff] %vm2657, %v2634
      %2683 = vst.msk [vmem:[%s309 + $0xc8] sm:$0xff] %vm2657, %v2637
      %2684 = vst.msk [vmem:[%s309 + $0xd0] sm:$0xff] %vm2657, %v2640
      %2685 = vst.msk [vmem:[%s309 + $0xd8] sm:$0xff] %vm2657, %v2643
      %2686 = vst.msk [vmem:[%s309 + $0xe0] sm:$0xff] %vm2657, %v2646
      %2687 = vst.msk [vmem:[%s309 + $0xe8] sm:$0xff] %vm2657, %v2649
      %2688 = vst.msk [vmem:[%s309 + $0xf0] sm:$0xff] %vm2657, %v2652
      %2689 = vst.msk [vmem:[%s309 + $0xf8] sm:$0xff] %vm2657, %v2655
      %v2690 = vsel %vm2657, %v2562, 0.0
      %v2691 = vsel %vm2657, %v2565, 0.0
      %v2692 = vadd.f32 %v2690, %v2691
      %v2693 = vsel %vm2657, %v2568, 0.0
      %v2694 = vadd.f32 %v2692, %v2693
      %v2695 = vsel %vm2657, %v2571, 0.0
      %v2696 = vadd.f32 %v2694, %v2695
      %v2697 = vsel %vm2657, %v2574, 0.0
      %v2698 = vadd.f32 %v2696, %v2697
      %v2699 = vsel %vm2657, %v2577, 0.0
      %v2700 = vadd.f32 %v2698, %v2699
      %v2701 = vsel %vm2657, %v2580, 0.0
      %v2702 = vadd.f32 %v2700, %v2701
      %v2703 = vsel %vm2657, %v2583, 0.0
      %v2704 = vadd.f32 %v2702, %v2703
      %v2705 = vsel %vm2657, %v2586, 0.0
      %v2706 = vadd.f32 %v2704, %v2705
      %v2707 = vsel %vm2657, %v2589, 0.0
      %v2708 = vadd.f32 %v2706, %v2707
      %v2709 = vsel %vm2657, %v2592, 0.0
      %v2710 = vadd.f32 %v2708, %v2709
      %v2711 = vsel %vm2657, %v2595, 0.0
      %v2712 = vadd.f32 %v2710, %v2711
      %v2713 = vsel %vm2657, %v2598, 0.0
      %v2714 = vadd.f32 %v2712, %v2713
      %v2715 = vsel %vm2657, %v2601, 0.0
      %v2716 = vadd.f32 %v2714, %v2715
      %v2717 = vsel %vm2657, %v2604, 0.0
      %v2718 = vadd.f32 %v2716, %v2717
      %v2719 = vsel %vm2657, %v2607, 0.0
      %v2720 = vadd.f32 %v2718, %v2719
      %v2721 = vsel %vm2657, %v2610, 0.0
      %v2722 = vadd.f32 %v2720, %v2721
      %v2723 = vsel %vm2657, %v2613, 0.0
      %v2724 = vadd.f32 %v2722, %v2723
      %v2725 = vsel %vm2657, %v2616, 0.0
      %v2726 = vadd.f32 %v2724, %v2725
      %v2727 = vsel %vm2657, %v2619, 0.0
      %v2728 = vadd.f32 %v2726, %v2727
      %v2729 = vsel %vm2657, %v2622, 0.0
      %v2730 = vadd.f32 %v2728, %v2729
      %v2731 = vsel %vm2657, %v2625, 0.0
      %v2732 = vadd.f32 %v2730, %v2731
      %v2733 = vsel %vm2657, %v2628, 0.0
      %v2734 = vadd.f32 %v2732, %v2733
      %v2735 = vsel %vm2657, %v2631, 0.0
      %v2736 = vadd.f32 %v2734, %v2735
      %v2737 = vsel %vm2657, %v2634, 0.0
      %v2738 = vadd.f32 %v2736, %v2737
      %v2739 = vsel %vm2657, %v2637, 0.0
      %v2740 = vadd.f32 %v2738, %v2739
      %v2741 = vsel %vm2657, %v2640, 0.0
      %v2742 = vadd.f32 %v2740, %v2741
      %v2743 = vsel %vm2657, %v2643, 0.0
      %v2744 = vadd.f32 %v2742, %v2743
      %v2745 = vsel %vm2657, %v2646, 0.0
      %v2746 = vadd.f32 %v2744, %v2745
      %v2747 = vsel %vm2657, %v2649, 0.0
      %v2748 = vadd.f32 %v2746, %v2747
      %v2749 = vsel %vm2657, %v2652, 0.0
      %v2750 = vadd.f32 %v2748, %v2749
      %v2751 = vsel %vm2657, %v2655, 0.0
      %v2752 = vadd.f32 %v2750, %v2751
      %v2753 = vrot.slane %v2752, 4
      %v2754 = vadd.f32 %v2752, %v2753
      %v2755 = vrot.slane %v2754, 2
      %v2756 = vadd.f32 %v2754, %v2755
      %v2757 = vrot.slane %v2756, 1
      %v2758 = vadd.f32 %v2756, %v2757
      %vm2759 = vcmask 57344
      %2760 = vst.msk [vmem:[%s312] sm:$0x1] %vm2759, %v2758
      %v2761 = vmul.f32 %v2562, %v2562
      %v2762 = vmul.f32 %v2565, %v2565
      %v2763 = vmul.f32 %v2568, %v2568
      %v2764 = vmul.f32 %v2571, %v2571
      %v2765 = vmul.f32 %v2574, %v2574
      %v2766 = vmul.f32 %v2577, %v2577
      %v2767 = vmul.f32 %v2580, %v2580
      %v2768 = vmul.f32 %v2583, %v2583
      %v2769 = vmul.f32 %v2586, %v2586
      %v2770 = vmul.f32 %v2589, %v2589
      %v2771 = vmul.f32 %v2592, %v2592
      %v2772 = vmul.f32 %v2595, %v2595
      %v2773 = vmul.f32 %v2598, %v2598
      %v2774 = vmul.f32 %v2601, %v2601
      %v2775 = vmul.f32 %v2604, %v2604
      %v2776 = vmul.f32 %v2607, %v2607
      %v2777 = vmul.f32 %v2610, %v2610
      %v2778 = vmul.f32 %v2613, %v2613
      %v2779 = vmul.f32 %v2616, %v2616
      %v2780 = vmul.f32 %v2619, %v2619
      %v2781 = vmul.f32 %v2622, %v2622
      %v2782 = vmul.f32 %v2625, %v2625
      %v2783 = vmul.f32 %v2628, %v2628
      %v2784 = vmul.f32 %v2631, %v2631
      %v2785 = vmul.f32 %v2634, %v2634
      %v2786 = vmul.f32 %v2637, %v2637
      %v2787 = vmul.f32 %v2640, %v2640
      %v2788 = vmul.f32 %v2643, %v2643
      %v2789 = vmul.f32 %v2646, %v2646
      %v2790 = vmul.f32 %v2649, %v2649
      %v2791 = vmul.f32 %v2652, %v2652
      %v2792 = vmul.f32 %v2655, %v2655
      %v2793 = vsel %vm2657, %v2761, 0.0
      %v2794 = vsel %vm2657, %v2762, 0.0
      %v2795 = vadd.f32 %v2793, %v2794
      %v2796 = vsel %vm2657, %v2763, 0.0
      %v2797 = vadd.f32 %v2795, %v2796
      %v2798 = vsel %vm2657, %v2764, 0.0
      %v2799 = vadd.f32 %v2797, %v2798
      %v2800 = vsel %vm2657, %v2765, 0.0
      %v2801 = vadd.f32 %v2799, %v2800
      %v2802 = vsel %vm2657, %v2766, 0.0
      %v2803 = vadd.f32 %v2801, %v2802
      %v2804 = vsel %vm2657, %v2767, 0.0
      %v2805 = vadd.f32 %v2803, %v2804
      %v2806 = vsel %vm2657, %v2768, 0.0
      %v2807 = vadd.f32 %v2805, %v2806
      %v2808 = vsel %vm2657, %v2769, 0.0
      %v2809 = vadd.f32 %v2807, %v2808
      %v2810 = vsel %vm2657, %v2770, 0.0
      %v2811 = vadd.f32 %v2809, %v2810
      %v2812 = vsel %vm2657, %v2771, 0.0
      %v2813 = vadd.f32 %v2811, %v2812
      %v2814 = vsel %vm2657, %v2772, 0.0
      %v2815 = vadd.f32 %v2813, %v2814
      %v2816 = vsel %vm2657, %v2773, 0.0
      %v2817 = vadd.f32 %v2815, %v2816
      %v2818 = vsel %vm2657, %v2774, 0.0
      %v2819 = vadd.f32 %v2817, %v2818
      %v2820 = vsel %vm2657, %v2775, 0.0
      %v2821 = vadd.f32 %v2819, %v2820
      %v2822 = vsel %vm2657, %v2776, 0.0
      %v2823 = vadd.f32 %v2821, %v2822
      %v2824 = vsel %vm2657, %v2777, 0.0
      %v2825 = vadd.f32 %v2823, %v2824
      %v2826 = vsel %vm2657, %v2778, 0.0
      %v2827 = vadd.f32 %v2825, %v2826
      %v2828 = vsel %vm2657, %v2779, 0.0
      %v2829 = vadd.f32 %v2827, %v2828
      %v2830 = vsel %vm2657, %v2780, 0.0
      %v2831 = vadd.f32 %v2829, %v2830
      %v2832 = vsel %vm2657, %v2781, 0.0
      %v2833 = vadd.f32 %v2831, %v2832
      %v2834 = vsel %vm2657, %v2782, 0.0
      %v2835 = vadd.f32 %v2833, %v2834
      %v2836 = vsel %vm2657, %v2783, 0.0
      %v2837 = vadd.f32 %v2835, %v2836
      %v2838 = vsel %vm2657, %v2784, 0.0
      %v2839 = vadd.f32 %v2837, %v2838
      %v2840 = vsel %vm2657, %v2785, 0.0
      %v2841 = vadd.f32 %v2839, %v2840
      %v2842 = vsel %vm2657, %v2786, 0.0
      %v2843 = vadd.f32 %v2841, %v2842
      %v2844 = vsel %vm2657, %v2787, 0.0
      %v2845 = vadd.f32 %v2843, %v2844
      %v2846 = vsel %vm2657, %v2788, 0.0
      %v2847 = vadd.f32 %v2845, %v2846
      %v2848 = vsel %vm2657, %v2789, 0.0
      %v2849 = vadd.f32 %v2847, %v2848
      %v2850 = vsel %vm2657, %v2790, 0.0
      %v2851 = vadd.f32 %v2849, %v2850
      %v2852 = vsel %vm2657, %v2791, 0.0
      %v2853 = vadd.f32 %v2851, %v2852
      %v2854 = vsel %vm2657, %v2792, 0.0
      %v2855 = vadd.f32 %v2853, %v2854
      %v2856 = vrot.slane %v2855, 4
      %v2857 = vadd.f32 %v2855, %v2856
      %v2858 = vrot.slane %v2857, 2
      %v2859 = vadd.f32 %v2857, %v2858
      %v2860 = vrot.slane %v2859, 1
      %v2861 = vadd.f32 %v2859, %v2860
      %2862 = vst.msk [vmem:[%s315] sm:$0x1] %vm2759, %v2861
      %p2863 = scmp.lt.s32.totalorder %s19, 1
      %s2864 = scalar_select %p2863, %s19, 1
      %s2865 = smul.addr %s2864, 32
      %s2866 = smul.addr %s2865, 8
      %s2867 = scalar_lea.vmem %s5, %s2866
      %p2868 = scmp.lt.s32.totalorder %s19, 1
      %s2869 = scalar_select %p2868, %s19, 1
      %s2870 = scalar_lea.vmem %s6, %s2869
      %p2871 = scmp.lt.s32.totalorder %s19, 1
      %s2872 = scalar_select %p2871, %s19, 1
      %s2873 = scalar_lea.vmem %s7, %s2872
      // Predicated region
      $region41: #{nested_up_forward.3} parent=39 // pred_check
        %p2874 = pneg %p152
      $region42: #{nested_up_forward.3} parent=39 // pred_check_branch
        %2876 = sbr.rel (%p2874) target = $region44
      $region43: #{nested_up_forward.3} parent=39 // pred_region
        _
      $region44: #{nested_up_forward.3} parent=39 // pred_fallthru
        _
      // Predicated region
      $region45: #{nested_up_forward.3} parent=39 // pred_check
        %p2877 = pneg %p178
      $region46: #{nested_up_forward.3} parent=39 // pred_check_branch
        %2879 = sbr.rel (%p2877) target = $region48
      $region47: #{nested_up_forward.3} parent=39 // pred_region
        _
      $region48: #{nested_up_forward.3} parent=39 // pred_fallthru
        _
      // Predicated region
      $region49: #{nested_up_forward.3} parent=39 // pred_check
        %p2880 = pneg %p204
      $region50: #{nested_up_forward.3} parent=39 // pred_check_branch
        %2882 = sbr.rel (%p2880) target = $region52
      $region51: #{nested_up_forward.3} parent=39 // pred_region
        _
      $region52: #{nested_up_forward.3} parent=39 // pred_fallthru
        _
    $region40: #{nested_up_forward.3} parent=5 // pred_fallthru
      _
    %p2883 = scmp.le.s32.totalorder 2, %s14
    // Predicated region
    $region53: #{nested_up_forward.3} parent=5 // pred_check
      %p2884 = pneg %p2883
    $region54: #{nested_up_forward.3} parent=5 // pred_check_branch
      %2886 = sbr.rel (%p2884) target = $region56
    $region55: #{nested_up_forward.3} parent=5 // pred_region
      %s2887 = ssub.s32 %s14, 2
      // Predicated region
      $region57: #{nested_up_forward.3} parent=55 // pred_check
        %p2888 = pneg %p158
      $region58: #{nested_up_forward.3} parent=55 // pred_check_branch
        %2890 = sbr.rel (%p2888) target = $region60
      $region59: #{nested_up_forward.3} parent=55 // pred_region
        %p2891 = scmp.lt.s32.totalorder %s20, 1
        %s2892 = scalar_select %p2891, %s20, 1
        %s2893 = smul.addr %s2892, 32
        %s2894 = smul.addr %s2893, 8
        %s2895 = scalar_lea.vmem %s5, %s2894
      $region60: #{nested_up_forward.3} parent=55 // pred_fallthru
        _
      // Predicated region
      $region61: #{nested_up_forward.3} parent=55 // pred_check
        %p2896 = pneg %p184
      $region62: #{nested_up_forward.3} parent=55 // pred_check_branch
        %2898 = sbr.rel (%p2896) target = $region64
      $region63: #{nested_up_forward.3} parent=55 // pred_region
        %p2899 = scmp.lt.s32.totalorder %s20, 1
        %s2900 = scalar_select %p2899, %s20, 1
        %s2901 = scalar_lea.vmem %s6, %s2900
      $region64: #{nested_up_forward.3} parent=55 // pred_fallthru
        _
      // Predicated region
      $region65: #{nested_up_forward.3} parent=55 // pred_check
        %p2902 = pneg %p210
      $region66: #{nested_up_forward.3} parent=55 // pred_check_branch
        %2904 = sbr.rel (%p2902) target = $region68
      $region67: #{nested_up_forward.3} parent=55 // pred_region
        %p2905 = scmp.lt.s32.totalorder %s20, 1
        %s2906 = scalar_select %p2905, %s20, 1
        %s2907 = scalar_lea.vmem %s7, %s2906
      $region68: #{nested_up_forward.3} parent=55 // pred_fallthru
        _
    $region56: #{nested_up_forward.3} parent=5 // pred_fallthru
      _
  $region6: #{nested_up_forward.3} parent=0 // loop_footer
    %s18 = sadd.s32 1, %s14
  $region7: #{nested_up_forward.3} parent=0 // loop_footer_branch
    %13 = sbr.rel target = $region3
  $region8: #{nested_up_forward.3} parent=0 // loop_exit
    _

</llo_original>
